<compile_context>
chip_gen: v7x
topology: tpu7x:2x2x1
jax: 0.10.0
libtpu: 0.0.40
codegen_flags: <defaults>
</compile_context>

<pallas_src>
import functools
import math

import jax
import jax.numpy as jnp
from jax.experimental import pallas as pl
from jax.experimental.pallas import tpu as pltpu


# ----------------------------------------------------------------------------
# Model config (small synthetic graph, matches the PyTorch module defaults)
# ----------------------------------------------------------------------------

IN_DIM = 16
HIDDEN_DIM = 32
OUT_DIM = 8
N_LAYERS = 2
N_HEADS = 2
D_K = HIDDEN_DIM // N_HEADS
SQRT_DK = math.sqrt(D_K)

NUM_TYPES = 2       # node types: 0 = 'user', 1 = 'item'
NUM_RELATIONS = 2   # edge types: 0 = 'likes' (user->item), 1 = 'rev' (item->user)
N_NODES = 8         # nodes per type (equal counts so types stack cleanly)

QKV_PAD = 128       # lane-dense width of the fused [q | key | val | pad] weight
LN_EPS = 1e-5
NEG_BIAS = -1e9     # additive mask value (finite, avoids inf-inf)


# ----------------------------------------------------------------------------
# Fused Pallas kernel: adapt -> N_LAYERS x HGTLayer -> out projection
# ----------------------------------------------------------------------------

def _hgt_trunk_kernel(feat_ref, wad_ref, bad_ref,
                      wqkv_ref, bqkv_ref, wa_ref, ba_ref, gam_ref, bet_ref,
                      bias_ref, valid_ref, wout_ref, bout_ref, alpha_ref,
                      out_ref,
                      *, n_layers, num_types, n_heads, d_k, hidden,
                      rel_src, rel_dst):
    num_rel = len(rel_src)

    # ---- adapt_ws + tanh ----------------------------------------------------
    h = []
    for t in range(num_types):
        x = jnp.dot(feat_ref[t], wad_ref[t],
                    preferred_element_type=jnp.float32) + bad_ref[t]
        h.append(jnp.tanh(x))

    # ---- stacked HGT layers (everything stays in vregs / VMEM) --------------
    for l in range(n_layers):
        # One fused lane-dense projection per node type:
        #   proj = h @ [W_q | W_k@R_att*pri/sqrt_dk | W_v@R_msg | 0] + bias
        proj = []
        for t in range(num_types):
            idx = l * num_types + t
            p = jnp.dot(h[t], wqkv_ref[idx],
                        preferred_element_type=jnp.float32) + bqkv_ref[idx]
            proj.append(p)                       # (N, 128)

        t_feat = [None] * num_types
        t_cnt = [0] * num_types
        for r in range(num_rel):
            st, dt = rel_src[r], rel_dst[r]
            q = proj[dt][:, 0:hidden]             # (Nd, hidden)
            key = proj[st][:, hidden:2 * hidden]  # (Ns, hidden)  scale folded in
            val = proj[st][:, 2 * hidden:3 * hidden]
            bias = bias_ref[r]                    # (Nd, Ns) additive 0 / -1e9
            valid = valid_ref[r]                  # (Nd, 1)  1 if any in-edge

            heads = []
            for hh in range(n_heads):
                sl = slice(hh * d_k, (hh + 1) * d_k)
                scores = jax.lax.dot_general(
                    q[:, sl], key[:, sl], (((1,), (1,)), ((), ())),
                    preferred_element_type=jnp.float32) + bias
                m = jnp.max(scores, axis=-1, keepdims=True)
                e = jnp.exp(scores - m)
                s = jnp.sum(e, axis=-1, keepdims=True)   # >= 1 with additive bias
                att = e * pl.reciprocal(s, approx=True)   # EUP slot
                heads.append(jnp.dot(att, val[:, sl],
                                     preferred_element_type=jnp.float32))
            msg = jnp.concatenate(heads, axis=-1) * valid   # (Nd, hidden)
            t_feat[dt] = msg if t_feat[dt] is None else t_feat[dt] + msg
            t_cnt[dt] += 1

        new_h = []
        for t in range(num_types):
            idx = l * num_types + t
            if t_cnt[t] == 0:
                agg = jnp.zeros_like(h[t])
            else:
                agg = t_feat[t] * (1.0 / float(t_cnt[t]))   # cross_reducer='mean'
            trans = jnp.dot(agg, wa_ref[idx],
                            preferred_element_type=jnp.float32) + ba_ref[idx]
            alpha = alpha_ref[idx, 0]                        # SMEM scalar
            x = trans * alpha + h[t] * (1.0 - alpha)
            # LayerNorm (use_norm=True); dropout p=0.2 is identity in eval.
            # TODO(synk): training-mode RNG dropout not implemented.
            mu = jnp.mean(x, axis=-1, keepdims=True)
            var = jnp.mean((x - mu) ** 2, axis=-1, keepdims=True)
            xn = (x - mu) * jax.lax.rsqrt(var + LN_EPS)
            new_h.append(xn * gam_ref[idx] + bet_ref[idx])
        h = new_h

    # ---- shared output projection -------------------------------------------
    for t in range(num_types):
        out_ref[t] = jnp.dot(h[t], wout_ref[...],
                             preferred_element_type=jnp.float32) + bout_ref[...]


def _full_spec(shape):
    n = len(shape)
    return pl.BlockSpec(tuple(shape), lambda i, _n=n: (0,) * _n)


def hgt_trunk_pallas(feats, prep, rel_src, rel_dst):
    """feats: (T, N, IN_DIM) -> out-projected node features (T, N, OUT_DIM)."""
    num_types, n, _ = feats.shape

    kernel = functools.partial(
        _hgt_trunk_kernel,
        n_layers=N_LAYERS, num_types=num_types, n_heads=N_HEADS,
        d_k=D_K, hidden=HIDDEN_DIM,
        rel_src=tuple(rel_src), rel_dst=tuple(rel_dst))

    vmem_args = (feats, prep["wad"], prep["bad"], prep["wqkv"], prep["bqkv"],
                 prep["wa"], prep["ba"], prep["gamma"], prep["beta"],
                 prep["bias"], prep["valid"], prep["wout"], prep["bout"])
    in_specs = [_full_spec(a.shape) for a in vmem_args] + [
        pl.BlockSpec(memory_space=pltpu.MemorySpace.SMEM)]   # alpha scalars

    return pl.pallas_call(
        kernel,
        out_shape=jax.ShapeDtypeStruct((num_types, n, OUT_DIM), jnp.float32),
        grid=(1,),
        in_specs=in_specs,
        out_specs=_full_spec((num_types, n, OUT_DIM)),
        compiler_params=pltpu.CompilerParams(
            dimension_semantics=("arbitrary",)),
    )(*vmem_args, prep["alpha"])


# ----------------------------------------------------------------------------
# Parameters (deterministic synthetic init) + offline weight folding
# ----------------------------------------------------------------------------

def _xavier(key, shape):
    fan_in, fan_out = shape[-2], shape[-1]
    bound = math.sqrt(6.0 / (fan_in + fan_out))
    return jax.random.uniform(key, shape, jnp.float32, -bound, bound)


def init_params(key):
    keys = iter(jax.random.split(key, 256))

    def lin(fin, fout, bias=True):
        w_t = jax.random.normal(next(keys), (fin, fout), jnp.float32) * 0.1
        b = (jax.random.normal(next(keys), (fout,), jnp.float32) * 0.01
             if bias else None)
        return {"w_t": w_t, "b": b}

    params = {
        "adapt": [lin(IN_DIM, HIDDEN_DIM) for _ in range(NUM_TYPES)],
        "layers": [],
        "out": lin(HIDDEN_DIM, OUT_DIM),
        "fc": lin(IN_DIM, OUT_DIM, bias=False),
    }
    for _ in range(N_LAYERS):
        layer = {
            "k": [lin(HIDDEN_DIM, HIDDEN_DIM) for _ in range(NUM_TYPES)],
            "q": [lin(HIDDEN_DIM, HIDDEN_DIM) for _ in range(NUM_TYPES)],
            "v": [lin(HIDDEN_DIM, HIDDEN_DIM) for _ in range(NUM_TYPES)],
            "a": [lin(HIDDEN_DIM, HIDDEN_DIM) for _ in range(NUM_TYPES)],
            "ln_gamma": [jnp.ones((HIDDEN_DIM,), jnp.float32)
                         for _ in range(NUM_TYPES)],
            "ln_beta": [jnp.zeros((HIDDEN_DIM,), jnp.float32)
                        for _ in range(NUM_TYPES)],
            "relation_pri": jnp.ones((NUM_RELATIONS, N_HEADS), jnp.float32),
            "relation_att": _xavier(next(keys),
                                    (NUM_RELATIONS, N_HEADS, D_K, D_K)),
            "relation_msg": _xavier(next(keys),
                                    (NUM_RELATIONS, N_HEADS, D_K, D_K)),
            "skip": jnp.ones((NUM_TYPES,), jnp.float32),
        }
        params["layers"].append(layer)
    return params


def prepare_trunk_params(params, canonical_etypes, adj_masks):
    """One-time (outside jit) folding of relation matrices / pri / skip into
    kernel-ready stacked tensors.  Leading axis of per-layer tensors is
    (layer * NUM_TYPES + type)."""
    rel_src = [None] * NUM_RELATIONS
    rel_dst = [None] * NUM_RELATIONS
    src_to_rel = {}
    for (st, e, dt) in canonical_etypes:
        rel_src[e], rel_dst[e] = st, dt
        src_to_rel[st] = e
    # The fused per-type [q|key|val] packing assumes every node type is the
    # source of exactly one relation (true for this bipartite graph).
    assert len(src_to_rel) == NUM_TYPES

    wad = jnp.stack([params["adapt"][t]["w_t"] for t in range(NUM_TYPES)])
    bad = jnp.stack([params["adapt"][t]["b"].reshape(1, HIDDEN_DIM)
                     for t in range(NUM_TYPES)])

    wqkv, bqkv, wa, ba, gam, bet, alpha = [], [], [], [], [], [], []
    for l in range(N_LAYERS):
        lp = params["layers"][l]
        for t in range(NUM_TYPES):
            r = src_to_rel[t]
            wq, bq = lp["q"][t]["w_t"], lp["q"][t]["b"]
            wk, bk = lp["k"][t]["w_t"], lp["k"][t]["b"]
            wv, bv = lp["v"][t]["w_t"], lp["v"][t]["b"]
            wk_f, bk_f, wv_f, bv_f = [], [], [], []
            for hh in range(N_HEADS):
                sl = slice(hh * D_K, (hh + 1) * D_K)
                ra = lp["relation_att"][r, hh] * (
                    lp["relation_pri"][r, hh] / SQRT_DK)   # fold pri/sqrt_dk
                rm = lp["relation_msg"][r, hh]
                wk_f.append(wk[:, sl] @ ra)
                bk_f.append(bk[sl] @ ra)
                wv_f.append(wv[:, sl] @ rm)
                bv_f.append(bv[sl] @ rm)
            pad_w = jnp.zeros((HIDDEN_DIM, QKV_PAD - 3 * HIDDEN_DIM),
                              jnp.float32)
            pad_b = jnp.zeros((QKV_PAD - 3 * HIDDEN_DIM,), jnp.float32)
            wqkv.append(jnp.concatenate([wq] + wk_f + wv_f + [pad_w], axis=1))
            bqkv.append(jnp.concatenate([bq] + bk_f + bv_f + [pad_b],
                                        axis=0).reshape(1, QKV_PAD))
            wa.append(lp["a"][t]["w_t"])
            ba.append(lp["a"][t]["b"].reshape(1, HIDDEN_DIM))
            gam.append(lp["ln_gamma"][t].reshape(1, HIDDEN_DIM))
            bet.append(lp["ln_beta"][t].reshape(1, HIDDEN_DIM))
            alpha.append(jax.nn.sigmoid(lp["skip"][t]))

    bias = jnp.stack([jnp.where(adj_masks[r] > 0, 0.0, NEG_BIAS)
                      for r in range(NUM_RELATIONS)]).astype(jnp.float32)
    valid = jnp.stack([(jnp.sum(adj_masks[r], axis=-1, keepdims=True) > 0
                        ).astype(jnp.float32)
                       for r in range(NUM_RELATIONS)])

    prep = {
        "wad": wad, "bad": bad,
        "wqkv": jnp.stack(wqkv), "bqkv": jnp.stack(bqkv),
        "wa": jnp.stack(wa), "ba": jnp.stack(ba),
        "gamma": jnp.stack(gam), "beta": jnp.stack(bet),
        "alpha": jnp.stack(alpha).reshape(N_LAYERS * NUM_TYPES, 1),
        "bias": bias, "valid": valid,
        "wout": params["out"]["w_t"],
        "bout": params["out"]["b"].reshape(1, OUT_DIM),
        "fc_w_t": params["fc"]["w_t"],
    }
    return prep, rel_src, rel_dst


# ----------------------------------------------------------------------------
# Forward pass
# ----------------------------------------------------------------------------

def hgt_lp_forward(prep, feats, *, rel_src, rel_dst, pos_edges, neg_edges):
    # One fused pallas_call for the whole trunk.
    h_out = hgt_trunk_pallas(feats, prep, rel_src, rel_dst)   # (T, N, OUT_DIM)

    # 'w' = fc(feature) node data from the PyTorch forward; it never feeds the
    # returned edge scores, so plain JAX (and XLA may DCE it).
    _w = jnp.einsum("tnf,fo->tno", feats, prep["fc_w_t"])

    # HeteroDotProductPredictor (u_dot_v on etype 'likes') in plain JAX:
    # gather + multiply + reduce fuses better than a custom call with a
    # 1-lane-wide output.
    pos_src, pos_dst = pos_edges
    neg_src, neg_dst = neg_edges
    h_user, h_item = h_out[0], h_out[1]
    pos = jnp.sum(h_user[pos_src] * h_item[pos_dst], axis=-1, keepdims=True)
    neg = jnp.sum(h_user[neg_src] * h_item[neg_dst], axis=-1, keepdims=True)
    return pos, neg


# ----------------------------------------------------------------------------
# Main
# ----------------------------------------------------------------------------

if __name__ == "__main__":
    key = jax.random.PRNGKey(0)
    k_param, k_u, k_i = jax.random.split(key, 3)

    params = init_params(k_param)

    # node features per type, stacked (user, item): (T, N, IN_DIM)
    feats = jnp.stack([
        jax.random.normal(k_u, (N_NODES, IN_DIM), jnp.float32),
        jax.random.normal(k_i, (N_NODES, IN_DIM), jnp.float32),
    ])

    # synthetic heterogeneous graph
    # etype 0: 'likes' user -> item ; etype 1: 'rev' item -> user
    pos_src = jnp.array([0, 1, 2, 3, 4, 5, 6, 7, 0, 2, 4, 6], jnp.int32)
    pos_dst = jnp.array([0, 1, 2, 3, 4, 5, 6, 7, 1, 3, 5, 7], jnp.int32)
    adj0 = jnp.zeros((N_NODES, N_NODES), jnp.float32)
    adj0 = adj0.at[pos_dst, pos_src].set(1.0)   # mask[dst_item, src_user]
    adj1 = adj0.T                               # mask[dst_user, src_item]
    adj_masks = [adj0, adj1]
    canonical_etypes = [(0, 0, 1), (1, 1, 0)]   # (src_type, etype_id, dst_type)

    # negative graph edges for the same etype 'likes'
    neg_src = pos_src
    neg_dst = (pos_dst + 3) % N_NODES

    # one-time weight folding / stacking, outside jit
    prep, rel_src, rel_dst = prepare_trunk_params(
        params, canonical_etypes, adj_masks)

    fwd = jax.jit(functools.partial(
        hgt_lp_forward,
        rel_src=tuple(rel_src), rel_dst=tuple(rel_dst),
        pos_edges=(pos_src, pos_dst), neg_edges=(neg_src, neg_dst)))

    pos_score, neg_score = fwd(prep, feats)
    jax.block_until_ready((pos_score, neg_score))

    assert pos_score.shape == (pos_src.shape[0], 1)
    assert neg_score.shape == (neg_src.shape[0], 1)
    assert jnp.all(jnp.isfinite(pos_score)) and jnp.all(jnp.isfinite(neg_score))
    print("KERNEL_OK")
</pallas_src>

<mosaic_0001>
module attributes {stable_mosaic.version = 11 : i64} {
  func.func @_hgt_trunk_kernel(%arg0: i32, %arg1: memref<2x8x16xf32, #tpu.memory_space<vmem>>, %arg2: memref<2x16x32xf32, #tpu.memory_space<vmem>>, %arg3: memref<2x1x32xf32, #tpu.memory_space<vmem>>, %arg4: memref<4x32x128xf32, #tpu.memory_space<vmem>>, %arg5: memref<4x1x128xf32, #tpu.memory_space<vmem>>, %arg6: memref<4x32x32xf32, #tpu.memory_space<vmem>>, %arg7: memref<4x1x32xf32, #tpu.memory_space<vmem>>, %arg8: memref<4x1x32xf32, #tpu.memory_space<vmem>>, %arg9: memref<4x1x32xf32, #tpu.memory_space<vmem>>, %arg10: memref<2x8x8xf32, #tpu.memory_space<vmem>>, %arg11: memref<2x8x1xf32, #tpu.memory_space<vmem>>, %arg12: memref<32x8xf32, #tpu.memory_space<vmem>>, %arg13: memref<1x8xf32, #tpu.memory_space<vmem>>, %arg14: memref<4x1xf32, #tpu.memory_space<smem>>, %arg15: memref<2x8x8xf32, #tpu.memory_space<vmem>>) attributes {dimension_semantics = [#tpu.dimension_semantics<arbitrary>], iteration_bounds = array<i64: 1>, scalar_prefetch = 0 : i64, scratch_operands = 0 : i64, tpu.core_type = #tpu.core_type<tc>, window_params = [{pipeline_mode = #tpu.pipeline_mode<synchronous>, transform_indices = @transform_0, window_bounds = array<i64: 2, 8, 16>}, {pipeline_mode = #tpu.pipeline_mode<synchronous>, transform_indices = @transform_1, window_bounds = array<i64: 2, 16, 32>}, {pipeline_mode = #tpu.pipeline_mode<synchronous>, transform_indices = @transform_2, window_bounds = array<i64: 2, 1, 32>}, {pipeline_mode = #tpu.pipeline_mode<synchronous>, transform_indices = @transform_3, window_bounds = array<i64: 4, 32, 128>}, {pipeline_mode = #tpu.pipeline_mode<synchronous>, transform_indices = @transform_4, window_bounds = array<i64: 4, 1, 128>}, {pipeline_mode = #tpu.pipeline_mode<synchronous>, transform_indices = @transform_5, window_bounds = array<i64: 4, 32, 32>}, {pipeline_mode = #tpu.pipeline_mode<synchronous>, transform_indices = @transform_6, window_bounds = array<i64: 4, 1, 32>}, {pipeline_mode = #tpu.pipeline_mode<synchronous>, transform_indices = @transform_7, window_bounds = array<i64: 4, 1, 32>}, {pipeline_mode = #tpu.pipeline_mode<synchronous>, transform_indices = @transform_8, window_bounds = array<i64: 4, 1, 32>}, {pipeline_mode = #tpu.pipeline_mode<synchronous>, transform_indices = @transform_9, window_bounds = array<i64: 2, 8, 8>}, {pipeline_mode = #tpu.pipeline_mode<synchronous>, transform_indices = @transform_10, window_bounds = array<i64: 2, 8, 1>}, {pipeline_mode = #tpu.pipeline_mode<synchronous>, transform_indices = @transform_11, window_bounds = array<i64: 32, 8>}, {pipeline_mode = #tpu.pipeline_mode<synchronous>, transform_indices = @transform_12, window_bounds = array<i64: 1, 8>}, {transform_indices = @transform_13, window_bounds = array<i64: 4, 1>}, {pipeline_mode = #tpu.pipeline_mode<synchronous>, transform_indices = @transform_14, window_bounds = array<i64: 2, 8, 8>}]} {
    %c0 = arith.constant 0 : index
    %c0_0 = arith.constant 0 : index
    %c0_1 = arith.constant 0 : index
    %0 = vector.load %arg1[%c0, %c0_0, %c0_1] : memref<2x8x16xf32, #tpu.memory_space<vmem>>, vector<1x8x16xf32>
    %1 = vector.shape_cast %0 : vector<1x8x16xf32> to vector<8x16xf32>
    %c0_2 = arith.constant 0 : index
    %c0_3 = arith.constant 0 : index
    %c0_4 = arith.constant 0 : index
    %2 = vector.load %arg2[%c0_2, %c0_3, %c0_4] : memref<2x16x32xf32, #tpu.memory_space<vmem>>, vector<1x16x32xf32>
    %3 = vector.shape_cast %2 : vector<1x16x32xf32> to vector<16x32xf32>
    %cst = arith.constant dense<0.000000e+00> : vector<8x32xf32>
    %4 = tpu.matmul %1, %3, %cst {dimension_numbers = #tpu.dot_dimension_numbers<[1], [0], [0], [1], [0, 0, 1, 1], [], []>} : vector<8x16xf32>, vector<16x32xf32>, vector<8x32xf32> -> vector<8x32xf32>
    %c0_5 = arith.constant 0 : index
    %c0_6 = arith.constant 0 : index
    %c0_7 = arith.constant 0 : index
    %5 = vector.load %arg3[%c0_5, %c0_6, %c0_7] : memref<2x1x32xf32, #tpu.memory_space<vmem>>, vector<1x1x32xf32>
    %6 = vector.shape_cast %5 : vector<1x1x32xf32> to vector<1x32xf32>
    %7 = vector.broadcast %6 : vector<1x32xf32> to vector<8x32xf32>
    %8 = arith.addf %4, %7 : vector<8x32xf32>
    %9 = math.tanh %8 : vector<8x32xf32>
    %c1 = arith.constant 1 : index
    %c0_8 = arith.constant 0 : index
    %c0_9 = arith.constant 0 : index
    %10 = vector.load %arg1[%c1, %c0_8, %c0_9] : memref<2x8x16xf32, #tpu.memory_space<vmem>>, vector<1x8x16xf32>
    %11 = vector.shape_cast %10 : vector<1x8x16xf32> to vector<8x16xf32>
    %c1_10 = arith.constant 1 : index
    %c0_11 = arith.constant 0 : index
    %c0_12 = arith.constant 0 : index
    %12 = vector.load %arg2[%c1_10, %c0_11, %c0_12] : memref<2x16x32xf32, #tpu.memory_space<vmem>>, vector<1x16x32xf32>
    %13 = vector.shape_cast %12 : vector<1x16x32xf32> to vector<16x32xf32>
    %cst_13 = arith.constant dense<0.000000e+00> : vector<8x32xf32>
    %14 = tpu.matmul %11, %13, %cst_13 {dimension_numbers = #tpu.dot_dimension_numbers<[1], [0], [0], [1], [0, 0, 1, 1], [], []>} : vector<8x16xf32>, vector<16x32xf32>, vector<8x32xf32> -> vector<8x32xf32>
    %c1_14 = arith.constant 1 : index
    %c0_15 = arith.constant 0 : index
    %c0_16 = arith.constant 0 : index
    %15 = vector.load %arg3[%c1_14, %c0_15, %c0_16] : memref<2x1x32xf32, #tpu.memory_space<vmem>>, vector<1x1x32xf32>
    %16 = vector.shape_cast %15 : vector<1x1x32xf32> to vector<1x32xf32>
    %17 = vector.broadcast %16 : vector<1x32xf32> to vector<8x32xf32>
    %18 = arith.addf %14, %17 : vector<8x32xf32>
    %19 = math.tanh %18 : vector<8x32xf32>
    %c0_17 = arith.constant 0 : index
    %c0_18 = arith.constant 0 : index
    %c0_19 = arith.constant 0 : index
    %20 = vector.load %arg4[%c0_17, %c0_18, %c0_19] : memref<4x32x128xf32, #tpu.memory_space<vmem>>, vector<1x32x128xf32>
    %21 = vector.shape_cast %20 : vector<1x32x128xf32> to vector<32x128xf32>
    %cst_20 = arith.constant dense<0.000000e+00> : vector<8x128xf32>
    %22 = tpu.matmul %9, %21, %cst_20 {dimension_numbers = #tpu.dot_dimension_numbers<[1], [0], [0], [1], [0, 0, 1, 1], [], []>} : vector<8x32xf32>, vector<32x128xf32>, vector<8x128xf32> -> vector<8x128xf32>
    %c0_21 = arith.constant 0 : index
    %c0_22 = arith.constant 0 : index
    %c0_23 = arith.constant 0 : index
    %23 = vector.load %arg5[%c0_21, %c0_22, %c0_23] : memref<4x1x128xf32, #tpu.memory_space<vmem>>, vector<1x1x128xf32>
    %24 = vector.shape_cast %23 : vector<1x1x128xf32> to vector<1x128xf32>
    %25 = vector.broadcast %24 : vector<1x128xf32> to vector<8x128xf32>
    %26 = arith.addf %22, %25 : vector<8x128xf32>
    %c1_24 = arith.constant 1 : index
    %c0_25 = arith.constant 0 : index
    %c0_26 = arith.constant 0 : index
    %27 = vector.load %arg4[%c1_24, %c0_25, %c0_26] : memref<4x32x128xf32, #tpu.memory_space<vmem>>, vector<1x32x128xf32>
    %28 = vector.shape_cast %27 : vector<1x32x128xf32> to vector<32x128xf32>
    %cst_27 = arith.constant dense<0.000000e+00> : vector<8x128xf32>
    %29 = tpu.matmul %19, %28, %cst_27 {dimension_numbers = #tpu.dot_dimension_numbers<[1], [0], [0], [1], [0, 0, 1, 1], [], []>} : vector<8x32xf32>, vector<32x128xf32>, vector<8x128xf32> -> vector<8x128xf32>
    %c1_28 = arith.constant 1 : index
    %c0_29 = arith.constant 0 : index
    %c0_30 = arith.constant 0 : index
    %30 = vector.load %arg5[%c1_28, %c0_29, %c0_30] : memref<4x1x128xf32, #tpu.memory_space<vmem>>, vector<1x1x128xf32>
    %31 = vector.shape_cast %30 : vector<1x1x128xf32> to vector<1x128xf32>
    %32 = vector.broadcast %31 : vector<1x128xf32> to vector<8x128xf32>
    %33 = arith.addf %29, %32 : vector<8x128xf32>
    %34 = vector.extract_strided_slice %33 {offsets = [0, 0], sizes = [8, 32], strides = [1, 1]} : vector<8x128xf32> to vector<8x32xf32>
    %35 = vector.extract_strided_slice %26 {offsets = [0, 32], sizes = [8, 32], strides = [1, 1]} : vector<8x128xf32> to vector<8x32xf32>
    %36 = vector.extract_strided_slice %26 {offsets = [0, 64], sizes = [8, 32], strides = [1, 1]} : vector<8x128xf32> to vector<8x32xf32>
    %c0_31 = arith.constant 0 : index
    %c0_32 = arith.constant 0 : index
    %c0_33 = arith.constant 0 : index
    %37 = vector.load %arg10[%c0_31, %c0_32, %c0_33] : memref<2x8x8xf32, #tpu.memory_space<vmem>>, vector<1x8x8xf32>
    %38 = vector.shape_cast %37 : vector<1x8x8xf32> to vector<8x8xf32>
    %c0_34 = arith.constant 0 : index
    %c0_35 = arith.constant 0 : index
    %c0_36 = arith.constant 0 : index
    %39 = vector.load %arg11[%c0_34, %c0_35, %c0_36] : memref<2x8x1xf32, #tpu.memory_space<vmem>>, vector<1x8x1xf32>
    %40 = vector.shape_cast %39 : vector<1x8x1xf32> to vector<8x1xf32>
    %41 = vector.extract_strided_slice %34 {offsets = [0, 0], sizes = [8, 16], strides = [1, 1]} : vector<8x32xf32> to vector<8x16xf32>
    %42 = vector.extract_strided_slice %35 {offsets = [0, 0], sizes = [8, 16], strides = [1, 1]} : vector<8x32xf32> to vector<8x16xf32>
    %cst_37 = arith.constant dense<0.000000e+00> : vector<8x8xf32>
    %43 = tpu.matmul %41, %42, %cst_37 {dimension_numbers = #tpu.dot_dimension_numbers<[1], [1], [0], [0], [0, 0, 1, 0], [], []>} : vector<8x16xf32>, vector<8x16xf32>, vector<8x8xf32> -> vector<8x8xf32>
    %44 = arith.addf %43, %38 : vector<8x8xf32>
    %cst_38 = arith.constant dense<0xFF800000> : vector<8xf32>
    %45 = vector.multi_reduction <maximumf>, %44, %cst_38 [1] : vector<8x8xf32> to vector<8xf32>
    %46 = vector.shape_cast %45 : vector<8xf32> to vector<8x1xf32>
    %47 = vector.broadcast %46 : vector<8x1xf32> to vector<8x8xf32>
    %48 = arith.subf %44, %47 : vector<8x8xf32>
    %49 = math.exp %48 : vector<8x8xf32>
    %cst_39 = arith.constant dense<0.000000e+00> : vector<8xf32>
    %50 = vector.multi_reduction <add>, %49, %cst_39 [1] : vector<8x8xf32> to vector<8xf32>
    %51 = vector.shape_cast %50 : vector<8xf32> to vector<8x1xf32>
    %52 = tpu.reciprocal %51 {approx = true} : vector<8x1xf32> -> vector<8x1xf32>
    %53 = vector.broadcast %52 : vector<8x1xf32> to vector<8x8xf32>
    %54 = arith.mulf %49, %53 : vector<8x8xf32>
    %55 = vector.extract_strided_slice %36 {offsets = [0, 0], sizes = [8, 16], strides = [1, 1]} : vector<8x32xf32> to vector<8x16xf32>
    %cst_40 = arith.constant dense<0.000000e+00> : vector<8x16xf32>
    %56 = tpu.matmul %54, %55, %cst_40 {dimension_numbers = #tpu.dot_dimension_numbers<[1], [0], [0], [1], [0, 0, 1, 1], [], []>} : vector<8x8xf32>, vector<8x16xf32>, vector<8x16xf32> -> vector<8x16xf32>
    %57 = vector.extract_strided_slice %34 {offsets = [0, 16], sizes = [8, 16], strides = [1, 1]} : vector<8x32xf32> to vector<8x16xf32>
    %58 = vector.extract_strided_slice %35 {offsets = [0, 16], sizes = [8, 16], strides = [1, 1]} : vector<8x32xf32> to vector<8x16xf32>
    %cst_41 = arith.constant dense<0.000000e+00> : vector<8x8xf32>
    %59 = tpu.matmul %57, %58, %cst_41 {dimension_numbers = #tpu.dot_dimension_numbers<[1], [1], [0], [0], [0, 0, 1, 0], [], []>} : vector<8x16xf32>, vector<8x16xf32>, vector<8x8xf32> -> vector<8x8xf32>
    %60 = arith.addf %59, %38 : vector<8x8xf32>
    %cst_42 = arith.constant dense<0xFF800000> : vector<8xf32>
    %61 = vector.multi_reduction <maximumf>, %60, %cst_42 [1] : vector<8x8xf32> to vector<8xf32>
    %62 = vector.shape_cast %61 : vector<8xf32> to vector<8x1xf32>
    %63 = vector.broadcast %62 : vector<8x1xf32> to vector<8x8xf32>
    %64 = arith.subf %60, %63 : vector<8x8xf32>
    %65 = math.exp %64 : vector<8x8xf32>
    %cst_43 = arith.constant dense<0.000000e+00> : vector<8xf32>
    %66 = vector.multi_reduction <add>, %65, %cst_43 [1] : vector<8x8xf32> to vector<8xf32>
    %67 = vector.shape_cast %66 : vector<8xf32> to vector<8x1xf32>
    %68 = tpu.reciprocal %67 {approx = true} : vector<8x1xf32> -> vector<8x1xf32>
    %69 = vector.broadcast %68 : vector<8x1xf32> to vector<8x8xf32>
    %70 = arith.mulf %65, %69 : vector<8x8xf32>
    %71 = vector.extract_strided_slice %36 {offsets = [0, 16], sizes = [8, 16], strides = [1, 1]} : vector<8x32xf32> to vector<8x16xf32>
    %cst_44 = arith.constant dense<0.000000e+00> : vector<8x16xf32>
    %72 = tpu.matmul %70, %71, %cst_44 {dimension_numbers = #tpu.dot_dimension_numbers<[1], [0], [0], [1], [0, 0, 1, 1], [], []>} : vector<8x8xf32>, vector<8x16xf32>, vector<8x16xf32> -> vector<8x16xf32>
    %73 = tpu.concatenate %56, %72 in 1 : vector<8x16xf32>, vector<8x16xf32> -> vector<8x32xf32>
    %74 = vector.broadcast %40 : vector<8x1xf32> to vector<8x32xf32>
    %75 = arith.mulf %73, %74 : vector<8x32xf32>
    %76 = vector.extract_strided_slice %26 {offsets = [0, 0], sizes = [8, 32], strides = [1, 1]} : vector<8x128xf32> to vector<8x32xf32>
    %77 = vector.extract_strided_slice %33 {offsets = [0, 32], sizes = [8, 32], strides = [1, 1]} : vector<8x128xf32> to vector<8x32xf32>
    %78 = vector.extract_strided_slice %33 {offsets = [0, 64], sizes = [8, 32], strides = [1, 1]} : vector<8x128xf32> to vector<8x32xf32>
    %c1_45 = arith.constant 1 : index
    %c0_46 = arith.constant 0 : index
    %c0_47 = arith.constant 0 : index
    %79 = vector.load %arg10[%c1_45, %c0_46, %c0_47] : memref<2x8x8xf32, #tpu.memory_space<vmem>>, vector<1x8x8xf32>
    %80 = vector.shape_cast %79 : vector<1x8x8xf32> to vector<8x8xf32>
    %c1_48 = arith.constant 1 : index
    %c0_49 = arith.constant 0 : index
    %c0_50 = arith.constant 0 : index
    %81 = vector.load %arg11[%c1_48, %c0_49, %c0_50] : memref<2x8x1xf32, #tpu.memory_space<vmem>>, vector<1x8x1xf32>
    %82 = vector.shape_cast %81 : vector<1x8x1xf32> to vector<8x1xf32>
    %83 = vector.extract_strided_slice %76 {offsets = [0, 0], sizes = [8, 16], strides = [1, 1]} : vector<8x32xf32> to vector<8x16xf32>
    %84 = vector.extract_strided_slice %77 {offsets = [0, 0], sizes = [8, 16], strides = [1, 1]} : vector<8x32xf32> to vector<8x16xf32>
    %cst_51 = arith.constant dense<0.000000e+00> : vector<8x8xf32>
    %85 = tpu.matmul %83, %84, %cst_51 {dimension_numbers = #tpu.dot_dimension_numbers<[1], [1], [0], [0], [0, 0, 1, 0], [], []>} : vector<8x16xf32>, vector<8x16xf32>, vector<8x8xf32> -> vector<8x8xf32>
    %86 = arith.addf %85, %80 : vector<8x8xf32>
    %cst_52 = arith.constant dense<0xFF800000> : vector<8xf32>
    %87 = vector.multi_reduction <maximumf>, %86, %cst_52 [1] : vector<8x8xf32> to vector<8xf32>
    %88 = vector.shape_cast %87 : vector<8xf32> to vector<8x1xf32>
    %89 = vector.broadcast %88 : vector<8x1xf32> to vector<8x8xf32>
    %90 = arith.subf %86, %89 : vector<8x8xf32>
    %91 = math.exp %90 : vector<8x8xf32>
    %cst_53 = arith.constant dense<0.000000e+00> : vector<8xf32>
    %92 = vector.multi_reduction <add>, %91, %cst_53 [1] : vector<8x8xf32> to vector<8xf32>
    %93 = vector.shape_cast %92 : vector<8xf32> to vector<8x1xf32>
    %94 = tpu.reciprocal %93 {approx = true} : vector<8x1xf32> -> vector<8x1xf32>
    %95 = vector.broadcast %94 : vector<8x1xf32> to vector<8x8xf32>
    %96 = arith.mulf %91, %95 : vector<8x8xf32>
    %97 = vector.extract_strided_slice %78 {offsets = [0, 0], sizes = [8, 16], strides = [1, 1]} : vector<8x32xf32> to vector<8x16xf32>
    %cst_54 = arith.constant dense<0.000000e+00> : vector<8x16xf32>
    %98 = tpu.matmul %96, %97, %cst_54 {dimension_numbers = #tpu.dot_dimension_numbers<[1], [0], [0], [1], [0, 0, 1, 1], [], []>} : vector<8x8xf32>, vector<8x16xf32>, vector<8x16xf32> -> vector<8x16xf32>
    %99 = vector.extract_strided_slice %76 {offsets = [0, 16], sizes = [8, 16], strides = [1, 1]} : vector<8x32xf32> to vector<8x16xf32>
    %100 = vector.extract_strided_slice %77 {offsets = [0, 16], sizes = [8, 16], strides = [1, 1]} : vector<8x32xf32> to vector<8x16xf32>
    %cst_55 = arith.constant dense<0.000000e+00> : vector<8x8xf32>
    %101 = tpu.matmul %99, %100, %cst_55 {dimension_numbers = #tpu.dot_dimension_numbers<[1], [1], [0], [0], [0, 0, 1, 0], [], []>} : vector<8x16xf32>, vector<8x16xf32>, vector<8x8xf32> -> vector<8x8xf32>
    %102 = arith.addf %101, %80 : vector<8x8xf32>
    %cst_56 = arith.constant dense<0xFF800000> : vector<8xf32>
    %103 = vector.multi_reduction <maximumf>, %102, %cst_56 [1] : vector<8x8xf32> to vector<8xf32>
    %104 = vector.shape_cast %103 : vector<8xf32> to vector<8x1xf32>
    %105 = vector.broadcast %104 : vector<8x1xf32> to vector<8x8xf32>
    %106 = arith.subf %102, %105 : vector<8x8xf32>
    %107 = math.exp %106 : vector<8x8xf32>
    %cst_57 = arith.constant dense<0.000000e+00> : vector<8xf32>
    %108 = vector.multi_reduction <add>, %107, %cst_57 [1] : vector<8x8xf32> to vector<8xf32>
    %109 = vector.shape_cast %108 : vector<8xf32> to vector<8x1xf32>
    %110 = tpu.reciprocal %109 {approx = true} : vector<8x1xf32> -> vector<8x1xf32>
    %111 = vector.broadcast %110 : vector<8x1xf32> to vector<8x8xf32>
    %112 = arith.mulf %107, %111 : vector<8x8xf32>
    %113 = vector.extract_strided_slice %78 {offsets = [0, 16], sizes = [8, 16], strides = [1, 1]} : vector<8x32xf32> to vector<8x16xf32>
    %cst_58 = arith.constant dense<0.000000e+00> : vector<8x16xf32>
    %114 = tpu.matmul %112, %113, %cst_58 {dimension_numbers = #tpu.dot_dimension_numbers<[1], [0], [0], [1], [0, 0, 1, 1], [], []>} : vector<8x8xf32>, vector<8x16xf32>, vector<8x16xf32> -> vector<8x16xf32>
    %115 = tpu.concatenate %98, %114 in 1 : vector<8x16xf32>, vector<8x16xf32> -> vector<8x32xf32>
    %116 = vector.broadcast %82 : vector<8x1xf32> to vector<8x32xf32>
    %117 = arith.mulf %115, %116 : vector<8x32xf32>
    %cst_59 = arith.constant 1.000000e+00 : f32
    %118 = vector.broadcast %cst_59 : f32 to vector<8x32xf32>
    %119 = arith.mulf %117, %118 : vector<8x32xf32>
    %c0_60 = arith.constant 0 : index
    %c0_61 = arith.constant 0 : index
    %c0_62 = arith.constant 0 : index
    %120 = vector.load %arg6[%c0_60, %c0_61, %c0_62] : memref<4x32x32xf32, #tpu.memory_space<vmem>>, vector<1x32x32xf32>
    %121 = vector.shape_cast %120 : vector<1x32x32xf32> to vector<32x32xf32>
    %cst_63 = arith.constant dense<0.000000e+00> : vector<8x32xf32>
    %122 = tpu.matmul %119, %121, %cst_63 {dimension_numbers = #tpu.dot_dimension_numbers<[1], [0], [0], [1], [0, 0, 1, 1], [], []>} : vector<8x32xf32>, vector<32x32xf32>, vector<8x32xf32> -> vector<8x32xf32>
    %c0_64 = arith.constant 0 : index
    %c0_65 = arith.constant 0 : index
    %c0_66 = arith.constant 0 : index
    %123 = vector.load %arg7[%c0_64, %c0_65, %c0_66] : memref<4x1x32xf32, #tpu.memory_space<vmem>>, vector<1x1x32xf32>
    %124 = vector.shape_cast %123 : vector<1x1x32xf32> to vector<1x32xf32>
    %125 = vector.broadcast %124 : vector<1x32xf32> to vector<8x32xf32>
    %126 = arith.addf %122, %125 : vector<8x32xf32>
    %c0_67 = arith.constant 0 : index
    %c0_68 = arith.constant 0 : index
    %127 = memref.load %arg14[%c0_67, %c0_68] : memref<4x1xf32, #tpu.memory_space<smem>>
    %128 = vector.broadcast %127 : f32 to vector<8x32xf32>
    %129 = arith.mulf %126, %128 : vector<8x32xf32>
    %cst_69 = arith.constant 1.000000e+00 : f32
    %130 = arith.subf %cst_69, %127 : f32
    %131 = vector.broadcast %130 : f32 to vector<8x32xf32>
    %132 = arith.mulf %9, %131 : vector<8x32xf32>
    %133 = arith.addf %129, %132 : vector<8x32xf32>
    %cst_70 = arith.constant dense<0.000000e+00> : vector<8xf32>
    %134 = vector.multi_reduction <add>, %133, %cst_70 [1] : vector<8x32xf32> to vector<8xf32>
    %135 = vector.shape_cast %134 : vector<8xf32> to vector<8x1xf32>
    %cst_71 = arith.constant 3.200000e+01 : f32
    %136 = vector.broadcast %cst_71 : f32 to vector<8x1xf32>
    %137 = arith.divf %135, %136 : vector<8x1xf32>
    %138 = vector.broadcast %137 : vector<8x1xf32> to vector<8x32xf32>
    %139 = arith.subf %133, %138 : vector<8x32xf32>
    %140 = arith.mulf %139, %139 : vector<8x32xf32>
    %cst_72 = arith.constant dense<0.000000e+00> : vector<8xf32>
    %141 = vector.multi_reduction <add>, %140, %cst_72 [1] : vector<8x32xf32> to vector<8xf32>
    %142 = vector.shape_cast %141 : vector<8xf32> to vector<8x1xf32>
    %cst_73 = arith.constant 3.200000e+01 : f32
    %143 = vector.broadcast %cst_73 : f32 to vector<8x1xf32>
    %144 = arith.divf %142, %143 : vector<8x1xf32>
    %145 = vector.broadcast %137 : vector<8x1xf32> to vector<8x32xf32>
    %146 = arith.subf %133, %145 : vector<8x32xf32>
    %cst_74 = arith.constant 9.99999974E-6 : f32
    %147 = vector.broadcast %cst_74 : f32 to vector<8x1xf32>
    %148 = arith.addf %144, %147 : vector<8x1xf32>
    %149 = math.rsqrt %148 : vector<8x1xf32>
    %150 = vector.broadcast %149 : vector<8x1xf32> to vector<8x32xf32>
    %151 = arith.mulf %146, %150 : vector<8x32xf32>
    %c0_75 = arith.constant 0 : index
    %c0_76 = arith.constant 0 : index
    %c0_77 = arith.constant 0 : index
    %152 = vector.load %arg8[%c0_75, %c0_76, %c0_77] : memref<4x1x32xf32, #tpu.memory_space<vmem>>, vector<1x1x32xf32>
    %153 = vector.shape_cast %152 : vector<1x1x32xf32> to vector<1x32xf32>
    %154 = vector.broadcast %153 : vector<1x32xf32> to vector<8x32xf32>
    %155 = arith.mulf %151, %154 : vector<8x32xf32>
    %c0_78 = arith.constant 0 : index
    %c0_79 = arith.constant 0 : index
    %c0_80 = arith.constant 0 : index
    %156 = vector.load %arg9[%c0_78, %c0_79, %c0_80] : memref<4x1x32xf32, #tpu.memory_space<vmem>>, vector<1x1x32xf32>
    %157 = vector.shape_cast %156 : vector<1x1x32xf32> to vector<1x32xf32>
    %158 = vector.broadcast %157 : vector<1x32xf32> to vector<8x32xf32>
    %159 = arith.addf %155, %158 : vector<8x32xf32>
    %cst_81 = arith.constant 1.000000e+00 : f32
    %160 = vector.broadcast %cst_81 : f32 to vector<8x32xf32>
    %161 = arith.mulf %75, %160 : vector<8x32xf32>
    %c1_82 = arith.constant 1 : index
    %c0_83 = arith.constant 0 : index
    %c0_84 = arith.constant 0 : index
    %162 = vector.load %arg6[%c1_82, %c0_83, %c0_84] : memref<4x32x32xf32, #tpu.memory_space<vmem>>, vector<1x32x32xf32>
    %163 = vector.shape_cast %162 : vector<1x32x32xf32> to vector<32x32xf32>
    %cst_85 = arith.constant dense<0.000000e+00> : vector<8x32xf32>
    %164 = tpu.matmul %161, %163, %cst_85 {dimension_numbers = #tpu.dot_dimension_numbers<[1], [0], [0], [1], [0, 0, 1, 1], [], []>} : vector<8x32xf32>, vector<32x32xf32>, vector<8x32xf32> -> vector<8x32xf32>
    %c1_86 = arith.constant 1 : index
    %c0_87 = arith.constant 0 : index
    %c0_88 = arith.constant 0 : index
    %165 = vector.load %arg7[%c1_86, %c0_87, %c0_88] : memref<4x1x32xf32, #tpu.memory_space<vmem>>, vector<1x1x32xf32>
    %166 = vector.shape_cast %165 : vector<1x1x32xf32> to vector<1x32xf32>
    %167 = vector.broadcast %166 : vector<1x32xf32> to vector<8x32xf32>
    %168 = arith.addf %164, %167 : vector<8x32xf32>
    %c1_89 = arith.constant 1 : index
    %c0_90 = arith.constant 0 : index
    %169 = memref.load %arg14[%c1_89, %c0_90] : memref<4x1xf32, #tpu.memory_space<smem>>
    %170 = vector.broadcast %169 : f32 to vector<8x32xf32>
    %171 = arith.mulf %168, %170 : vector<8x32xf32>
    %cst_91 = arith.constant 1.000000e+00 : f32
    %172 = arith.subf %cst_91, %169 : f32
    %173 = vector.broadcast %172 : f32 to vector<8x32xf32>
    %174 = arith.mulf %19, %173 : vector<8x32xf32>
    %175 = arith.addf %171, %174 : vector<8x32xf32>
    %cst_92 = arith.constant dense<0.000000e+00> : vector<8xf32>
    %176 = vector.multi_reduction <add>, %175, %cst_92 [1] : vector<8x32xf32> to vector<8xf32>
    %177 = vector.shape_cast %176 : vector<8xf32> to vector<8x1xf32>
    %cst_93 = arith.constant 3.200000e+01 : f32
    %178 = vector.broadcast %cst_93 : f32 to vector<8x1xf32>
    %179 = arith.divf %177, %178 : vector<8x1xf32>
    %180 = vector.broadcast %179 : vector<8x1xf32> to vector<8x32xf32>
    %181 = arith.subf %175, %180 : vector<8x32xf32>
    %182 = arith.mulf %181, %181 : vector<8x32xf32>
    %cst_94 = arith.constant dense<0.000000e+00> : vector<8xf32>
    %183 = vector.multi_reduction <add>, %182, %cst_94 [1] : vector<8x32xf32> to vector<8xf32>
    %184 = vector.shape_cast %183 : vector<8xf32> to vector<8x1xf32>
    %cst_95 = arith.constant 3.200000e+01 : f32
    %185 = vector.broadcast %cst_95 : f32 to vector<8x1xf32>
    %186 = arith.divf %184, %185 : vector<8x1xf32>
    %187 = vector.broadcast %179 : vector<8x1xf32> to vector<8x32xf32>
    %188 = arith.subf %175, %187 : vector<8x32xf32>
    %cst_96 = arith.constant 9.99999974E-6 : f32
    %189 = vector.broadcast %cst_96 : f32 to vector<8x1xf32>
    %190 = arith.addf %186, %189 : vector<8x1xf32>
    %191 = math.rsqrt %190 : vector<8x1xf32>
    %192 = vector.broadcast %191 : vector<8x1xf32> to vector<8x32xf32>
    %193 = arith.mulf %188, %192 : vector<8x32xf32>
    %c1_97 = arith.constant 1 : index
    %c0_98 = arith.constant 0 : index
    %c0_99 = arith.constant 0 : index
    %194 = vector.load %arg8[%c1_97, %c0_98, %c0_99] : memref<4x1x32xf32, #tpu.memory_space<vmem>>, vector<1x1x32xf32>
    %195 = vector.shape_cast %194 : vector<1x1x32xf32> to vector<1x32xf32>
    %196 = vector.broadcast %195 : vector<1x32xf32> to vector<8x32xf32>
    %197 = arith.mulf %193, %196 : vector<8x32xf32>
    %c1_100 = arith.constant 1 : index
    %c0_101 = arith.constant 0 : index
    %c0_102 = arith.constant 0 : index
    %198 = vector.load %arg9[%c1_100, %c0_101, %c0_102] : memref<4x1x32xf32, #tpu.memory_space<vmem>>, vector<1x1x32xf32>
    %199 = vector.shape_cast %198 : vector<1x1x32xf32> to vector<1x32xf32>
    %200 = vector.broadcast %199 : vector<1x32xf32> to vector<8x32xf32>
    %201 = arith.addf %197, %200 : vector<8x32xf32>
    %c2 = arith.constant 2 : index
    %c0_103 = arith.constant 0 : index
    %c0_104 = arith.constant 0 : index
    %202 = vector.load %arg4[%c2, %c0_103, %c0_104] : memref<4x32x128xf32, #tpu.memory_space<vmem>>, vector<1x32x128xf32>
    %203 = vector.shape_cast %202 : vector<1x32x128xf32> to vector<32x128xf32>
    %cst_105 = arith.constant dense<0.000000e+00> : vector<8x128xf32>
    %204 = tpu.matmul %159, %203, %cst_105 {dimension_numbers = #tpu.dot_dimension_numbers<[1], [0], [0], [1], [0, 0, 1, 1], [], []>} : vector<8x32xf32>, vector<32x128xf32>, vector<8x128xf32> -> vector<8x128xf32>
    %c2_106 = arith.constant 2 : index
    %c0_107 = arith.constant 0 : index
    %c0_108 = arith.constant 0 : index
    %205 = vector.load %arg5[%c2_106, %c0_107, %c0_108] : memref<4x1x128xf32, #tpu.memory_space<vmem>>, vector<1x1x128xf32>
    %206 = vector.shape_cast %205 : vector<1x1x128xf32> to vector<1x128xf32>
    %207 = vector.broadcast %206 : vector<1x128xf32> to vector<8x128xf32>
    %208 = arith.addf %204, %207 : vector<8x128xf32>
    %c3 = arith.constant 3 : index
    %c0_109 = arith.constant 0 : index
    %c0_110 = arith.constant 0 : index
    %209 = vector.load %arg4[%c3, %c0_109, %c0_110] : memref<4x32x128xf32, #tpu.memory_space<vmem>>, vector<1x32x128xf32>
    %210 = vector.shape_cast %209 : vector<1x32x128xf32> to vector<32x128xf32>
    %cst_111 = arith.constant dense<0.000000e+00> : vector<8x128xf32>
    %211 = tpu.matmul %201, %210, %cst_111 {dimension_numbers = #tpu.dot_dimension_numbers<[1], [0], [0], [1], [0, 0, 1, 1], [], []>} : vector<8x32xf32>, vector<32x128xf32>, vector<8x128xf32> -> vector<8x128xf32>
    %c3_112 = arith.constant 3 : index
    %c0_113 = arith.constant 0 : index
    %c0_114 = arith.constant 0 : index
    %212 = vector.load %arg5[%c3_112, %c0_113, %c0_114] : memref<4x1x128xf32, #tpu.memory_space<vmem>>, vector<1x1x128xf32>
    %213 = vector.shape_cast %212 : vector<1x1x128xf32> to vector<1x128xf32>
    %214 = vector.broadcast %213 : vector<1x128xf32> to vector<8x128xf32>
    %215 = arith.addf %211, %214 : vector<8x128xf32>
    %216 = vector.extract_strided_slice %215 {offsets = [0, 0], sizes = [8, 32], strides = [1, 1]} : vector<8x128xf32> to vector<8x32xf32>
    %217 = vector.extract_strided_slice %208 {offsets = [0, 32], sizes = [8, 32], strides = [1, 1]} : vector<8x128xf32> to vector<8x32xf32>
    %218 = vector.extract_strided_slice %208 {offsets = [0, 64], sizes = [8, 32], strides = [1, 1]} : vector<8x128xf32> to vector<8x32xf32>
    %c0_115 = arith.constant 0 : index
    %c0_116 = arith.constant 0 : index
    %c0_117 = arith.constant 0 : index
    %219 = vector.load %arg10[%c0_115, %c0_116, %c0_117] : memref<2x8x8xf32, #tpu.memory_space<vmem>>, vector<1x8x8xf32>
    %220 = vector.shape_cast %219 : vector<1x8x8xf32> to vector<8x8xf32>
    %c0_118 = arith.constant 0 : index
    %c0_119 = arith.constant 0 : index
    %c0_120 = arith.constant 0 : index
    %221 = vector.load %arg11[%c0_118, %c0_119, %c0_120] : memref<2x8x1xf32, #tpu.memory_space<vmem>>, vector<1x8x1xf32>
    %222 = vector.shape_cast %221 : vector<1x8x1xf32> to vector<8x1xf32>
    %223 = vector.extract_strided_slice %216 {offsets = [0, 0], sizes = [8, 16], strides = [1, 1]} : vector<8x32xf32> to vector<8x16xf32>
    %224 = vector.extract_strided_slice %217 {offsets = [0, 0], sizes = [8, 16], strides = [1, 1]} : vector<8x32xf32> to vector<8x16xf32>
    %cst_121 = arith.constant dense<0.000000e+00> : vector<8x8xf32>
    %225 = tpu.matmul %223, %224, %cst_121 {dimension_numbers = #tpu.dot_dimension_numbers<[1], [1], [0], [0], [0, 0, 1, 0], [], []>} : vector<8x16xf32>, vector<8x16xf32>, vector<8x8xf32> -> vector<8x8xf32>
    %226 = arith.addf %225, %220 : vector<8x8xf32>
    %cst_122 = arith.constant dense<0xFF800000> : vector<8xf32>
    %227 = vector.multi_reduction <maximumf>, %226, %cst_122 [1] : vector<8x8xf32> to vector<8xf32>
    %228 = vector.shape_cast %227 : vector<8xf32> to vector<8x1xf32>
    %229 = vector.broadcast %228 : vector<8x1xf32> to vector<8x8xf32>
    %230 = arith.subf %226, %229 : vector<8x8xf32>
    %231 = math.exp %230 : vector<8x8xf32>
    %cst_123 = arith.constant dense<0.000000e+00> : vector<8xf32>
    %232 = vector.multi_reduction <add>, %231, %cst_123 [1] : vector<8x8xf32> to vector<8xf32>
    %233 = vector.shape_cast %232 : vector<8xf32> to vector<8x1xf32>
    %234 = tpu.reciprocal %233 {approx = true} : vector<8x1xf32> -> vector<8x1xf32>
    %235 = vector.broadcast %234 : vector<8x1xf32> to vector<8x8xf32>
    %236 = arith.mulf %231, %235 : vector<8x8xf32>
    %237 = vector.extract_strided_slice %218 {offsets = [0, 0], sizes = [8, 16], strides = [1, 1]} : vector<8x32xf32> to vector<8x16xf32>
    %cst_124 = arith.constant dense<0.000000e+00> : vector<8x16xf32>
    %238 = tpu.matmul %236, %237, %cst_124 {dimension_numbers = #tpu.dot_dimension_numbers<[1], [0], [0], [1], [0, 0, 1, 1], [], []>} : vector<8x8xf32>, vector<8x16xf32>, vector<8x16xf32> -> vector<8x16xf32>
    %239 = vector.extract_strided_slice %216 {offsets = [0, 16], sizes = [8, 16], strides = [1, 1]} : vector<8x32xf32> to vector<8x16xf32>
    %240 = vector.extract_strided_slice %217 {offsets = [0, 16], sizes = [8, 16], strides = [1, 1]} : vector<8x32xf32> to vector<8x16xf32>
    %cst_125 = arith.constant dense<0.000000e+00> : vector<8x8xf32>
    %241 = tpu.matmul %239, %240, %cst_125 {dimension_numbers = #tpu.dot_dimension_numbers<[1], [1], [0], [0], [0, 0, 1, 0], [], []>} : vector<8x16xf32>, vector<8x16xf32>, vector<8x8xf32> -> vector<8x8xf32>
    %242 = arith.addf %241, %220 : vector<8x8xf32>
    %cst_126 = arith.constant dense<0xFF800000> : vector<8xf32>
    %243 = vector.multi_reduction <maximumf>, %242, %cst_126 [1] : vector<8x8xf32> to vector<8xf32>
    %244 = vector.shape_cast %243 : vector<8xf32> to vector<8x1xf32>
    %245 = vector.broadcast %244 : vector<8x1xf32> to vector<8x8xf32>
    %246 = arith.subf %242, %245 : vector<8x8xf32>
    %247 = math.exp %246 : vector<8x8xf32>
    %cst_127 = arith.constant dense<0.000000e+00> : vector<8xf32>
    %248 = vector.multi_reduction <add>, %247, %cst_127 [1] : vector<8x8xf32> to vector<8xf32>
    %249 = vector.shape_cast %248 : vector<8xf32> to vector<8x1xf32>
    %250 = tpu.reciprocal %249 {approx = true} : vector<8x1xf32> -> vector<8x1xf32>
    %251 = vector.broadcast %250 : vector<8x1xf32> to vector<8x8xf32>
    %252 = arith.mulf %247, %251 : vector<8x8xf32>
    %253 = vector.extract_strided_slice %218 {offsets = [0, 16], sizes = [8, 16], strides = [1, 1]} : vector<8x32xf32> to vector<8x16xf32>
    %cst_128 = arith.constant dense<0.000000e+00> : vector<8x16xf32>
    %254 = tpu.matmul %252, %253, %cst_128 {dimension_numbers = #tpu.dot_dimension_numbers<[1], [0], [0], [1], [0, 0, 1, 1], [], []>} : vector<8x8xf32>, vector<8x16xf32>, vector<8x16xf32> -> vector<8x16xf32>
    %255 = tpu.concatenate %238, %254 in 1 : vector<8x16xf32>, vector<8x16xf32> -> vector<8x32xf32>
    %256 = vector.broadcast %222 : vector<8x1xf32> to vector<8x32xf32>
    %257 = arith.mulf %255, %256 : vector<8x32xf32>
    %258 = vector.extract_strided_slice %208 {offsets = [0, 0], sizes = [8, 32], strides = [1, 1]} : vector<8x128xf32> to vector<8x32xf32>
    %259 = vector.extract_strided_slice %215 {offsets = [0, 32], sizes = [8, 32], strides = [1, 1]} : vector<8x128xf32> to vector<8x32xf32>
    %260 = vector.extract_strided_slice %215 {offsets = [0, 64], sizes = [8, 32], strides = [1, 1]} : vector<8x128xf32> to vector<8x32xf32>
    %c1_129 = arith.constant 1 : index
    %c0_130 = arith.constant 0 : index
    %c0_131 = arith.constant 0 : index
    %261 = vector.load %arg10[%c1_129, %c0_130, %c0_131] : memref<2x8x8xf32, #tpu.memory_space<vmem>>, vector<1x8x8xf32>
    %262 = vector.shape_cast %261 : vector<1x8x8xf32> to vector<8x8xf32>
    %c1_132 = arith.constant 1 : index
    %c0_133 = arith.constant 0 : index
    %c0_134 = arith.constant 0 : index
    %263 = vector.load %arg11[%c1_132, %c0_133, %c0_134] : memref<2x8x1xf32, #tpu.memory_space<vmem>>, vector<1x8x1xf32>
    %264 = vector.shape_cast %263 : vector<1x8x1xf32> to vector<8x1xf32>
    %265 = vector.extract_strided_slice %258 {offsets = [0, 0], sizes = [8, 16], strides = [1, 1]} : vector<8x32xf32> to vector<8x16xf32>
    %266 = vector.extract_strided_slice %259 {offsets = [0, 0], sizes = [8, 16], strides = [1, 1]} : vector<8x32xf32> to vector<8x16xf32>
    %cst_135 = arith.constant dense<0.000000e+00> : vector<8x8xf32>
    %267 = tpu.matmul %265, %266, %cst_135 {dimension_numbers = #tpu.dot_dimension_numbers<[1], [1], [0], [0], [0, 0, 1, 0], [], []>} : vector<8x16xf32>, vector<8x16xf32>, vector<8x8xf32> -> vector<8x8xf32>
    %268 = arith.addf %267, %262 : vector<8x8xf32>
    %cst_136 = arith.constant dense<0xFF800000> : vector<8xf32>
    %269 = vector.multi_reduction <maximumf>, %268, %cst_136 [1] : vector<8x8xf32> to vector<8xf32>
    %270 = vector.shape_cast %269 : vector<8xf32> to vector<8x1xf32>
    %271 = vector.broadcast %270 : vector<8x1xf32> to vector<8x8xf32>
    %272 = arith.subf %268, %271 : vector<8x8xf32>
    %273 = math.exp %272 : vector<8x8xf32>
    %cst_137 = arith.constant dense<0.000000e+00> : vector<8xf32>
    %274 = vector.multi_reduction <add>, %273, %cst_137 [1] : vector<8x8xf32> to vector<8xf32>
    %275 = vector.shape_cast %274 : vector<8xf32> to vector<8x1xf32>
    %276 = tpu.reciprocal %275 {approx = true} : vector<8x1xf32> -> vector<8x1xf32>
    %277 = vector.broadcast %276 : vector<8x1xf32> to vector<8x8xf32>
    %278 = arith.mulf %273, %277 : vector<8x8xf32>
    %279 = vector.extract_strided_slice %260 {offsets = [0, 0], sizes = [8, 16], strides = [1, 1]} : vector<8x32xf32> to vector<8x16xf32>
    %cst_138 = arith.constant dense<0.000000e+00> : vector<8x16xf32>
    %280 = tpu.matmul %278, %279, %cst_138 {dimension_numbers = #tpu.dot_dimension_numbers<[1], [0], [0], [1], [0, 0, 1, 1], [], []>} : vector<8x8xf32>, vector<8x16xf32>, vector<8x16xf32> -> vector<8x16xf32>
    %281 = vector.extract_strided_slice %258 {offsets = [0, 16], sizes = [8, 16], strides = [1, 1]} : vector<8x32xf32> to vector<8x16xf32>
    %282 = vector.extract_strided_slice %259 {offsets = [0, 16], sizes = [8, 16], strides = [1, 1]} : vector<8x32xf32> to vector<8x16xf32>
    %cst_139 = arith.constant dense<0.000000e+00> : vector<8x8xf32>
    %283 = tpu.matmul %281, %282, %cst_139 {dimension_numbers = #tpu.dot_dimension_numbers<[1], [1], [0], [0], [0, 0, 1, 0], [], []>} : vector<8x16xf32>, vector<8x16xf32>, vector<8x8xf32> -> vector<8x8xf32>
    %284 = arith.addf %283, %262 : vector<8x8xf32>
    %cst_140 = arith.constant dense<0xFF800000> : vector<8xf32>
    %285 = vector.multi_reduction <maximumf>, %284, %cst_140 [1] : vector<8x8xf32> to vector<8xf32>
    %286 = vector.shape_cast %285 : vector<8xf32> to vector<8x1xf32>
    %287 = vector.broadcast %286 : vector<8x1xf32> to vector<8x8xf32>
    %288 = arith.subf %284, %287 : vector<8x8xf32>
    %289 = math.exp %288 : vector<8x8xf32>
    %cst_141 = arith.constant dense<0.000000e+00> : vector<8xf32>
    %290 = vector.multi_reduction <add>, %289, %cst_141 [1] : vector<8x8xf32> to vector<8xf32>
    %291 = vector.shape_cast %290 : vector<8xf32> to vector<8x1xf32>
    %292 = tpu.reciprocal %291 {approx = true} : vector<8x1xf32> -> vector<8x1xf32>
    %293 = vector.broadcast %292 : vector<8x1xf32> to vector<8x8xf32>
    %294 = arith.mulf %289, %293 : vector<8x8xf32>
    %295 = vector.extract_strided_slice %260 {offsets = [0, 16], sizes = [8, 16], strides = [1, 1]} : vector<8x32xf32> to vector<8x16xf32>
    %cst_142 = arith.constant dense<0.000000e+00> : vector<8x16xf32>
    %296 = tpu.matmul %294, %295, %cst_142 {dimension_numbers = #tpu.dot_dimension_numbers<[1], [0], [0], [1], [0, 0, 1, 1], [], []>} : vector<8x8xf32>, vector<8x16xf32>, vector<8x16xf32> -> vector<8x16xf32>
    %297 = tpu.concatenate %280, %296 in 1 : vector<8x16xf32>, vector<8x16xf32> -> vector<8x32xf32>
    %298 = vector.broadcast %264 : vector<8x1xf32> to vector<8x32xf32>
    %299 = arith.mulf %297, %298 : vector<8x32xf32>
    %cst_143 = arith.constant 1.000000e+00 : f32
    %300 = vector.broadcast %cst_143 : f32 to vector<8x32xf32>
    %301 = arith.mulf %299, %300 : vector<8x32xf32>
    %c2_144 = arith.constant 2 : index
    %c0_145 = arith.constant 0 : index
    %c0_146 = arith.constant 0 : index
    %302 = vector.load %arg6[%c2_144, %c0_145, %c0_146] : memref<4x32x32xf32, #tpu.memory_space<vmem>>, vector<1x32x32xf32>
    %303 = vector.shape_cast %302 : vector<1x32x32xf32> to vector<32x32xf32>
    %cst_147 = arith.constant dense<0.000000e+00> : vector<8x32xf32>
    %304 = tpu.matmul %301, %303, %cst_147 {dimension_numbers = #tpu.dot_dimension_numbers<[1], [0], [0], [1], [0, 0, 1, 1], [], []>} : vector<8x32xf32>, vector<32x32xf32>, vector<8x32xf32> -> vector<8x32xf32>
    %c2_148 = arith.constant 2 : index
    %c0_149 = arith.constant 0 : index
    %c0_150 = arith.constant 0 : index
    %305 = vector.load %arg7[%c2_148, %c0_149, %c0_150] : memref<4x1x32xf32, #tpu.memory_space<vmem>>, vector<1x1x32xf32>
    %306 = vector.shape_cast %305 : vector<1x1x32xf32> to vector<1x32xf32>
    %307 = vector.broadcast %306 : vector<1x32xf32> to vector<8x32xf32>
    %308 = arith.addf %304, %307 : vector<8x32xf32>
    %c2_151 = arith.constant 2 : index
    %c0_152 = arith.constant 0 : index
    %309 = memref.load %arg14[%c2_151, %c0_152] : memref<4x1xf32, #tpu.memory_space<smem>>
    %310 = vector.broadcast %309 : f32 to vector<8x32xf32>
    %311 = arith.mulf %308, %310 : vector<8x32xf32>
    %cst_153 = arith.constant 1.000000e+00 : f32
    %312 = arith.subf %cst_153, %309 : f32
    %313 = vector.broadcast %312 : f32 to vector<8x32xf32>
    %314 = arith.mulf %159, %313 : vector<8x32xf32>
    %315 = arith.addf %311, %314 : vector<8x32xf32>
    %cst_154 = arith.constant dense<0.000000e+00> : vector<8xf32>
    %316 = vector.multi_reduction <add>, %315, %cst_154 [1] : vector<8x32xf32> to vector<8xf32>
    %317 = vector.shape_cast %316 : vector<8xf32> to vector<8x1xf32>
    %cst_155 = arith.constant 3.200000e+01 : f32
    %318 = vector.broadcast %cst_155 : f32 to vector<8x1xf32>
    %319 = arith.divf %317, %318 : vector<8x1xf32>
    %320 = vector.broadcast %319 : vector<8x1xf32> to vector<8x32xf32>
    %321 = arith.subf %315, %320 : vector<8x32xf32>
    %322 = arith.mulf %321, %321 : vector<8x32xf32>
    %cst_156 = arith.constant dense<0.000000e+00> : vector<8xf32>
    %323 = vector.multi_reduction <add>, %322, %cst_156 [1] : vector<8x32xf32> to vector<8xf32>
    %324 = vector.shape_cast %323 : vector<8xf32> to vector<8x1xf32>
    %cst_157 = arith.constant 3.200000e+01 : f32
    %325 = vector.broadcast %cst_157 : f32 to vector<8x1xf32>
    %326 = arith.divf %324, %325 : vector<8x1xf32>
    %327 = vector.broadcast %319 : vector<8x1xf32> to vector<8x32xf32>
    %328 = arith.subf %315, %327 : vector<8x32xf32>
    %cst_158 = arith.constant 9.99999974E-6 : f32
    %329 = vector.broadcast %cst_158 : f32 to vector<8x1xf32>
    %330 = arith.addf %326, %329 : vector<8x1xf32>
    %331 = math.rsqrt %330 : vector<8x1xf32>
    %332 = vector.broadcast %331 : vector<8x1xf32> to vector<8x32xf32>
    %333 = arith.mulf %328, %332 : vector<8x32xf32>
    %c2_159 = arith.constant 2 : index
    %c0_160 = arith.constant 0 : index
    %c0_161 = arith.constant 0 : index
    %334 = vector.load %arg8[%c2_159, %c0_160, %c0_161] : memref<4x1x32xf32, #tpu.memory_space<vmem>>, vector<1x1x32xf32>
    %335 = vector.shape_cast %334 : vector<1x1x32xf32> to vector<1x32xf32>
    %336 = vector.broadcast %335 : vector<1x32xf32> to vector<8x32xf32>
    %337 = arith.mulf %333, %336 : vector<8x32xf32>
    %c2_162 = arith.constant 2 : index
    %c0_163 = arith.constant 0 : index
    %c0_164 = arith.constant 0 : index
    %338 = vector.load %arg9[%c2_162, %c0_163, %c0_164] : memref<4x1x32xf32, #tpu.memory_space<vmem>>, vector<1x1x32xf32>
    %339 = vector.shape_cast %338 : vector<1x1x32xf32> to vector<1x32xf32>
    %340 = vector.broadcast %339 : vector<1x32xf32> to vector<8x32xf32>
    %341 = arith.addf %337, %340 : vector<8x32xf32>
    %cst_165 = arith.constant 1.000000e+00 : f32
    %342 = vector.broadcast %cst_165 : f32 to vector<8x32xf32>
    %343 = arith.mulf %257, %342 : vector<8x32xf32>
    %c3_166 = arith.constant 3 : index
    %c0_167 = arith.constant 0 : index
    %c0_168 = arith.constant 0 : index
    %344 = vector.load %arg6[%c3_166, %c0_167, %c0_168] : memref<4x32x32xf32, #tpu.memory_space<vmem>>, vector<1x32x32xf32>
    %345 = vector.shape_cast %344 : vector<1x32x32xf32> to vector<32x32xf32>
    %cst_169 = arith.constant dense<0.000000e+00> : vector<8x32xf32>
    %346 = tpu.matmul %343, %345, %cst_169 {dimension_numbers = #tpu.dot_dimension_numbers<[1], [0], [0], [1], [0, 0, 1, 1], [], []>} : vector<8x32xf32>, vector<32x32xf32>, vector<8x32xf32> -> vector<8x32xf32>
    %c3_170 = arith.constant 3 : index
    %c0_171 = arith.constant 0 : index
    %c0_172 = arith.constant 0 : index
    %347 = vector.load %arg7[%c3_170, %c0_171, %c0_172] : memref<4x1x32xf32, #tpu.memory_space<vmem>>, vector<1x1x32xf32>
    %348 = vector.shape_cast %347 : vector<1x1x32xf32> to vector<1x32xf32>
    %349 = vector.broadcast %348 : vector<1x32xf32> to vector<8x32xf32>
    %350 = arith.addf %346, %349 : vector<8x32xf32>
    %c3_173 = arith.constant 3 : index
    %c0_174 = arith.constant 0 : index
    %351 = memref.load %arg14[%c3_173, %c0_174] : memref<4x1xf32, #tpu.memory_space<smem>>
    %352 = vector.broadcast %351 : f32 to vector<8x32xf32>
    %353 = arith.mulf %350, %352 : vector<8x32xf32>
    %cst_175 = arith.constant 1.000000e+00 : f32
    %354 = arith.subf %cst_175, %351 : f32
    %355 = vector.broadcast %354 : f32 to vector<8x32xf32>
    %356 = arith.mulf %201, %355 : vector<8x32xf32>
    %357 = arith.addf %353, %356 : vector<8x32xf32>
    %cst_176 = arith.constant dense<0.000000e+00> : vector<8xf32>
    %358 = vector.multi_reduction <add>, %357, %cst_176 [1] : vector<8x32xf32> to vector<8xf32>
    %359 = vector.shape_cast %358 : vector<8xf32> to vector<8x1xf32>
    %cst_177 = arith.constant 3.200000e+01 : f32
    %360 = vector.broadcast %cst_177 : f32 to vector<8x1xf32>
    %361 = arith.divf %359, %360 : vector<8x1xf32>
    %362 = vector.broadcast %361 : vector<8x1xf32> to vector<8x32xf32>
    %363 = arith.subf %357, %362 : vector<8x32xf32>
    %364 = arith.mulf %363, %363 : vector<8x32xf32>
    %cst_178 = arith.constant dense<0.000000e+00> : vector<8xf32>
    %365 = vector.multi_reduction <add>, %364, %cst_178 [1] : vector<8x32xf32> to vector<8xf32>
    %366 = vector.shape_cast %365 : vector<8xf32> to vector<8x1xf32>
    %cst_179 = arith.constant 3.200000e+01 : f32
    %367 = vector.broadcast %cst_179 : f32 to vector<8x1xf32>
    %368 = arith.divf %366, %367 : vector<8x1xf32>
    %369 = vector.broadcast %361 : vector<8x1xf32> to vector<8x32xf32>
    %370 = arith.subf %357, %369 : vector<8x32xf32>
    %cst_180 = arith.constant 9.99999974E-6 : f32
    %371 = vector.broadcast %cst_180 : f32 to vector<8x1xf32>
    %372 = arith.addf %368, %371 : vector<8x1xf32>
    %373 = math.rsqrt %372 : vector<8x1xf32>
    %374 = vector.broadcast %373 : vector<8x1xf32> to vector<8x32xf32>
    %375 = arith.mulf %370, %374 : vector<8x32xf32>
    %c3_181 = arith.constant 3 : index
    %c0_182 = arith.constant 0 : index
    %c0_183 = arith.constant 0 : index
    %376 = vector.load %arg8[%c3_181, %c0_182, %c0_183] : memref<4x1x32xf32, #tpu.memory_space<vmem>>, vector<1x1x32xf32>
    %377 = vector.shape_cast %376 : vector<1x1x32xf32> to vector<1x32xf32>
    %378 = vector.broadcast %377 : vector<1x32xf32> to vector<8x32xf32>
    %379 = arith.mulf %375, %378 : vector<8x32xf32>
    %c3_184 = arith.constant 3 : index
    %c0_185 = arith.constant 0 : index
    %c0_186 = arith.constant 0 : index
    %380 = vector.load %arg9[%c3_184, %c0_185, %c0_186] : memref<4x1x32xf32, #tpu.memory_space<vmem>>, vector<1x1x32xf32>
    %381 = vector.shape_cast %380 : vector<1x1x32xf32> to vector<1x32xf32>
    %382 = vector.broadcast %381 : vector<1x32xf32> to vector<8x32xf32>
    %383 = arith.addf %379, %382 : vector<8x32xf32>
    %c0_187 = arith.constant 0 : index
    %c0_188 = arith.constant 0 : index
    %384 = vector.load %arg12[%c0_187, %c0_188] : memref<32x8xf32, #tpu.memory_space<vmem>>, vector<32x8xf32>
    %cst_189 = arith.constant dense<0.000000e+00> : vector<8x8xf32>
    %385 = tpu.matmul %341, %384, %cst_189 {dimension_numbers = #tpu.dot_dimension_numbers<[1], [0], [0], [1], [0, 0, 1, 1], [], []>} : vector<8x32xf32>, vector<32x8xf32>, vector<8x8xf32> -> vector<8x8xf32>
    %c0_190 = arith.constant 0 : index
    %c0_191 = arith.constant 0 : index
    %386 = vector.load %arg13[%c0_190, %c0_191] : memref<1x8xf32, #tpu.memory_space<vmem>>, vector<1x8xf32>
    %387 = vector.broadcast %386 : vector<1x8xf32> to vector<8x8xf32>
    %388 = arith.addf %385, %387 : vector<8x8xf32>
    %c0_192 = arith.constant 0 : index
    %c0_193 = arith.constant 0 : index
    %c0_194 = arith.constant 0 : index
    %389 = vector.load %arg15[%c0_192, %c0_193, %c0_194] : memref<2x8x8xf32, #tpu.memory_space<vmem>>, vector<1x8x8xf32>
    %390 = vector.shape_cast %389 : vector<1x8x8xf32> to vector<8x8xf32>
    %391 = vector.shape_cast %388 : vector<8x8xf32> to vector<1x8x8xf32>
    tpu.vector_store %arg15[%c0_192, %c0_193, %c0_194], %391 {strides = array<i32>} : memref<2x8x8xf32, #tpu.memory_space<vmem>>, vector<1x8x8xf32>,
    %c0_195 = arith.constant 0 : index
    %c0_196 = arith.constant 0 : index
    %392 = vector.load %arg12[%c0_195, %c0_196] : memref<32x8xf32, #tpu.memory_space<vmem>>, vector<32x8xf32>
    %cst_197 = arith.constant dense<0.000000e+00> : vector<8x8xf32>
    %393 = tpu.matmul %383, %392, %cst_197 {dimension_numbers = #tpu.dot_dimension_numbers<[1], [0], [0], [1], [0, 0, 1, 1], [], []>} : vector<8x32xf32>, vector<32x8xf32>, vector<8x8xf32> -> vector<8x8xf32>
    %c0_198 = arith.constant 0 : index
    %c0_199 = arith.constant 0 : index
    %394 = vector.load %arg13[%c0_198, %c0_199] : memref<1x8xf32, #tpu.memory_space<vmem>>, vector<1x8xf32>
    %395 = vector.broadcast %394 : vector<1x8xf32> to vector<8x8xf32>
    %396 = arith.addf %393, %395 : vector<8x8xf32>
    %c1_200 = arith.constant 1 : index
    %c0_201 = arith.constant 0 : index
    %c0_202 = arith.constant 0 : index
    %397 = vector.load %arg15[%c1_200, %c0_201, %c0_202] : memref<2x8x8xf32, #tpu.memory_space<vmem>>, vector<1x8x8xf32>
    %398 = vector.shape_cast %397 : vector<1x8x8xf32> to vector<8x8xf32>
    %399 = vector.shape_cast %396 : vector<8x8xf32> to vector<1x8x8xf32>
    tpu.vector_store %arg15[%c1_200, %c0_201, %c0_202], %399 {strides = array<i32>} : memref<2x8x8xf32, #tpu.memory_space<vmem>>, vector<1x8x8xf32>,
    return
  }
  func.func @transform_0(%arg0: i32) -> (i32, i32, i32) {
    %c0_i32 = arith.constant 0 : i32
    %c0_i32_0 = arith.constant 0 : i32
    %c0_i32_1 = arith.constant 0 : i32
    %c0_i32_2 = arith.constant 0 : i32
    return %c0_i32, %c0_i32_0, %c0_i32_1 : i32, i32, i32
  }
  func.func @transform_1(%arg0: i32) -> (i32, i32, i32) {
    %c0_i32 = arith.constant 0 : i32
    %c0_i32_0 = arith.constant 0 : i32
    %c0_i32_1 = arith.constant 0 : i32
    %c0_i32_2 = arith.constant 0 : i32
    return %c0_i32, %c0_i32_0, %c0_i32_1 : i32, i32, i32
  }
  func.func @transform_2(%arg0: i32) -> (i32, i32, i32) {
    %c0_i32 = arith.constant 0 : i32
    %c0_i32_0 = arith.constant 0 : i32
    %c0_i32_1 = arith.constant 0 : i32
    %c0_i32_2 = arith.constant 0 : i32
    return %c0_i32, %c0_i32_0, %c0_i32_1 : i32, i32, i32
  }
  func.func @transform_3(%arg0: i32) -> (i32, i32, i32) {
    %c0_i32 = arith.constant 0 : i32
    %c0_i32_0 = arith.constant 0 : i32
    %c0_i32_1 = arith.constant 0 : i32
    %c0_i32_2 = arith.constant 0 : i32
    return %c0_i32, %c0_i32_0, %c0_i32_1 : i32, i32, i32
  }
  func.func @transform_4(%arg0: i32) -> (i32, i32, i32) {
    %c0_i32 = arith.constant 0 : i32
    %c0_i32_0 = arith.constant 0 : i32
    %c0_i32_1 = arith.constant 0 : i32
    %c0_i32_2 = arith.constant 0 : i32
    return %c0_i32, %c0_i32_0, %c0_i32_1 : i32, i32, i32
  }
  func.func @transform_5(%arg0: i32) -> (i32, i32, i32) {
    %c0_i32 = arith.constant 0 : i32
    %c0_i32_0 = arith.constant 0 : i32
    %c0_i32_1 = arith.constant 0 : i32
    %c0_i32_2 = arith.constant 0 : i32
    return %c0_i32, %c0_i32_0, %c0_i32_1 : i32, i32, i32
  }
  func.func @transform_6(%arg0: i32) -> (i32, i32, i32) {
    %c0_i32 = arith.constant 0 : i32
    %c0_i32_0 = arith.constant 0 : i32
    %c0_i32_1 = arith.constant 0 : i32
    %c0_i32_2 = arith.constant 0 : i32
    return %c0_i32, %c0_i32_0, %c0_i32_1 : i32, i32, i32
  }
  func.func @transform_7(%arg0: i32) -> (i32, i32, i32) {
    %c0_i32 = arith.constant 0 : i32
    %c0_i32_0 = arith.constant 0 : i32
    %c0_i32_1 = arith.constant 0 : i32
    %c0_i32_2 = arith.constant 0 : i32
    return %c0_i32, %c0_i32_0, %c0_i32_1 : i32, i32, i32
  }
  func.func @transform_8(%arg0: i32) -> (i32, i32, i32) {
    %c0_i32 = arith.constant 0 : i32
    %c0_i32_0 = arith.constant 0 : i32
    %c0_i32_1 = arith.constant 0 : i32
    %c0_i32_2 = arith.constant 0 : i32
    return %c0_i32, %c0_i32_0, %c0_i32_1 : i32, i32, i32
  }
  func.func @transform_9(%arg0: i32) -> (i32, i32, i32) {
    %c0_i32 = arith.constant 0 : i32
    %c0_i32_0 = arith.constant 0 : i32
    %c0_i32_1 = arith.constant 0 : i32
    %c0_i32_2 = arith.constant 0 : i32
    return %c0_i32, %c0_i32_0, %c0_i32_1 : i32, i32, i32
  }
  func.func @transform_10(%arg0: i32) -> (i32, i32, i32) {
    %c0_i32 = arith.constant 0 : i32
    %c0_i32_0 = arith.constant 0 : i32
    %c0_i32_1 = arith.constant 0 : i32
    %c0_i32_2 = arith.constant 0 : i32
    return %c0_i32, %c0_i32_0, %c0_i32_1 : i32, i32, i32
  }
  func.func @transform_11(%arg0: i32) -> (i32, i32) {
    %c0_i32 = arith.constant 0 : i32
    %c0_i32_0 = arith.constant 0 : i32
    %c0_i32_1 = arith.constant 0 : i32
    return %c0_i32, %c0_i32_0 : i32, i32
  }
  func.func @transform_12(%arg0: i32) -> (i32, i32) {
    %c0_i32 = arith.constant 0 : i32
    %c0_i32_0 = arith.constant 0 : i32
    %c0_i32_1 = arith.constant 0 : i32
    return %c0_i32, %c0_i32_0 : i32, i32
  }
  func.func @transform_13(%arg0: i32) -> (i32, i32) {
    %c0_i32 = arith.constant 0 : i32
    %c0_i32_0 = arith.constant 0 : i32
    %c0_i32_1 = arith.constant 0 : i32
    return %c0_i32, %c0_i32_0 : i32, i32
  }
  func.func @transform_14(%arg0: i32) -> (i32, i32, i32) {
    %c0_i32 = arith.constant 0 : i32
    %c0_i32_0 = arith.constant 0 : i32
    %c0_i32_1 = arith.constant 0 : i32
    %c0_i32_2 = arith.constant 0 : i32
    return %c0_i32, %c0_i32_0, %c0_i32_1 : i32, i32, i32
  }
}

</mosaic_0001>

<llo_original>
// kernel: hgt_lp_forward.1
$region0: #{hgt_lp_forward.1}
  #allocation0 [shape = 'u32[]', space=smem, size = 0x4, offset = 0x4, fixed_abs, tag = 'smem constant byte address 0x4 - core index']
  #allocation1 [shape = 'u32[144,128]{1,0:T(1,128)}', space=vmem, size = 0x12000, scoped, tag = 'internal scratch']
  %s0 = inlined_call_operand.vmem [shape: f32[2,8,16], index: 0, kind: input, shape index: {}]
  %s1 = inlined_call_operand.vmem [shape: f32[2,16,32], index: 1, kind: input, shape index: {}]
  %s2 = inlined_call_operand.vmem [shape: f32[2,1,32], index: 2, kind: input, shape index: {}]
  %s3 = inlined_call_operand.hbm [shape: f32[4,32,128], index: 3, kind: input, shape index: {}]
  %s4 = inlined_call_operand.vmem [shape: f32[4,1,128], index: 4, kind: input, shape index: {}]
  %s5 = inlined_call_operand.hbm [shape: f32[4,32,32], index: 5, kind: input, shape index: {}]
  %s6 = inlined_call_operand.vmem [shape: f32[4,1,32], index: 6, kind: input, shape index: {}]
  %s7 = inlined_call_operand.hbm [shape: f32[4,1,32], index: 7, kind: input, shape index: {}]
  %s8 = inlined_call_operand.vmem [shape: f32[4,1,32], index: 8, kind: input, shape index: {}]
  %s9 = inlined_call_operand.vmem [shape: f32[2,8,8], index: 9, kind: input, shape index: {}]
  %s10 = inlined_call_operand.vmem [shape: f32[2,8,1], index: 10, kind: input, shape index: {}]
  %s11 = inlined_call_operand.vmem [shape: f32[32,8], index: 11, kind: input, shape index: {}]
  %s12 = inlined_call_operand.vmem [shape: f32[1,8], index: 12, kind: input, shape index: {}]
  %s13 = inlined_call_operand.vmem [shape: f32[4,1], index: 13, kind: input, shape index: {}]
  %s14 = inlined_call_operand.vmem [shape: f32[2,8,8], index: 14, kind: output, shape index: {}]
  %s15 = sld [smem:[#allocation0]]
  $region82: #{hgt_lp_forward.1} parent=0
    _
  %s17 = ssub.s32 1, %s15
  %s18 = scalar_select 0, %s17, %s15
  $region1: #{hgt_lp_forward.1} parent=0
    #allocation2 [shape = 'u8[65536]{0}', space=vmem, size = 0x10000, scoped, tag = 'input window, operand 3, single buffered']
    #allocation3 [shape = 's32[1]{0}', space=sflag, size = 0x4, scoped, tag = 'scoped memory for hgt_lp_forward.1']
    #allocation4 [shape = 's32[1]{0}', space=sflag, size = 0x4, scoped, tag = 'scoped memory for hgt_lp_forward.1']
    #allocation5 [shape = 'u8[65536]{0}', space=vmem, size = 0x10000, scoped, tag = 'input window, operand 5, single buffered']
    #allocation6 [shape = 's32[1]{0}', space=sflag, size = 0x4, scoped, tag = 'scoped memory for hgt_lp_forward.1']
    #allocation7 [shape = 'u8[2048]{0}', space=vmem, size = 0x800, scoped, tag = 'input window, operand 7, single buffered']
    #allocation8 [shape = 'u8[2048]{0}', space=smem, size = 0x800, scoped, tag = 'input window, operand 13, single buffered']
    %19 = vsyncpa [#allocation3], 0
    %20 = vsyncpa [#allocation6], 0
    %21 = vsyncpa [#allocation4], 0
    // Predicated region
    $region2: #{hgt_lp_forward.1} parent=1 // pred_check
      _
    $region3: #{hgt_lp_forward.1} parent=1 // pred_check_branch
      %23 = sbr.rel (0) target = $region5
    $region4: #{hgt_lp_forward.1} parent=1 // pred_region
      _
    $region5: #{hgt_lp_forward.1} parent=1 // pred_fallthru
      _
    // Predicated region
    $region6: #{hgt_lp_forward.1} parent=1 // pred_check
      _
    $region7: #{hgt_lp_forward.1} parent=1 // pred_check_branch
      %25 = sbr.rel (0) target = $region9
    $region8: #{hgt_lp_forward.1} parent=1 // pred_region
      _
    $region9: #{hgt_lp_forward.1} parent=1 // pred_fallthru
      _
    // Predicated region
    $region10: #{hgt_lp_forward.1} parent=1 // pred_check
      _
    $region11: #{hgt_lp_forward.1} parent=1 // pred_check_branch
      %27 = sbr.rel (0) target = $region13
    $region12: #{hgt_lp_forward.1} parent=1 // pred_region
      _
    $region13: #{hgt_lp_forward.1} parent=1 // pred_fallthru
      _
    // Predicated region
    $region14: #{hgt_lp_forward.1} parent=1 // pred_check
      _
    $region15: #{hgt_lp_forward.1} parent=1 // pred_check_branch
      %29 = sbr.rel (0) target = $region17
    $region16: #{hgt_lp_forward.1} parent=1 // pred_region
      %s31 = ssub.s32 2048, 2048
      %32 = vsyncadd [#allocation3], %s31
      %s33 = sshll.u32 [#allocation2], 4
      %s34 = int_to_ptr.vmem [resolvable:$true] %s33
      %39 = dma.hbm_to_vmem [thread:$0]  %s3, 2048, %s34, [#allocation3], 128, 128, 8
    $region17: #{hgt_lp_forward.1} parent=1 // pred_fallthru
      _
    // Predicated region
    $region18: #{hgt_lp_forward.1} parent=1 // pred_check
      _
    $region19: #{hgt_lp_forward.1} parent=1 // pred_check_branch
      %41 = sbr.rel (0) target = $region21
    $region20: #{hgt_lp_forward.1} parent=1 // pred_region
      _
    $region21: #{hgt_lp_forward.1} parent=1 // pred_fallthru
      _
    // Predicated region
    $region22: #{hgt_lp_forward.1} parent=1 // pred_check
      _
    $region23: #{hgt_lp_forward.1} parent=1 // pred_check_branch
      %43 = sbr.rel (0) target = $region25
    $region24: #{hgt_lp_forward.1} parent=1 // pred_region
      %s45 = ssub.s32 2048, 2048
      %46 = vsyncadd [#allocation6], %s45
      %s47 = sshll.u32 [#allocation5], 4
      %s48 = int_to_ptr.vmem [resolvable:$true] %s47
      %53 = dma.hbm_to_vmem [thread:$0]  %s5, 2048, %s48, [#allocation6], 128, 128, 8
    $region25: #{hgt_lp_forward.1} parent=1 // pred_fallthru
      _
    // Predicated region
    $region26: #{hgt_lp_forward.1} parent=1 // pred_check
      _
    $region27: #{hgt_lp_forward.1} parent=1 // pred_check_branch
      %55 = sbr.rel (0) target = $region29
    $region28: #{hgt_lp_forward.1} parent=1 // pred_region
      _
    $region29: #{hgt_lp_forward.1} parent=1 // pred_fallthru
      _
    // Predicated region
    $region30: #{hgt_lp_forward.1} parent=1 // pred_check
      _
    $region31: #{hgt_lp_forward.1} parent=1 // pred_check_branch
      %57 = sbr.rel (0) target = $region33
    $region32: #{hgt_lp_forward.1} parent=1 // pred_region
      %s59 = ssub.s32 64, 64
      %60 = vsyncadd [#allocation6], %s59
      %s61 = sshll.u32 [#allocation7], 4
      %s62 = int_to_ptr.vmem [resolvable:$true] %s61
      %67 = dma.hbm_to_vmem [thread:$0]  %s7, 64, %s62, [#allocation6], 16, 16, 1
    $region33: #{hgt_lp_forward.1} parent=1 // pred_fallthru
      _
    // Predicated region
    $region34: #{hgt_lp_forward.1} parent=1 // pred_check
      _
    $region35: #{hgt_lp_forward.1} parent=1 // pred_check_branch
      %69 = sbr.rel (0) target = $region37
    $region36: #{hgt_lp_forward.1} parent=1 // pred_region
      _
    $region37: #{hgt_lp_forward.1} parent=1 // pred_fallthru
      _
    // Predicated region
    $region38: #{hgt_lp_forward.1} parent=1 // pred_check
      _
    $region39: #{hgt_lp_forward.1} parent=1 // pred_check_branch
      %71 = sbr.rel (0) target = $region41
    $region40: #{hgt_lp_forward.1} parent=1 // pred_region
      _
    $region41: #{hgt_lp_forward.1} parent=1 // pred_fallthru
      _
    // Predicated region
    $region42: #{hgt_lp_forward.1} parent=1 // pred_check
      _
    $region43: #{hgt_lp_forward.1} parent=1 // pred_check_branch
      %73 = sbr.rel (0) target = $region45
    $region44: #{hgt_lp_forward.1} parent=1 // pred_region
      _
    $region45: #{hgt_lp_forward.1} parent=1 // pred_fallthru
      _
    // Predicated region
    $region46: #{hgt_lp_forward.1} parent=1 // pred_check
      _
    $region47: #{hgt_lp_forward.1} parent=1 // pred_check_branch
      %75 = sbr.rel (0) target = $region49
    $region48: #{hgt_lp_forward.1} parent=1 // pred_region
      _
    $region49: #{hgt_lp_forward.1} parent=1 // pred_fallthru
      _
    // Predicated region
    $region50: #{hgt_lp_forward.1} parent=1 // pred_check
      _
    $region51: #{hgt_lp_forward.1} parent=1 // pred_check_branch
      %77 = sbr.rel (0) target = $region53
    $region52: #{hgt_lp_forward.1} parent=1 // pred_region
      _
    $region53: #{hgt_lp_forward.1} parent=1 // pred_fallthru
      _
    // Predicated region
    $region54: #{hgt_lp_forward.1} parent=1 // pred_check
      _
    $region55: #{hgt_lp_forward.1} parent=1 // pred_check_branch
      %79 = sbr.rel (0) target = $region57
    $region56: #{hgt_lp_forward.1} parent=1 // pred_region
      %s81 = ssub.s32 64, 64
      %82 = vsyncadd [#allocation4], %s81
      %s84 = sshll.u32 %s13, 4
      %s85 = int_to_ptr.vmem [resolvable:$true] %s84
      %87 = dma.vmem_to_smem %s85, 64, [#allocation8], [#allocation4]
    $region57: #{hgt_lp_forward.1} parent=1 // pred_fallthru
      _
    // Predicated region
    $region58: #{hgt_lp_forward.1} parent=1 // pred_check
      _
    $region59: #{hgt_lp_forward.1} parent=1 // pred_check_branch
      %89 = sbr.rel (0) target = $region61
    $region60: #{hgt_lp_forward.1} parent=1 // pred_region
      %90 = dma.done [#allocation3], 2048
    $region61: #{hgt_lp_forward.1} parent=1 // pred_fallthru
      _
    // Predicated region
    $region62: #{hgt_lp_forward.1} parent=1 // pred_check
      _
    $region63: #{hgt_lp_forward.1} parent=1 // pred_check_branch
      %92 = sbr.rel (0) target = $region65
    $region64: #{hgt_lp_forward.1} parent=1 // pred_region
      %93 = dma.done [#allocation6], 2048
    $region65: #{hgt_lp_forward.1} parent=1 // pred_fallthru
      _
    // Predicated region
    $region66: #{hgt_lp_forward.1} parent=1 // pred_check
      _
    $region67: #{hgt_lp_forward.1} parent=1 // pred_check_branch
      %95 = sbr.rel (0) target = $region69
    $region68: #{hgt_lp_forward.1} parent=1 // pred_region
      %96 = dma.done [#allocation6], 64
    $region69: #{hgt_lp_forward.1} parent=1 // pred_fallthru
      _
    // Predicated region
    $region70: #{hgt_lp_forward.1} parent=1 // pred_check
      _
    $region71: #{hgt_lp_forward.1} parent=1 // pred_check_branch
      %98 = sbr.rel (0) target = $region73
    $region72: #{hgt_lp_forward.1} parent=1 // pred_region
      %99 = dma.done [#allocation4], 64
    $region73: #{hgt_lp_forward.1} parent=1 // pred_fallthru
      _
    %100 = sfence
    %v101 = vld [vmem:[%s0] sm:$0xff]
    %v102 = vld [vmem:[%s1] sm:$0xff]
    %v103 = vld [vmem:[%s1 + $0x8] sm:$0xff]
    %v104 = vld [vmem:[%s2] sm:$0x1]
    %v106 = vlaneseq
    %v107 = vshrl.u32 %v106, 7
    %v108 = vsub.s32 0, %v107
    %v109 = vrot.slane %v104, %v108
    %vm111 = vcmask 130048
    %v113 = vsel %vm111, %v101, 0
    %115 = vmatprep.subr.mxu0 0.0
    %116 = vmatpush1.msra.mxu0 %v102
    %117 = vmatprep.subr.mxu0 0.0
    %118 = vmatpush1.msra.mxu0 %v103
    %119 = vmatprep.subr.mxu0 0.0
    %120 = vmatpush1.msra.mxu0 0.0
    %121 = vmatprep.subr.mxu0 0.0
    %122 = vmatpush1.msra.mxu0 0.0
    %123 = vmatprep.subr.mxu0 0.0
    %124 = vmatpush1.msra.mxu0 0.0
    %125 = vmatprep.subr.mxu0 0.0
    %126 = vmatpush1.msra.mxu0 0.0
    %127 = vmatprep.subr.mxu0 0.0
    %128 = vmatpush1.msra.mxu0 0.0
    %129 = vmatprep.subr.mxu0 0.0
    %130 = vmatpush1.msra.mxu0 0.0
    %131 = vmatprep.subr.mxu0 0.0
    %132 = vmatpush1.msra.mxu0 0.0
    %133 = vmatprep.subr.mxu0 0.0
    %134 = vmatpush1.msra.mxu0 0.0
    %135 = vmatprep.subr.mxu0 0.0
    %136 = vmatpush1.msra.mxu0 0.0
    %137 = vmatprep.subr.mxu0 0.0
    %138 = vmatpush1.msra.mxu0 0.0
    %139 = vmatprep.subr.mxu0 0.0
    %140 = vmatpush1.msra.mxu0 0.0
    %141 = vmatprep.subr.mxu0 0.0
    %142 = vmatpush1.msra.mxu0 0.0
    %143 = vmatprep.subr.mxu0 0.0
    %144 = vmatpush1.msra.mxu0 0.0
    %145 = vmatprep.subr.mxu0 0.0
    %146 = vmatpush1.msra.mxu0 0.0
    %147 = vmatprep.subr.mxu0 0.0
    %148 = vmatpush1.msra.mxu0 0.0
    %149 = vmatprep.subr.mxu0 0.0
    %150 = vmatpush1.msra.mxu0 0.0
    %151 = vmatprep.subr.mxu0 0.0
    %152 = vmatpush1.msra.mxu0 0.0
    %153 = vmatprep.subr.mxu0 0.0
    %154 = vmatpush1.msra.mxu0 0.0
    %155 = vmatprep.subr.mxu0 0.0
    %156 = vmatpush1.msra.mxu0 0.0
    %157 = vmatprep.subr.mxu0 0.0
    %158 = vmatpush1.msra.mxu0 0.0
    %159 = vmatprep.subr.mxu0 0.0
    %160 = vmatpush1.msra.mxu0 0.0
    %161 = vmatprep.subr.mxu0 0.0
    %162 = vmatpush1.msra.mxu0 0.0
    %163 = vmatprep.subr.mxu0 0.0
    %164 = vmatpush1.msra.mxu0 0.0
    %165 = vmatprep.subr.mxu0 0.0
    %166 = vmatpush1.msra.mxu0 0.0
    %167 = vmatprep.subr.mxu0 0.0
    %168 = vmatpush1.msra.mxu0 0.0
    %169 = vmatprep.subr.mxu0 0.0
    %170 = vmatpush1.msra.mxu0 0.0
    %171 = vmatprep.subr.mxu0 0.0
    %172 = vmatpush1.msra.mxu0 0.0
    %173 = vmatprep.subr.mxu0 0.0
    %174 = vmatpush1.msra.mxu0 0.0
    %175 = vmatprep.subr.mxu0 0.0
    %176 = vmatpush1.msra.mxu0 0.0
    %177 = vmatprep.subr.mxu0 0.0
    %178 = vmatpush1.msra.mxu0 0.0
    %179 = vmatprep.mubr.f32.mxu0 0.0
    %180 = vmatmul.mubr.f32.gmra.mrb[0].mxu0 %v113
    %v181 = vpop.f32.mrb[0].mxu0
    %v182 = vadd.f32 %v109, %v181
    %v183 = vpop.f32.mrb[0].mxu0
    %184 = vdwg.mxu0
    %v185 = vtanh.pop %v182
    %s186 = scalar_lea.vmem %s0, 8
    %v187 = vld [vmem:[%s186] sm:$0xff]
    %s188 = scalar_lea.vmem %s1, 16
    %v189 = vld [vmem:[%s188] sm:$0xff]
    %v190 = vld [vmem:[%s188 + $0x8] sm:$0xff]
    %s191 = scalar_lea.vmem %s2, 1
    %v192 = vld [vmem:[%s191] sm:$0x1]
    %v194 = vlaneseq
    %v195 = vshrl.u32 %v194, 7
    %v196 = vsub.s32 0, %v195
    %v197 = vrot.slane %v192, %v196
    %v200 = vsel %vm111, %v187, 0
    %202 = vmatprep.subr.mxu0 0.0
    %203 = vmatpush1.msra.mxu0 %v189
    %204 = vmatprep.subr.mxu0 0.0
    %205 = vmatpush1.msra.mxu0 %v190
    %206 = vmatprep.subr.mxu0 0.0
    %207 = vmatpush1.msra.mxu0 0.0
    %208 = vmatprep.subr.mxu0 0.0
    %209 = vmatpush1.msra.mxu0 0.0
    %210 = vmatprep.subr.mxu0 0.0
    %211 = vmatpush1.msra.mxu0 0.0
    %212 = vmatprep.subr.mxu0 0.0
    %213 = vmatpush1.msra.mxu0 0.0
    %214 = vmatprep.subr.mxu0 0.0
    %215 = vmatpush1.msra.mxu0 0.0
    %216 = vmatprep.subr.mxu0 0.0
    %217 = vmatpush1.msra.mxu0 0.0
    %218 = vmatprep.subr.mxu0 0.0
    %219 = vmatpush1.msra.mxu0 0.0
    %220 = vmatprep.subr.mxu0 0.0
    %221 = vmatpush1.msra.mxu0 0.0
    %222 = vmatprep.subr.mxu0 0.0
    %223 = vmatpush1.msra.mxu0 0.0
    %224 = vmatprep.subr.mxu0 0.0
    %225 = vmatpush1.msra.mxu0 0.0
    %226 = vmatprep.subr.mxu0 0.0
    %227 = vmatpush1.msra.mxu0 0.0
    %228 = vmatprep.subr.mxu0 0.0
    %229 = vmatpush1.msra.mxu0 0.0
    %230 = vmatprep.subr.mxu0 0.0
    %231 = vmatpush1.msra.mxu0 0.0
    %232 = vmatprep.subr.mxu0 0.0
    %233 = vmatpush1.msra.mxu0 0.0
    %234 = vmatprep.subr.mxu0 0.0
    %235 = vmatpush1.msra.mxu0 0.0
    %236 = vmatprep.subr.mxu0 0.0
    %237 = vmatpush1.msra.mxu0 0.0
    %238 = vmatprep.subr.mxu0 0.0
    %239 = vmatpush1.msra.mxu0 0.0
    %240 = vmatprep.subr.mxu0 0.0
    %241 = vmatpush1.msra.mxu0 0.0
    %242 = vmatprep.subr.mxu0 0.0
    %243 = vmatpush1.msra.mxu0 0.0
    %244 = vmatprep.subr.mxu0 0.0
    %245 = vmatpush1.msra.mxu0 0.0
    %246 = vmatprep.subr.mxu0 0.0
    %247 = vmatpush1.msra.mxu0 0.0
    %248 = vmatprep.subr.mxu0 0.0
    %249 = vmatpush1.msra.mxu0 0.0
    %250 = vmatprep.subr.mxu0 0.0
    %251 = vmatpush1.msra.mxu0 0.0
    %252 = vmatprep.subr.mxu0 0.0
    %253 = vmatpush1.msra.mxu0 0.0
    %254 = vmatprep.subr.mxu0 0.0
    %255 = vmatpush1.msra.mxu0 0.0
    %256 = vmatprep.subr.mxu0 0.0
    %257 = vmatpush1.msra.mxu0 0.0
    %258 = vmatprep.subr.mxu0 0.0
    %259 = vmatpush1.msra.mxu0 0.0
    %260 = vmatprep.subr.mxu0 0.0
    %261 = vmatpush1.msra.mxu0 0.0
    %262 = vmatprep.subr.mxu0 0.0
    %263 = vmatpush1.msra.mxu0 0.0
    %264 = vmatprep.subr.mxu0 0.0
    %265 = vmatpush1.msra.mxu0 0.0
    %266 = vmatprep.mubr.f32.mxu0 0.0
    %267 = vmatmul.mubr.f32.gmra.mrb[0].mxu0 %v200
    %v268 = vpop.f32.mrb[0].mxu0
    %v269 = vadd.f32 %v197, %v268
    %v270 = vpop.f32.mrb[0].mxu0
    %271 = vdwg.mxu0
    %v272 = vtanh.pop %v269
    %v273 = vld [vmem:[#allocation2] sm:$0xff]
    %v274 = vld [vmem:[#allocation2 + $0x8] sm:$0xff]
    %v275 = vld [vmem:[#allocation2 + $0x10] sm:$0xff]
    %v276 = vld [vmem:[#allocation2 + $0x18] sm:$0xff]
    %v277 = vld [vmem:[%s4] sm:$0x1]
    %v279 = vlaneseq
    %v280 = vshrl.u32 %v279, 7
    %v281 = vsub.s32 0, %v280
    %v282 = vrot.slane %v277, %v281
    %vm284 = vcmask 261120
    %v286 = vsel %vm284, %v185, 0
    %288 = vmatprep.subr.mxu0 0.0
    %289 = vmatpush1.msra.mxu0 %v273
    %290 = vmatprep.subr.mxu0 0.0
    %291 = vmatpush1.msra.mxu0 %v274
    %292 = vmatprep.subr.mxu0 0.0
    %293 = vmatpush1.msra.mxu0 %v275
    %294 = vmatprep.subr.mxu0 0.0
    %295 = vmatpush1.msra.mxu0 %v276
    %296 = vmatprep.subr.mxu0 0.0
    %297 = vmatpush1.msra.mxu0 0.0
    %298 = vmatprep.subr.mxu0 0.0
    %299 = vmatpush1.msra.mxu0 0.0
    %300 = vmatprep.subr.mxu0 0.0
    %301 = vmatpush1.msra.mxu0 0.0
    %302 = vmatprep.subr.mxu0 0.0
    %303 = vmatpush1.msra.mxu0 0.0
    %304 = vmatprep.subr.mxu0 0.0
    %305 = vmatpush1.msra.mxu0 0.0
    %306 = vmatprep.subr.mxu0 0.0
    %307 = vmatpush1.msra.mxu0 0.0
    %308 = vmatprep.subr.mxu0 0.0
    %309 = vmatpush1.msra.mxu0 0.0
    %310 = vmatprep.subr.mxu0 0.0
    %311 = vmatpush1.msra.mxu0 0.0
    %312 = vmatprep.subr.mxu0 0.0
    %313 = vmatpush1.msra.mxu0 0.0
    %314 = vmatprep.subr.mxu0 0.0
    %315 = vmatpush1.msra.mxu0 0.0
    %316 = vmatprep.subr.mxu0 0.0
    %317 = vmatpush1.msra.mxu0 0.0
    %318 = vmatprep.subr.mxu0 0.0
    %319 = vmatpush1.msra.mxu0 0.0
    %320 = vmatprep.subr.mxu0 0.0
    %321 = vmatpush1.msra.mxu0 0.0
    %322 = vmatprep.subr.mxu0 0.0
    %323 = vmatpush1.msra.mxu0 0.0
    %324 = vmatprep.subr.mxu0 0.0
    %325 = vmatpush1.msra.mxu0 0.0
    %326 = vmatprep.subr.mxu0 0.0
    %327 = vmatpush1.msra.mxu0 0.0
    %328 = vmatprep.subr.mxu0 0.0
    %329 = vmatpush1.msra.mxu0 0.0
    %330 = vmatprep.subr.mxu0 0.0
    %331 = vmatpush1.msra.mxu0 0.0
    %332 = vmatprep.subr.mxu0 0.0
    %333 = vmatpush1.msra.mxu0 0.0
    %334 = vmatprep.subr.mxu0 0.0
    %335 = vmatpush1.msra.mxu0 0.0
    %336 = vmatprep.subr.mxu0 0.0
    %337 = vmatpush1.msra.mxu0 0.0
    %338 = vmatprep.subr.mxu0 0.0
    %339 = vmatpush1.msra.mxu0 0.0
    %340 = vmatprep.subr.mxu0 0.0
    %341 = vmatpush1.msra.mxu0 0.0
    %342 = vmatprep.subr.mxu0 0.0
    %343 = vmatpush1.msra.mxu0 0.0
    %344 = vmatprep.subr.mxu0 0.0
    %345 = vmatpush1.msra.mxu0 0.0
    %346 = vmatprep.subr.mxu0 0.0
    %347 = vmatpush1.msra.mxu0 0.0
    %348 = vmatprep.subr.mxu0 0.0
    %349 = vmatpush1.msra.mxu0 0.0
    %350 = vmatprep.subr.mxu0 0.0
    %351 = vmatpush1.msra.mxu0 0.0
    %352 = vmatprep.mubr.f32.mxu0 0.0
    %353 = vmatmul.mubr.f32.gmra.mrb[0].mxu0 %v286
    %v354 = vpop.f32.mrb[0].mxu0
    %v355 = vadd.f32 %v282, %v354
    %v356 = vpop.f32.mrb[0].mxu0
    %357 = vdwg.mxu0
    %s358 = scalar_lea.vmem [#allocation2], 32
    %v359 = vld [vmem:[%s358] sm:$0xff]
    %v360 = vld [vmem:[%s358 + $0x8] sm:$0xff]
    %v361 = vld [vmem:[%s358 + $0x10] sm:$0xff]
    %v362 = vld [vmem:[%s358 + $0x18] sm:$0xff]
    %s363 = scalar_lea.vmem %s4, 1
    %v364 = vld [vmem:[%s363] sm:$0x1]
    %v366 = vlaneseq
    %v367 = vshrl.u32 %v366, 7
    %v368 = vsub.s32 0, %v367
    %v369 = vrot.slane %v364, %v368
    %v372 = vsel %vm284, %v272, 0
    %374 = vmatprep.subr.mxu0 0.0
    %375 = vmatpush1.msra.mxu0 %v359
    %376 = vmatprep.subr.mxu0 0.0
    %377 = vmatpush1.msra.mxu0 %v360
    %378 = vmatprep.subr.mxu0 0.0
    %379 = vmatpush1.msra.mxu0 %v361
    %380 = vmatprep.subr.mxu0 0.0
    %381 = vmatpush1.msra.mxu0 %v362
    %382 = vmatprep.subr.mxu0 0.0
    %383 = vmatpush1.msra.mxu0 0.0
    %384 = vmatprep.subr.mxu0 0.0
    %385 = vmatpush1.msra.mxu0 0.0
    %386 = vmatprep.subr.mxu0 0.0
    %387 = vmatpush1.msra.mxu0 0.0
    %388 = vmatprep.subr.mxu0 0.0
    %389 = vmatpush1.msra.mxu0 0.0
    %390 = vmatprep.subr.mxu0 0.0
    %391 = vmatpush1.msra.mxu0 0.0
    %392 = vmatprep.subr.mxu0 0.0
    %393 = vmatpush1.msra.mxu0 0.0
    %394 = vmatprep.subr.mxu0 0.0
    %395 = vmatpush1.msra.mxu0 0.0
    %396 = vmatprep.subr.mxu0 0.0
    %397 = vmatpush1.msra.mxu0 0.0
    %398 = vmatprep.subr.mxu0 0.0
    %399 = vmatpush1.msra.mxu0 0.0
    %400 = vmatprep.subr.mxu0 0.0
    %401 = vmatpush1.msra.mxu0 0.0
    %402 = vmatprep.subr.mxu0 0.0
    %403 = vmatpush1.msra.mxu0 0.0
    %404 = vmatprep.subr.mxu0 0.0
    %405 = vmatpush1.msra.mxu0 0.0
    %406 = vmatprep.subr.mxu0 0.0
    %407 = vmatpush1.msra.mxu0 0.0
    %408 = vmatprep.subr.mxu0 0.0
    %409 = vmatpush1.msra.mxu0 0.0
    %410 = vmatprep.subr.mxu0 0.0
    %411 = vmatpush1.msra.mxu0 0.0
    %412 = vmatprep.subr.mxu0 0.0
    %413 = vmatpush1.msra.mxu0 0.0
    %414 = vmatprep.subr.mxu0 0.0
    %415 = vmatpush1.msra.mxu0 0.0
    %416 = vmatprep.subr.mxu0 0.0
    %417 = vmatpush1.msra.mxu0 0.0
    %418 = vmatprep.subr.mxu0 0.0
    %419 = vmatpush1.msra.mxu0 0.0
    %420 = vmatprep.subr.mxu0 0.0
    %421 = vmatpush1.msra.mxu0 0.0
    %422 = vmatprep.subr.mxu0 0.0
    %423 = vmatpush1.msra.mxu0 0.0
    %424 = vmatprep.subr.mxu0 0.0
    %425 = vmatpush1.msra.mxu0 0.0
    %426 = vmatprep.subr.mxu0 0.0
    %427 = vmatpush1.msra.mxu0 0.0
    %428 = vmatprep.subr.mxu0 0.0
    %429 = vmatpush1.msra.mxu0 0.0
    %430 = vmatprep.subr.mxu0 0.0
    %431 = vmatpush1.msra.mxu0 0.0
    %432 = vmatprep.subr.mxu0 0.0
    %433 = vmatpush1.msra.mxu0 0.0
    %434 = vmatprep.subr.mxu0 0.0
    %435 = vmatpush1.msra.mxu0 0.0
    %436 = vmatprep.subr.mxu0 0.0
    %437 = vmatpush1.msra.mxu0 0.0
    %438 = vmatprep.mubr.f32.mxu0 0.0
    %439 = vmatmul.mubr.f32.gmra.mrb[0].mxu0 %v372
    %v440 = vpop.f32.mrb[0].mxu0
    %v441 = vadd.f32 %v369, %v440
    %v442 = vpop.f32.mrb[0].mxu0
    %443 = vdwg.mxu0
    %v444 = vld [vmem:[%s9] sm:$0xff]
    %v445 = vld [vmem:[%s10] sm:$0xff]
    %447 = vrot.lane.b32.xlu0 %v355, 96
    %v448 = vpop.permute.xlu0 %447
    %v450 = vsel %vm111, %v441, 0
    %v452 = vsel %vm111, %v448, 0
    %454 = vmatprep.subr.mxu0 0.0
    %455 = vmatpush1.xpose.msra.mxu0 %v452
    %456 = vmatprep.subr.mxu0 0.0
    %457 = vmatpush1.xpose.msra.mxu0 0.0
    %458 = vmatprep.subr.mxu0 0.0
    %459 = vmatpush1.xpose.msra.mxu0 0.0
    %460 = vmatprep.subr.mxu0 0.0
    %461 = vmatpush1.xpose.msra.mxu0 0.0
    %462 = vmatprep.subr.mxu0 0.0
    %463 = vmatpush1.xpose.msra.mxu0 0.0
    %464 = vmatprep.subr.mxu0 0.0
    %465 = vmatpush1.xpose.msra.mxu0 0.0
    %466 = vmatprep.subr.mxu0 0.0
    %467 = vmatpush1.xpose.msra.mxu0 0.0
    %468 = vmatprep.subr.mxu0 0.0
    %469 = vmatpush1.xpose.msra.mxu0 0.0
    %470 = vmatprep.subr.mxu0 0.0
    %471 = vmatpush1.xpose.msra.mxu0 0.0
    %472 = vmatprep.subr.mxu0 0.0
    %473 = vmatpush1.xpose.msra.mxu0 0.0
    %474 = vmatprep.subr.mxu0 0.0
    %475 = vmatpush1.xpose.msra.mxu0 0.0
    %476 = vmatprep.subr.mxu0 0.0
    %477 = vmatpush1.xpose.msra.mxu0 0.0
    %478 = vmatprep.subr.mxu0 0.0
    %479 = vmatpush1.xpose.msra.mxu0 0.0
    %480 = vmatprep.subr.mxu0 0.0
    %481 = vmatpush1.xpose.msra.mxu0 0.0
    %482 = vmatprep.subr.mxu0 0.0
    %483 = vmatpush1.xpose.msra.mxu0 0.0
    %484 = vmatprep.subr.mxu0 0.0
    %485 = vmatpush1.xpose.msra.mxu0 0.0
    %486 = vmatprep.subr.mxu0 0.0
    %487 = vmatpush1.xpose.msra.mxu0 0.0
    %488 = vmatprep.subr.mxu0 0.0
    %489 = vmatpush1.xpose.msra.mxu0 0.0
    %490 = vmatprep.subr.mxu0 0.0
    %491 = vmatpush1.xpose.msra.mxu0 0.0
    %492 = vmatprep.subr.mxu0 0.0
    %493 = vmatpush1.xpose.msra.mxu0 0.0
    %494 = vmatprep.subr.mxu0 0.0
    %495 = vmatpush1.xpose.msra.mxu0 0.0
    %496 = vmatprep.subr.mxu0 0.0
    %497 = vmatpush1.xpose.msra.mxu0 0.0
    %498 = vmatprep.subr.mxu0 0.0
    %499 = vmatpush1.xpose.msra.mxu0 0.0
    %500 = vmatprep.subr.mxu0 0.0
    %501 = vmatpush1.xpose.msra.mxu0 0.0
    %502 = vmatprep.subr.mxu0 0.0
    %503 = vmatpush1.xpose.msra.mxu0 0.0
    %504 = vmatprep.subr.mxu0 0.0
    %505 = vmatpush1.xpose.msra.mxu0 0.0
    %506 = vmatprep.subr.mxu0 0.0
    %507 = vmatpush1.xpose.msra.mxu0 0.0
    %508 = vmatprep.subr.mxu0 0.0
    %509 = vmatpush1.xpose.msra.mxu0 0.0
    %510 = vmatprep.subr.mxu0 0.0
    %511 = vmatpush1.xpose.msra.mxu0 0.0
    %512 = vmatprep.subr.mxu0 0.0
    %513 = vmatpush1.xpose.msra.mxu0 0.0
    %514 = vmatprep.subr.mxu0 0.0
    %515 = vmatpush1.xpose.msra.mxu0 0.0
    %516 = vmatprep.subr.mxu0 0.0
    %517 = vmatpush1.xpose.msra.mxu0 0.0
    %518 = vmatprep.mubr.f32.mxu0 0.0
    %519 = vmatmul.mubr.f32.gmra.mrb[0].mxu0 %v450
    %v520 = vpop.f32.mrb[0].mxu0
    %v521 = vadd.f32 %v444, %v520
    %v522 = vpop.f32.mrb[0].mxu0
    %523 = vdwg.mxu0
    %vm524 = vcmask 64512
    %v525 = vsel %vm524, %v521, -inf
    %526 = vmax.xlane.f32.xlu0 %v525
    %v527 = vpop.xlane.xlu0 %526
    %v528 = vsub.f32 %v521, %v527
    %v529 = vmul.f32 %v528, 1.442695
    %v530 = vpow.pop %v529
    %v531 = vsel %vm524, %v530, 0.0
    %532 = vadd.xlane.f32.xlu0 %v531
    %v533 = vpop.xlane.xlu0 %532
    %v534 = vrcp.pop %v533
    %v535 = vmul.f32 %v530, %v534
    %536 = vrot.lane.b32.xlu0 %v355, 64
    %v537 = vpop.permute.xlu0 %536
    %v540 = vsel %vm524, %v535, 0
    %542 = vmatprep.subr.mxu0 0.0
    %543 = vmatpush1.msra.mxu0 %v537
    %544 = vmatprep.subr.mxu0 0.0
    %545 = vmatpush1.msra.mxu0 0.0
    %546 = vmatprep.subr.mxu0 0.0
    %547 = vmatpush1.msra.mxu0 0.0
    %548 = vmatprep.subr.mxu0 0.0
    %549 = vmatpush1.msra.mxu0 0.0
    %550 = vmatprep.subr.mxu0 0.0
    %551 = vmatpush1.msra.mxu0 0.0
    %552 = vmatprep.subr.mxu0 0.0
    %553 = vmatpush1.msra.mxu0 0.0
    %554 = vmatprep.subr.mxu0 0.0
    %555 = vmatpush1.msra.mxu0 0.0
    %556 = vmatprep.subr.mxu0 0.0
    %557 = vmatpush1.msra.mxu0 0.0
    %558 = vmatprep.subr.mxu0 0.0
    %559 = vmatpush1.msra.mxu0 0.0
    %560 = vmatprep.subr.mxu0 0.0
    %561 = vmatpush1.msra.mxu0 0.0
    %562 = vmatprep.subr.mxu0 0.0
    %563 = vmatpush1.msra.mxu0 0.0
    %564 = vmatprep.subr.mxu0 0.0
    %565 = vmatpush1.msra.mxu0 0.0
    %566 = vmatprep.subr.mxu0 0.0
    %567 = vmatpush1.msra.mxu0 0.0
    %568 = vmatprep.subr.mxu0 0.0
    %569 = vmatpush1.msra.mxu0 0.0
    %570 = vmatprep.subr.mxu0 0.0
    %571 = vmatpush1.msra.mxu0 0.0
    %572 = vmatprep.subr.mxu0 0.0
    %573 = vmatpush1.msra.mxu0 0.0
    %574 = vmatprep.subr.mxu0 0.0
    %575 = vmatpush1.msra.mxu0 0.0
    %576 = vmatprep.subr.mxu0 0.0
    %577 = vmatpush1.msra.mxu0 0.0
    %578 = vmatprep.subr.mxu0 0.0
    %579 = vmatpush1.msra.mxu0 0.0
    %580 = vmatprep.subr.mxu0 0.0
    %581 = vmatpush1.msra.mxu0 0.0
    %582 = vmatprep.subr.mxu0 0.0
    %583 = vmatpush1.msra.mxu0 0.0
    %584 = vmatprep.subr.mxu0 0.0
    %585 = vmatpush1.msra.mxu0 0.0
    %586 = vmatprep.subr.mxu0 0.0
    %587 = vmatpush1.msra.mxu0 0.0
    %588 = vmatprep.subr.mxu0 0.0
    %589 = vmatpush1.msra.mxu0 0.0
    %590 = vmatprep.subr.mxu0 0.0
    %591 = vmatpush1.msra.mxu0 0.0
    %592 = vmatprep.subr.mxu0 0.0
    %593 = vmatpush1.msra.mxu0 0.0
    %594 = vmatprep.subr.mxu0 0.0
    %595 = vmatpush1.msra.mxu0 0.0
    %596 = vmatprep.subr.mxu0 0.0
    %597 = vmatpush1.msra.mxu0 0.0
    %598 = vmatprep.subr.mxu0 0.0
    %599 = vmatpush1.msra.mxu0 0.0
    %600 = vmatprep.subr.mxu0 0.0
    %601 = vmatpush1.msra.mxu0 0.0
    %602 = vmatprep.subr.mxu0 0.0
    %603 = vmatpush1.msra.mxu0 0.0
    %604 = vmatprep.subr.mxu0 0.0
    %605 = vmatpush1.msra.mxu0 0.0
    %606 = vmatprep.mubr.f32.mxu0 0.0
    %607 = vmatmul.mubr.f32.gmra.mrb[0].mxu0 %v540
    %v608 = vpop.f32.mrb[0].mxu0
    %v609 = vadd.f32 0.0, %v608
    %v610 = vpop.f32.mrb[0].mxu0
    %611 = vdwg.mxu0
    %612 = vrot.lane.b32.xlu0 %v441, 112
    %v613 = vpop.permute.xlu0 %612
    %614 = vrot.lane.b32.xlu0 %v355, 80
    %v615 = vpop.permute.xlu0 %614
    %v616 = vsel %vm111, %v613, 0
    %v618 = vsel %vm111, %v615, 0
    %620 = vmatprep.subr.mxu0 0.0
    %621 = vmatpush1.xpose.msra.mxu0 %v618
    %622 = vmatprep.subr.mxu0 0.0
    %623 = vmatpush1.xpose.msra.mxu0 0.0
    %624 = vmatprep.subr.mxu0 0.0
    %625 = vmatpush1.xpose.msra.mxu0 0.0
    %626 = vmatprep.subr.mxu0 0.0
    %627 = vmatpush1.xpose.msra.mxu0 0.0
    %628 = vmatprep.subr.mxu0 0.0
    %629 = vmatpush1.xpose.msra.mxu0 0.0
    %630 = vmatprep.subr.mxu0 0.0
    %631 = vmatpush1.xpose.msra.mxu0 0.0
    %632 = vmatprep.subr.mxu0 0.0
    %633 = vmatpush1.xpose.msra.mxu0 0.0
    %634 = vmatprep.subr.mxu0 0.0
    %635 = vmatpush1.xpose.msra.mxu0 0.0
    %636 = vmatprep.subr.mxu0 0.0
    %637 = vmatpush1.xpose.msra.mxu0 0.0
    %638 = vmatprep.subr.mxu0 0.0
    %639 = vmatpush1.xpose.msra.mxu0 0.0
    %640 = vmatprep.subr.mxu0 0.0
    %641 = vmatpush1.xpose.msra.mxu0 0.0
    %642 = vmatprep.subr.mxu0 0.0
    %643 = vmatpush1.xpose.msra.mxu0 0.0
    %644 = vmatprep.subr.mxu0 0.0
    %645 = vmatpush1.xpose.msra.mxu0 0.0
    %646 = vmatprep.subr.mxu0 0.0
    %647 = vmatpush1.xpose.msra.mxu0 0.0
    %648 = vmatprep.subr.mxu0 0.0
    %649 = vmatpush1.xpose.msra.mxu0 0.0
    %650 = vmatprep.subr.mxu0 0.0
    %651 = vmatpush1.xpose.msra.mxu0 0.0
    %652 = vmatprep.subr.mxu0 0.0
    %653 = vmatpush1.xpose.msra.mxu0 0.0
    %654 = vmatprep.subr.mxu0 0.0
    %655 = vmatpush1.xpose.msra.mxu0 0.0
    %656 = vmatprep.subr.mxu0 0.0
    %657 = vmatpush1.xpose.msra.mxu0 0.0
    %658 = vmatprep.subr.mxu0 0.0
    %659 = vmatpush1.xpose.msra.mxu0 0.0
    %660 = vmatprep.subr.mxu0 0.0
    %661 = vmatpush1.xpose.msra.mxu0 0.0
    %662 = vmatprep.subr.mxu0 0.0
    %663 = vmatpush1.xpose.msra.mxu0 0.0
    %664 = vmatprep.subr.mxu0 0.0
    %665 = vmatpush1.xpose.msra.mxu0 0.0
    %666 = vmatprep.subr.mxu0 0.0
    %667 = vmatpush1.xpose.msra.mxu0 0.0
    %668 = vmatprep.subr.mxu0 0.0
    %669 = vmatpush1.xpose.msra.mxu0 0.0
    %670 = vmatprep.subr.mxu0 0.0
    %671 = vmatpush1.xpose.msra.mxu0 0.0
    %672 = vmatprep.subr.mxu0 0.0
    %673 = vmatpush1.xpose.msra.mxu0 0.0
    %674 = vmatprep.subr.mxu0 0.0
    %675 = vmatpush1.xpose.msra.mxu0 0.0
    %676 = vmatprep.subr.mxu0 0.0
    %677 = vmatpush1.xpose.msra.mxu0 0.0
    %678 = vmatprep.subr.mxu0 0.0
    %679 = vmatpush1.xpose.msra.mxu0 0.0
    %680 = vmatprep.subr.mxu0 0.0
    %681 = vmatpush1.xpose.msra.mxu0 0.0
    %682 = vmatprep.subr.mxu0 0.0
    %683 = vmatpush1.xpose.msra.mxu0 0.0
    %684 = vmatprep.mubr.f32.mxu0 0.0
    %685 = vmatmul.mubr.f32.gmra.mrb[0].mxu0 %v616
    %v686 = vpop.f32.mrb[0].mxu0
    %v687 = vadd.f32 %v444, %v686
    %v688 = vpop.f32.mrb[0].mxu0
    %689 = vdwg.mxu0
    %v690 = vsel %vm524, %v687, -inf
    %691 = vmax.xlane.f32.xlu0 %v690
    %v692 = vpop.xlane.xlu0 %691
    %v693 = vsub.f32 %v687, %v692
    %v694 = vmul.f32 %v693, 1.442695
    %v695 = vpow.pop %v694
    %v696 = vsel %vm524, %v695, 0.0
    %697 = vadd.xlane.f32.xlu0 %v696
    %v698 = vpop.xlane.xlu0 %697
    %v699 = vrcp.pop %v698
    %v700 = vmul.f32 %v695, %v699
    %701 = vrot.lane.b32.xlu0 %v355, 48
    %v702 = vpop.permute.xlu0 %701
    %v705 = vsel %vm524, %v700, 0
    %707 = vmatprep.subr.mxu0 0.0
    %708 = vmatpush1.msra.mxu0 %v702
    %709 = vmatprep.subr.mxu0 0.0
    %710 = vmatpush1.msra.mxu0 0.0
    %711 = vmatprep.subr.mxu0 0.0
    %712 = vmatpush1.msra.mxu0 0.0
    %713 = vmatprep.subr.mxu0 0.0
    %714 = vmatpush1.msra.mxu0 0.0
    %715 = vmatprep.subr.mxu0 0.0
    %716 = vmatpush1.msra.mxu0 0.0
    %717 = vmatprep.subr.mxu0 0.0
    %718 = vmatpush1.msra.mxu0 0.0
    %719 = vmatprep.subr.mxu0 0.0
    %720 = vmatpush1.msra.mxu0 0.0
    %721 = vmatprep.subr.mxu0 0.0
    %722 = vmatpush1.msra.mxu0 0.0
    %723 = vmatprep.subr.mxu0 0.0
    %724 = vmatpush1.msra.mxu0 0.0
    %725 = vmatprep.subr.mxu0 0.0
    %726 = vmatpush1.msra.mxu0 0.0
    %727 = vmatprep.subr.mxu0 0.0
    %728 = vmatpush1.msra.mxu0 0.0
    %729 = vmatprep.subr.mxu0 0.0
    %730 = vmatpush1.msra.mxu0 0.0
    %731 = vmatprep.subr.mxu0 0.0
    %732 = vmatpush1.msra.mxu0 0.0
    %733 = vmatprep.subr.mxu0 0.0
    %734 = vmatpush1.msra.mxu0 0.0
    %735 = vmatprep.subr.mxu0 0.0
    %736 = vmatpush1.msra.mxu0 0.0
    %737 = vmatprep.subr.mxu0 0.0
    %738 = vmatpush1.msra.mxu0 0.0
    %739 = vmatprep.subr.mxu0 0.0
    %740 = vmatpush1.msra.mxu0 0.0
    %741 = vmatprep.subr.mxu0 0.0
    %742 = vmatpush1.msra.mxu0 0.0
    %743 = vmatprep.subr.mxu0 0.0
    %744 = vmatpush1.msra.mxu0 0.0
    %745 = vmatprep.subr.mxu0 0.0
    %746 = vmatpush1.msra.mxu0 0.0
    %747 = vmatprep.subr.mxu0 0.0
    %748 = vmatpush1.msra.mxu0 0.0
    %749 = vmatprep.subr.mxu0 0.0
    %750 = vmatpush1.msra.mxu0 0.0
    %751 = vmatprep.subr.mxu0 0.0
    %752 = vmatpush1.msra.mxu0 0.0
    %753 = vmatprep.subr.mxu0 0.0
    %754 = vmatpush1.msra.mxu0 0.0
    %755 = vmatprep.subr.mxu0 0.0
    %756 = vmatpush1.msra.mxu0 0.0
    %757 = vmatprep.subr.mxu0 0.0
    %758 = vmatpush1.msra.mxu0 0.0
    %759 = vmatprep.subr.mxu0 0.0
    %760 = vmatpush1.msra.mxu0 0.0
    %761 = vmatprep.subr.mxu0 0.0
    %762 = vmatpush1.msra.mxu0 0.0
    %763 = vmatprep.subr.mxu0 0.0
    %764 = vmatpush1.msra.mxu0 0.0
    %765 = vmatprep.subr.mxu0 0.0
    %766 = vmatpush1.msra.mxu0 0.0
    %767 = vmatprep.subr.mxu0 0.0
    %768 = vmatpush1.msra.mxu0 0.0
    %769 = vmatprep.subr.mxu0 0.0
    %770 = vmatpush1.msra.mxu0 0.0
    %771 = vmatprep.mubr.f32.mxu0 0.0
    %772 = vmatmul.mubr.f32.gmra.mrb[0].mxu0 %v705
    %v773 = vpop.f32.mrb[0].mxu0
    %v774 = vadd.f32 0.0, %v773
    %v775 = vpop.f32.mrb[0].mxu0
    %776 = vdwg.mxu0
    %778 = vrot.lane.b32.xlu0 %v774, 16
    %v779 = vpop.permute.xlu0 %778
    %v781 = vsel %vm111, %v609, %v779
    %783 = vset.pattern.permute.xlu0 0
    %784 = vperm.xlu0 %783, %v445
    %v785 = vpop.permute.xlu0 %784
    %v787 = vmul.f32 %v781, %v785
    %s788 = scalar_lea.vmem %s9, 8
    %v789 = vld [vmem:[%s788] sm:$0xff]
    %s790 = scalar_lea.vmem %s10, 8
    %v791 = vld [vmem:[%s790] sm:$0xff]
    %792 = vrot.lane.b32.xlu0 %v441, 96
    %v793 = vpop.permute.xlu0 %792
    %v794 = vsel %vm111, %v355, 0
    %v796 = vsel %vm111, %v793, 0
    %798 = vmatprep.subr.mxu0 0.0
    %799 = vmatpush1.xpose.msra.mxu0 %v796
    %800 = vmatprep.subr.mxu0 0.0
    %801 = vmatpush1.xpose.msra.mxu0 0.0
    %802 = vmatprep.subr.mxu0 0.0
    %803 = vmatpush1.xpose.msra.mxu0 0.0
    %804 = vmatprep.subr.mxu0 0.0
    %805 = vmatpush1.xpose.msra.mxu0 0.0
    %806 = vmatprep.subr.mxu0 0.0
    %807 = vmatpush1.xpose.msra.mxu0 0.0
    %808 = vmatprep.subr.mxu0 0.0
    %809 = vmatpush1.xpose.msra.mxu0 0.0
    %810 = vmatprep.subr.mxu0 0.0
    %811 = vmatpush1.xpose.msra.mxu0 0.0
    %812 = vmatprep.subr.mxu0 0.0
    %813 = vmatpush1.xpose.msra.mxu0 0.0
    %814 = vmatprep.subr.mxu0 0.0
    %815 = vmatpush1.xpose.msra.mxu0 0.0
    %816 = vmatprep.subr.mxu0 0.0
    %817 = vmatpush1.xpose.msra.mxu0 0.0
    %818 = vmatprep.subr.mxu0 0.0
    %819 = vmatpush1.xpose.msra.mxu0 0.0
    %820 = vmatprep.subr.mxu0 0.0
    %821 = vmatpush1.xpose.msra.mxu0 0.0
    %822 = vmatprep.subr.mxu0 0.0
    %823 = vmatpush1.xpose.msra.mxu0 0.0
    %824 = vmatprep.subr.mxu0 0.0
    %825 = vmatpush1.xpose.msra.mxu0 0.0
    %826 = vmatprep.subr.mxu0 0.0
    %827 = vmatpush1.xpose.msra.mxu0 0.0
    %828 = vmatprep.subr.mxu0 0.0
    %829 = vmatpush1.xpose.msra.mxu0 0.0
    %830 = vmatprep.subr.mxu0 0.0
    %831 = vmatpush1.xpose.msra.mxu0 0.0
    %832 = vmatprep.subr.mxu0 0.0
    %833 = vmatpush1.xpose.msra.mxu0 0.0
    %834 = vmatprep.subr.mxu0 0.0
    %835 = vmatpush1.xpose.msra.mxu0 0.0
    %836 = vmatprep.subr.mxu0 0.0
    %837 = vmatpush1.xpose.msra.mxu0 0.0
    %838 = vmatprep.subr.mxu0 0.0
    %839 = vmatpush1.xpose.msra.mxu0 0.0
    %840 = vmatprep.subr.mxu0 0.0
    %841 = vmatpush1.xpose.msra.mxu0 0.0
    %842 = vmatprep.subr.mxu0 0.0
    %843 = vmatpush1.xpose.msra.mxu0 0.0
    %844 = vmatprep.subr.mxu0 0.0
    %845 = vmatpush1.xpose.msra.mxu0 0.0
    %846 = vmatprep.subr.mxu0 0.0
    %847 = vmatpush1.xpose.msra.mxu0 0.0
    %848 = vmatprep.subr.mxu0 0.0
    %849 = vmatpush1.xpose.msra.mxu0 0.0
    %850 = vmatprep.subr.mxu0 0.0
    %851 = vmatpush1.xpose.msra.mxu0 0.0
    %852 = vmatprep.subr.mxu0 0.0
    %853 = vmatpush1.xpose.msra.mxu0 0.0
    %854 = vmatprep.subr.mxu0 0.0
    %855 = vmatpush1.xpose.msra.mxu0 0.0
    %856 = vmatprep.subr.mxu0 0.0
    %857 = vmatpush1.xpose.msra.mxu0 0.0
    %858 = vmatprep.subr.mxu0 0.0
    %859 = vmatpush1.xpose.msra.mxu0 0.0
    %860 = vmatprep.subr.mxu0 0.0
    %861 = vmatpush1.xpose.msra.mxu0 0.0
    %862 = vmatprep.mubr.f32.mxu0 0.0
    %863 = vmatmul.mubr.f32.gmra.mrb[0].mxu0 %v794
    %v864 = vpop.f32.mrb[0].mxu0
    %v865 = vadd.f32 %v789, %v864
    %v866 = vpop.f32.mrb[0].mxu0
    %867 = vdwg.mxu0
    %v868 = vsel %vm524, %v865, -inf
    %869 = vmax.xlane.f32.xlu0 %v868
    %v870 = vpop.xlane.xlu0 %869
    %v871 = vsub.f32 %v865, %v870
    %v872 = vmul.f32 %v871, 1.442695
    %v873 = vpow.pop %v872
    %v874 = vsel %vm524, %v873, 0.0
    %875 = vadd.xlane.f32.xlu0 %v874
    %v876 = vpop.xlane.xlu0 %875
    %v877 = vrcp.pop %v876
    %v878 = vmul.f32 %v873, %v877
    %879 = vrot.lane.b32.xlu0 %v441, 64
    %v880 = vpop.permute.xlu0 %879
    %v883 = vsel %vm524, %v878, 0
    %885 = vmatprep.subr.mxu0 0.0
    %886 = vmatpush1.msra.mxu0 %v880
    %887 = vmatprep.subr.mxu0 0.0
    %888 = vmatpush1.msra.mxu0 0.0
    %889 = vmatprep.subr.mxu0 0.0
    %890 = vmatpush1.msra.mxu0 0.0
    %891 = vmatprep.subr.mxu0 0.0
    %892 = vmatpush1.msra.mxu0 0.0
    %893 = vmatprep.subr.mxu0 0.0
    %894 = vmatpush1.msra.mxu0 0.0
    %895 = vmatprep.subr.mxu0 0.0
    %896 = vmatpush1.msra.mxu0 0.0
    %897 = vmatprep.subr.mxu0 0.0
    %898 = vmatpush1.msra.mxu0 0.0
    %899 = vmatprep.subr.mxu0 0.0
    %900 = vmatpush1.msra.mxu0 0.0
    %901 = vmatprep.subr.mxu0 0.0
    %902 = vmatpush1.msra.mxu0 0.0
    %903 = vmatprep.subr.mxu0 0.0
    %904 = vmatpush1.msra.mxu0 0.0
    %905 = vmatprep.subr.mxu0 0.0
    %906 = vmatpush1.msra.mxu0 0.0
    %907 = vmatprep.subr.mxu0 0.0
    %908 = vmatpush1.msra.mxu0 0.0
    %909 = vmatprep.subr.mxu0 0.0
    %910 = vmatpush1.msra.mxu0 0.0
    %911 = vmatprep.subr.mxu0 0.0
    %912 = vmatpush1.msra.mxu0 0.0
    %913 = vmatprep.subr.mxu0 0.0
    %914 = vmatpush1.msra.mxu0 0.0
    %915 = vmatprep.subr.mxu0 0.0
    %916 = vmatpush1.msra.mxu0 0.0
    %917 = vmatprep.subr.mxu0 0.0
    %918 = vmatpush1.msra.mxu0 0.0
    %919 = vmatprep.subr.mxu0 0.0
    %920 = vmatpush1.msra.mxu0 0.0
    %921 = vmatprep.subr.mxu0 0.0
    %922 = vmatpush1.msra.mxu0 0.0
    %923 = vmatprep.subr.mxu0 0.0
    %924 = vmatpush1.msra.mxu0 0.0
    %925 = vmatprep.subr.mxu0 0.0
    %926 = vmatpush1.msra.mxu0 0.0
    %927 = vmatprep.subr.mxu0 0.0
    %928 = vmatpush1.msra.mxu0 0.0
    %929 = vmatprep.subr.mxu0 0.0
    %930 = vmatpush1.msra.mxu0 0.0
    %931 = vmatprep.subr.mxu0 0.0
    %932 = vmatpush1.msra.mxu0 0.0
    %933 = vmatprep.subr.mxu0 0.0
    %934 = vmatpush1.msra.mxu0 0.0
    %935 = vmatprep.subr.mxu0 0.0
    %936 = vmatpush1.msra.mxu0 0.0
    %937 = vmatprep.subr.mxu0 0.0
    %938 = vmatpush1.msra.mxu0 0.0
    %939 = vmatprep.subr.mxu0 0.0
    %940 = vmatpush1.msra.mxu0 0.0
    %941 = vmatprep.subr.mxu0 0.0
    %942 = vmatpush1.msra.mxu0 0.0
    %943 = vmatprep.subr.mxu0 0.0
    %944 = vmatpush1.msra.mxu0 0.0
    %945 = vmatprep.subr.mxu0 0.0
    %946 = vmatpush1.msra.mxu0 0.0
    %947 = vmatprep.subr.mxu0 0.0
    %948 = vmatpush1.msra.mxu0 0.0
    %949 = vmatprep.mubr.f32.mxu0 0.0
    %950 = vmatmul.mubr.f32.gmra.mrb[0].mxu0 %v883
    %v951 = vpop.f32.mrb[0].mxu0
    %v952 = vadd.f32 0.0, %v951
    %v953 = vpop.f32.mrb[0].mxu0
    %954 = vdwg.mxu0
    %955 = vrot.lane.b32.xlu0 %v355, 112
    %v956 = vpop.permute.xlu0 %955
    %957 = vrot.lane.b32.xlu0 %v441, 80
    %v958 = vpop.permute.xlu0 %957
    %v959 = vsel %vm111, %v956, 0
    %v961 = vsel %vm111, %v958, 0
    %963 = vmatprep.subr.mxu0 0.0
    %964 = vmatpush1.xpose.msra.mxu0 %v961
    %965 = vmatprep.subr.mxu0 0.0
    %966 = vmatpush1.xpose.msra.mxu0 0.0
    %967 = vmatprep.subr.mxu0 0.0
    %968 = vmatpush1.xpose.msra.mxu0 0.0
    %969 = vmatprep.subr.mxu0 0.0
    %970 = vmatpush1.xpose.msra.mxu0 0.0
    %971 = vmatprep.subr.mxu0 0.0
    %972 = vmatpush1.xpose.msra.mxu0 0.0
    %973 = vmatprep.subr.mxu0 0.0
    %974 = vmatpush1.xpose.msra.mxu0 0.0
    %975 = vmatprep.subr.mxu0 0.0
    %976 = vmatpush1.xpose.msra.mxu0 0.0
    %977 = vmatprep.subr.mxu0 0.0
    %978 = vmatpush1.xpose.msra.mxu0 0.0
    %979 = vmatprep.subr.mxu0 0.0
    %980 = vmatpush1.xpose.msra.mxu0 0.0
    %981 = vmatprep.subr.mxu0 0.0
    %982 = vmatpush1.xpose.msra.mxu0 0.0
    %983 = vmatprep.subr.mxu0 0.0
    %984 = vmatpush1.xpose.msra.mxu0 0.0
    %985 = vmatprep.subr.mxu0 0.0
    %986 = vmatpush1.xpose.msra.mxu0 0.0
    %987 = vmatprep.subr.mxu0 0.0
    %988 = vmatpush1.xpose.msra.mxu0 0.0
    %989 = vmatprep.subr.mxu0 0.0
    %990 = vmatpush1.xpose.msra.mxu0 0.0
    %991 = vmatprep.subr.mxu0 0.0
    %992 = vmatpush1.xpose.msra.mxu0 0.0
    %993 = vmatprep.subr.mxu0 0.0
    %994 = vmatpush1.xpose.msra.mxu0 0.0
    %995 = vmatprep.subr.mxu0 0.0
    %996 = vmatpush1.xpose.msra.mxu0 0.0
    %997 = vmatprep.subr.mxu0 0.0
    %998 = vmatpush1.xpose.msra.mxu0 0.0
    %999 = vmatprep.subr.mxu0 0.0
    %1000 = vmatpush1.xpose.msra.mxu0 0.0
    %1001 = vmatprep.subr.mxu0 0.0
    %1002 = vmatpush1.xpose.msra.mxu0 0.0
    %1003 = vmatprep.subr.mxu0 0.0
    %1004 = vmatpush1.xpose.msra.mxu0 0.0
    %1005 = vmatprep.subr.mxu0 0.0
    %1006 = vmatpush1.xpose.msra.mxu0 0.0
    %1007 = vmatprep.subr.mxu0 0.0
    %1008 = vmatpush1.xpose.msra.mxu0 0.0
    %1009 = vmatprep.subr.mxu0 0.0
    %1010 = vmatpush1.xpose.msra.mxu0 0.0
    %1011 = vmatprep.subr.mxu0 0.0
    %1012 = vmatpush1.xpose.msra.mxu0 0.0
    %1013 = vmatprep.subr.mxu0 0.0
    %1014 = vmatpush1.xpose.msra.mxu0 0.0
    %1015 = vmatprep.subr.mxu0 0.0
    %1016 = vmatpush1.xpose.msra.mxu0 0.0
    %1017 = vmatprep.subr.mxu0 0.0
    %1018 = vmatpush1.xpose.msra.mxu0 0.0
    %1019 = vmatprep.subr.mxu0 0.0
    %1020 = vmatpush1.xpose.msra.mxu0 0.0
    %1021 = vmatprep.subr.mxu0 0.0
    %1022 = vmatpush1.xpose.msra.mxu0 0.0
    %1023 = vmatprep.subr.mxu0 0.0
    %1024 = vmatpush1.xpose.msra.mxu0 0.0
    %1025 = vmatprep.subr.mxu0 0.0
    %1026 = vmatpush1.xpose.msra.mxu0 0.0
    %1027 = vmatprep.mubr.f32.mxu0 0.0
    %1028 = vmatmul.mubr.f32.gmra.mrb[0].mxu0 %v959
    %v1029 = vpop.f32.mrb[0].mxu0
    %v1030 = vadd.f32 %v789, %v1029
    %v1031 = vpop.f32.mrb[0].mxu0
    %1032 = vdwg.mxu0
    %v1033 = vsel %vm524, %v1030, -inf
    %1034 = vmax.xlane.f32.xlu0 %v1033
    %v1035 = vpop.xlane.xlu0 %1034
    %v1036 = vsub.f32 %v1030, %v1035
    %v1037 = vmul.f32 %v1036, 1.442695
    %v1038 = vpow.pop %v1037
    %v1039 = vsel %vm524, %v1038, 0.0
    %1040 = vadd.xlane.f32.xlu0 %v1039
    %v1041 = vpop.xlane.xlu0 %1040
    %v1042 = vrcp.pop %v1041
    %v1043 = vmul.f32 %v1038, %v1042
    %1044 = vrot.lane.b32.xlu0 %v441, 48
    %v1045 = vpop.permute.xlu0 %1044
    %v1048 = vsel %vm524, %v1043, 0
    %1050 = vmatprep.subr.mxu0 0.0
    %1051 = vmatpush1.msra.mxu0 %v1045
    %1052 = vmatprep.subr.mxu0 0.0
    %1053 = vmatpush1.msra.mxu0 0.0
    %1054 = vmatprep.subr.mxu0 0.0
    %1055 = vmatpush1.msra.mxu0 0.0
    %1056 = vmatprep.subr.mxu0 0.0
    %1057 = vmatpush1.msra.mxu0 0.0
    %1058 = vmatprep.subr.mxu0 0.0
    %1059 = vmatpush1.msra.mxu0 0.0
    %1060 = vmatprep.subr.mxu0 0.0
    %1061 = vmatpush1.msra.mxu0 0.0
    %1062 = vmatprep.subr.mxu0 0.0
    %1063 = vmatpush1.msra.mxu0 0.0
    %1064 = vmatprep.subr.mxu0 0.0
    %1065 = vmatpush1.msra.mxu0 0.0
    %1066 = vmatprep.subr.mxu0 0.0
    %1067 = vmatpush1.msra.mxu0 0.0
    %1068 = vmatprep.subr.mxu0 0.0
    %1069 = vmatpush1.msra.mxu0 0.0
    %1070 = vmatprep.subr.mxu0 0.0
    %1071 = vmatpush1.msra.mxu0 0.0
    %1072 = vmatprep.subr.mxu0 0.0
    %1073 = vmatpush1.msra.mxu0 0.0
    %1074 = vmatprep.subr.mxu0 0.0
    %1075 = vmatpush1.msra.mxu0 0.0
    %1076 = vmatprep.subr.mxu0 0.0
    %1077 = vmatpush1.msra.mxu0 0.0
    %1078 = vmatprep.subr.mxu0 0.0
    %1079 = vmatpush1.msra.mxu0 0.0
    %1080 = vmatprep.subr.mxu0 0.0
    %1081 = vmatpush1.msra.mxu0 0.0
    %1082 = vmatprep.subr.mxu0 0.0
    %1083 = vmatpush1.msra.mxu0 0.0
    %1084 = vmatprep.subr.mxu0 0.0
    %1085 = vmatpush1.msra.mxu0 0.0
    %1086 = vmatprep.subr.mxu0 0.0
    %1087 = vmatpush1.msra.mxu0 0.0
    %1088 = vmatprep.subr.mxu0 0.0
    %1089 = vmatpush1.msra.mxu0 0.0
    %1090 = vmatprep.subr.mxu0 0.0
    %1091 = vmatpush1.msra.mxu0 0.0
    %1092 = vmatprep.subr.mxu0 0.0
    %1093 = vmatpush1.msra.mxu0 0.0
    %1094 = vmatprep.subr.mxu0 0.0
    %1095 = vmatpush1.msra.mxu0 0.0
    %1096 = vmatprep.subr.mxu0 0.0
    %1097 = vmatpush1.msra.mxu0 0.0
    %1098 = vmatprep.subr.mxu0 0.0
    %1099 = vmatpush1.msra.mxu0 0.0
    %1100 = vmatprep.subr.mxu0 0.0
    %1101 = vmatpush1.msra.mxu0 0.0
    %1102 = vmatprep.subr.mxu0 0.0
    %1103 = vmatpush1.msra.mxu0 0.0
    %1104 = vmatprep.subr.mxu0 0.0
    %1105 = vmatpush1.msra.mxu0 0.0
    %1106 = vmatprep.subr.mxu0 0.0
    %1107 = vmatpush1.msra.mxu0 0.0
    %1108 = vmatprep.subr.mxu0 0.0
    %1109 = vmatpush1.msra.mxu0 0.0
    %1110 = vmatprep.subr.mxu0 0.0
    %1111 = vmatpush1.msra.mxu0 0.0
    %1112 = vmatprep.subr.mxu0 0.0
    %1113 = vmatpush1.msra.mxu0 0.0
    %1114 = vmatprep.mubr.f32.mxu0 0.0
    %1115 = vmatmul.mubr.f32.gmra.mrb[0].mxu0 %v1048
    %v1116 = vpop.f32.mrb[0].mxu0
    %v1117 = vadd.f32 0.0, %v1116
    %v1118 = vpop.f32.mrb[0].mxu0
    %1119 = vdwg.mxu0
    %1121 = vrot.lane.b32.xlu0 %v1117, 16
    %v1122 = vpop.permute.xlu0 %1121
    %v1124 = vsel %vm111, %v952, %v1122
    %1126 = vset.pattern.permute.xlu0 0
    %1127 = vperm.xlu0 %1126, %v791
    %v1128 = vpop.permute.xlu0 %1127
    %v1130 = vmul.f32 %v1124, %v1128
    %v1131 = vld [vmem:[#allocation5] sm:$0xff]
    %v1132 = vld [vmem:[#allocation5 + $0x8] sm:$0xff]
    %v1133 = vld [vmem:[#allocation5 + $0x10] sm:$0xff]
    %v1134 = vld [vmem:[#allocation5 + $0x18] sm:$0xff]
    %v1135 = vld [vmem:[%s6] sm:$0x1]
    %v1137 = vlaneseq
    %v1138 = vshrl.u32 %v1137, 7
    %v1139 = vsub.s32 0, %v1138
    %v1140 = vrot.slane %v1135, %v1139
    %v1143 = vsel %vm284, %v1130, 0
    %1145 = vmatprep.subr.mxu0 0.0
    %1146 = vmatpush1.msra.mxu0 %v1131
    %1147 = vmatprep.subr.mxu0 0.0
    %1148 = vmatpush1.msra.mxu0 %v1132
    %1149 = vmatprep.subr.mxu0 0.0
    %1150 = vmatpush1.msra.mxu0 %v1133
    %1151 = vmatprep.subr.mxu0 0.0
    %1152 = vmatpush1.msra.mxu0 %v1134
    %1153 = vmatprep.subr.mxu0 0.0
    %1154 = vmatpush1.msra.mxu0 0.0
    %1155 = vmatprep.subr.mxu0 0.0
    %1156 = vmatpush1.msra.mxu0 0.0
    %1157 = vmatprep.subr.mxu0 0.0
    %1158 = vmatpush1.msra.mxu0 0.0
    %1159 = vmatprep.subr.mxu0 0.0
    %1160 = vmatpush1.msra.mxu0 0.0
    %1161 = vmatprep.subr.mxu0 0.0
    %1162 = vmatpush1.msra.mxu0 0.0
    %1163 = vmatprep.subr.mxu0 0.0
    %1164 = vmatpush1.msra.mxu0 0.0
    %1165 = vmatprep.subr.mxu0 0.0
    %1166 = vmatpush1.msra.mxu0 0.0
    %1167 = vmatprep.subr.mxu0 0.0
    %1168 = vmatpush1.msra.mxu0 0.0
    %1169 = vmatprep.subr.mxu0 0.0
    %1170 = vmatpush1.msra.mxu0 0.0
    %1171 = vmatprep.subr.mxu0 0.0
    %1172 = vmatpush1.msra.mxu0 0.0
    %1173 = vmatprep.subr.mxu0 0.0
    %1174 = vmatpush1.msra.mxu0 0.0
    %1175 = vmatprep.subr.mxu0 0.0
    %1176 = vmatpush1.msra.mxu0 0.0
    %1177 = vmatprep.subr.mxu0 0.0
    %1178 = vmatpush1.msra.mxu0 0.0
    %1179 = vmatprep.subr.mxu0 0.0
    %1180 = vmatpush1.msra.mxu0 0.0
    %1181 = vmatprep.subr.mxu0 0.0
    %1182 = vmatpush1.msra.mxu0 0.0
    %1183 = vmatprep.subr.mxu0 0.0
    %1184 = vmatpush1.msra.mxu0 0.0
    %1185 = vmatprep.subr.mxu0 0.0
    %1186 = vmatpush1.msra.mxu0 0.0
    %1187 = vmatprep.subr.mxu0 0.0
    %1188 = vmatpush1.msra.mxu0 0.0
    %1189 = vmatprep.subr.mxu0 0.0
    %1190 = vmatpush1.msra.mxu0 0.0
    %1191 = vmatprep.subr.mxu0 0.0
    %1192 = vmatpush1.msra.mxu0 0.0
    %1193 = vmatprep.subr.mxu0 0.0
    %1194 = vmatpush1.msra.mxu0 0.0
    %1195 = vmatprep.subr.mxu0 0.0
    %1196 = vmatpush1.msra.mxu0 0.0
    %1197 = vmatprep.subr.mxu0 0.0
    %1198 = vmatpush1.msra.mxu0 0.0
    %1199 = vmatprep.subr.mxu0 0.0
    %1200 = vmatpush1.msra.mxu0 0.0
    %1201 = vmatprep.subr.mxu0 0.0
    %1202 = vmatpush1.msra.mxu0 0.0
    %1203 = vmatprep.subr.mxu0 0.0
    %1204 = vmatpush1.msra.mxu0 0.0
    %1205 = vmatprep.subr.mxu0 0.0
    %1206 = vmatpush1.msra.mxu0 0.0
    %1207 = vmatprep.subr.mxu0 0.0
    %1208 = vmatpush1.msra.mxu0 0.0
    %1209 = vmatprep.mubr.f32.mxu0 0.0
    %1210 = vmatmul.mubr.f32.gmra.mrb[0].mxu0 %v1143
    %v1211 = vpop.f32.mrb[0].mxu0
    %v1212 = vadd.f32 %v1140, %v1211
    %v1213 = vpop.f32.mrb[0].mxu0
    %1214 = vdwg.mxu0
    %s1215 = sld [smem:[#allocation8]]
    %v1216 = vstv %s1215
    %v1217 = vmul.f32 %v1212, %v1216
    %s1218 = ssub.f32 1.0, %s1215
    %v1219 = vstv %s1218
    %v1220 = vmul.f32 %v185, %v1219
    %v1221 = vadd.f32 %v1217, %v1220
    %v1222 = vsel %vm284, %v1221, 0.0
    %1223 = vadd.xlane.f32.xlu0 %v1222
    %v1224 = vpop.xlane.xlu0 %1223
    %v1225 = vrcp.pop 32.0
    %v1226 = vmul.f32 %v1224, %v1225
    %v1227 = vsub.f32 %v1221, %v1226
    %v1228 = vmul.f32 %v1227, %v1227
    %v1229 = vsel %vm284, %v1228, 0.0
    %1230 = vadd.xlane.f32.xlu0 %v1229
    %v1231 = vpop.xlane.xlu0 %1230
    %v1232 = vmul.f32 %v1231, %v1225
    %v1233 = vadd.f32 %v1232, 1e-05
    %v1234 = vrsqrt.pop %v1233
    %v1235 = vmul.f32 %v1227, %v1234
    %v1236 = vld [vmem:[#allocation7] sm:$0x1]
    %v1238 = vlaneseq
    %v1239 = vshrl.u32 %v1238, 7
    %v1240 = vsub.s32 0, %v1239
    %v1241 = vrot.slane %v1236, %v1240
    %v1243 = vmul.f32 %v1235, %v1241
    %v1244 = vld [vmem:[%s8] sm:$0x1]
    %v1246 = vlaneseq
    %v1247 = vshrl.u32 %v1246, 7
    %v1248 = vsub.s32 0, %v1247
    %v1249 = vrot.slane %v1244, %v1248
    %v1251 = vadd.f32 %v1243, %v1249
    %s1252 = scalar_lea.vmem [#allocation5], 32
    %v1253 = vld [vmem:[%s1252] sm:$0xff]
    %v1254 = vld [vmem:[%s1252 + $0x8] sm:$0xff]
    %v1255 = vld [vmem:[%s1252 + $0x10] sm:$0xff]
    %v1256 = vld [vmem:[%s1252 + $0x18] sm:$0xff]
    %s1257 = scalar_lea.vmem %s6, 1
    %v1258 = vld [vmem:[%s1257] sm:$0x1]
    %v1260 = vlaneseq
    %v1261 = vshrl.u32 %v1260, 7
    %v1262 = vsub.s32 0, %v1261
    %v1263 = vrot.slane %v1258, %v1262
    %v1266 = vsel %vm284, %v787, 0
    %1268 = vmatprep.subr.mxu0 0.0
    %1269 = vmatpush1.msra.mxu0 %v1253
    %1270 = vmatprep.subr.mxu0 0.0
    %1271 = vmatpush1.msra.mxu0 %v1254
    %1272 = vmatprep.subr.mxu0 0.0
    %1273 = vmatpush1.msra.mxu0 %v1255
    %1274 = vmatprep.subr.mxu0 0.0
    %1275 = vmatpush1.msra.mxu0 %v1256
    %1276 = vmatprep.subr.mxu0 0.0
    %1277 = vmatpush1.msra.mxu0 0.0
    %1278 = vmatprep.subr.mxu0 0.0
    %1279 = vmatpush1.msra.mxu0 0.0
    %1280 = vmatprep.subr.mxu0 0.0
    %1281 = vmatpush1.msra.mxu0 0.0
    %1282 = vmatprep.subr.mxu0 0.0
    %1283 = vmatpush1.msra.mxu0 0.0
    %1284 = vmatprep.subr.mxu0 0.0
    %1285 = vmatpush1.msra.mxu0 0.0
    %1286 = vmatprep.subr.mxu0 0.0
    %1287 = vmatpush1.msra.mxu0 0.0
    %1288 = vmatprep.subr.mxu0 0.0
    %1289 = vmatpush1.msra.mxu0 0.0
    %1290 = vmatprep.subr.mxu0 0.0
    %1291 = vmatpush1.msra.mxu0 0.0
    %1292 = vmatprep.subr.mxu0 0.0
    %1293 = vmatpush1.msra.mxu0 0.0
    %1294 = vmatprep.subr.mxu0 0.0
    %1295 = vmatpush1.msra.mxu0 0.0
    %1296 = vmatprep.subr.mxu0 0.0
    %1297 = vmatpush1.msra.mxu0 0.0
    %1298 = vmatprep.subr.mxu0 0.0
    %1299 = vmatpush1.msra.mxu0 0.0
    %1300 = vmatprep.subr.mxu0 0.0
    %1301 = vmatpush1.msra.mxu0 0.0
    %1302 = vmatprep.subr.mxu0 0.0
    %1303 = vmatpush1.msra.mxu0 0.0
    %1304 = vmatprep.subr.mxu0 0.0
    %1305 = vmatpush1.msra.mxu0 0.0
    %1306 = vmatprep.subr.mxu0 0.0
    %1307 = vmatpush1.msra.mxu0 0.0
    %1308 = vmatprep.subr.mxu0 0.0
    %1309 = vmatpush1.msra.mxu0 0.0
    %1310 = vmatprep.subr.mxu0 0.0
    %1311 = vmatpush1.msra.mxu0 0.0
    %1312 = vmatprep.subr.mxu0 0.0
    %1313 = vmatpush1.msra.mxu0 0.0
    %1314 = vmatprep.subr.mxu0 0.0
    %1315 = vmatpush1.msra.mxu0 0.0
    %1316 = vmatprep.subr.mxu0 0.0
    %1317 = vmatpush1.msra.mxu0 0.0
    %1318 = vmatprep.subr.mxu0 0.0
    %1319 = vmatpush1.msra.mxu0 0.0
    %1320 = vmatprep.subr.mxu0 0.0
    %1321 = vmatpush1.msra.mxu0 0.0
    %1322 = vmatprep.subr.mxu0 0.0
    %1323 = vmatpush1.msra.mxu0 0.0
    %1324 = vmatprep.subr.mxu0 0.0
    %1325 = vmatpush1.msra.mxu0 0.0
    %1326 = vmatprep.subr.mxu0 0.0
    %1327 = vmatpush1.msra.mxu0 0.0
    %1328 = vmatprep.subr.mxu0 0.0
    %1329 = vmatpush1.msra.mxu0 0.0
    %1330 = vmatprep.subr.mxu0 0.0
    %1331 = vmatpush1.msra.mxu0 0.0
    %1332 = vmatprep.mubr.f32.mxu0 0.0
    %1333 = vmatmul.mubr.f32.gmra.mrb[0].mxu0 %v1266
    %v1334 = vpop.f32.mrb[0].mxu0
    %v1335 = vadd.f32 %v1263, %v1334
    %v1336 = vpop.f32.mrb[0].mxu0
    %1337 = vdwg.mxu0
    %s1338 = sld [smem:[#allocation8 + $0x80]]
    %v1339 = vstv %s1338
    %v1340 = vmul.f32 %v1335, %v1339
    %s1341 = ssub.f32 1.0, %s1338
    %v1342 = vstv %s1341
    %v1343 = vmul.f32 %v272, %v1342
    %v1344 = vadd.f32 %v1340, %v1343
    %v1345 = vsel %vm284, %v1344, 0.0
    %1346 = vadd.xlane.f32.xlu0 %v1345
    %v1347 = vpop.xlane.xlu0 %1346
    %v1348 = vmul.f32 %v1347, %v1225
    %v1349 = vsub.f32 %v1344, %v1348
    %v1350 = vmul.f32 %v1349, %v1349
    %v1351 = vsel %vm284, %v1350, 0.0
    %1352 = vadd.xlane.f32.xlu0 %v1351
    %v1353 = vpop.xlane.xlu0 %1352
    %v1354 = vmul.f32 %v1353, %v1225
    %v1355 = vadd.f32 %v1354, 1e-05
    %v1356 = vrsqrt.pop %v1355
    %v1357 = vmul.f32 %v1349, %v1356
    %s1358 = scalar_lea.vmem [#allocation7], 1
    %v1359 = vld [vmem:[%s1358] sm:$0x1]
    %v1361 = vlaneseq
    %v1362 = vshrl.u32 %v1361, 7
    %v1363 = vsub.s32 0, %v1362
    %v1364 = vrot.slane %v1359, %v1363
    %v1366 = vmul.f32 %v1357, %v1364
    %s1367 = scalar_lea.vmem %s8, 1
    %v1368 = vld [vmem:[%s1367] sm:$0x1]
    %v1370 = vlaneseq
    %v1371 = vshrl.u32 %v1370, 7
    %v1372 = vsub.s32 0, %v1371
    %v1373 = vrot.slane %v1368, %v1372
    %v1375 = vadd.f32 %v1366, %v1373
    %s1376 = scalar_lea.vmem [#allocation2], 64
    %v1377 = vld [vmem:[%s1376] sm:$0xff]
    %v1378 = vld [vmem:[%s1376 + $0x8] sm:$0xff]
    %v1379 = vld [vmem:[%s1376 + $0x10] sm:$0xff]
    %v1380 = vld [vmem:[%s1376 + $0x18] sm:$0xff]
    %s1381 = scalar_lea.vmem %s4, 2
    %v1382 = vld [vmem:[%s1381] sm:$0x1]
    %v1384 = vlaneseq
    %v1385 = vshrl.u32 %v1384, 7
    %v1386 = vsub.s32 0, %v1385
    %v1387 = vrot.slane %v1382, %v1386
    %v1390 = vsel %vm284, %v1251, 0
    %1392 = vmatprep.subr.mxu0 0.0
    %1393 = vmatpush1.msra.mxu0 %v1377
    %1394 = vmatprep.subr.mxu0 0.0
    %1395 = vmatpush1.msra.mxu0 %v1378
    %1396 = vmatprep.subr.mxu0 0.0
    %1397 = vmatpush1.msra.mxu0 %v1379
    %1398 = vmatprep.subr.mxu0 0.0
    %1399 = vmatpush1.msra.mxu0 %v1380
    %1400 = vmatprep.subr.mxu0 0.0
    %1401 = vmatpush1.msra.mxu0 0.0
    %1402 = vmatprep.subr.mxu0 0.0
    %1403 = vmatpush1.msra.mxu0 0.0
    %1404 = vmatprep.subr.mxu0 0.0
    %1405 = vmatpush1.msra.mxu0 0.0
    %1406 = vmatprep.subr.mxu0 0.0
    %1407 = vmatpush1.msra.mxu0 0.0
    %1408 = vmatprep.subr.mxu0 0.0
    %1409 = vmatpush1.msra.mxu0 0.0
    %1410 = vmatprep.subr.mxu0 0.0
    %1411 = vmatpush1.msra.mxu0 0.0
    %1412 = vmatprep.subr.mxu0 0.0
    %1413 = vmatpush1.msra.mxu0 0.0
    %1414 = vmatprep.subr.mxu0 0.0
    %1415 = vmatpush1.msra.mxu0 0.0
    %1416 = vmatprep.subr.mxu0 0.0
    %1417 = vmatpush1.msra.mxu0 0.0
    %1418 = vmatprep.subr.mxu0 0.0
    %1419 = vmatpush1.msra.mxu0 0.0
    %1420 = vmatprep.subr.mxu0 0.0
    %1421 = vmatpush1.msra.mxu0 0.0
    %1422 = vmatprep.subr.mxu0 0.0
    %1423 = vmatpush1.msra.mxu0 0.0
    %1424 = vmatprep.subr.mxu0 0.0
    %1425 = vmatpush1.msra.mxu0 0.0
    %1426 = vmatprep.subr.mxu0 0.0
    %1427 = vmatpush1.msra.mxu0 0.0
    %1428 = vmatprep.subr.mxu0 0.0
    %1429 = vmatpush1.msra.mxu0 0.0
    %1430 = vmatprep.subr.mxu0 0.0
    %1431 = vmatpush1.msra.mxu0 0.0
    %1432 = vmatprep.subr.mxu0 0.0
    %1433 = vmatpush1.msra.mxu0 0.0
    %1434 = vmatprep.subr.mxu0 0.0
    %1435 = vmatpush1.msra.mxu0 0.0
    %1436 = vmatprep.subr.mxu0 0.0
    %1437 = vmatpush1.msra.mxu0 0.0
    %1438 = vmatprep.subr.mxu0 0.0
    %1439 = vmatpush1.msra.mxu0 0.0
    %1440 = vmatprep.subr.mxu0 0.0
    %1441 = vmatpush1.msra.mxu0 0.0
    %1442 = vmatprep.subr.mxu0 0.0
    %1443 = vmatpush1.msra.mxu0 0.0
    %1444 = vmatprep.subr.mxu0 0.0
    %1445 = vmatpush1.msra.mxu0 0.0
    %1446 = vmatprep.subr.mxu0 0.0
    %1447 = vmatpush1.msra.mxu0 0.0
    %1448 = vmatprep.subr.mxu0 0.0
    %1449 = vmatpush1.msra.mxu0 0.0
    %1450 = vmatprep.subr.mxu0 0.0
    %1451 = vmatpush1.msra.mxu0 0.0
    %1452 = vmatprep.subr.mxu0 0.0
    %1453 = vmatpush1.msra.mxu0 0.0
    %1454 = vmatprep.subr.mxu0 0.0
    %1455 = vmatpush1.msra.mxu0 0.0
    %1456 = vmatprep.mubr.f32.mxu0 0.0
    %1457 = vmatmul.mubr.f32.gmra.mrb[0].mxu0 %v1390
    %v1458 = vpop.f32.mrb[0].mxu0
    %v1459 = vadd.f32 %v1387, %v1458
    %v1460 = vpop.f32.mrb[0].mxu0
    %1461 = vdwg.mxu0
    %s1462 = scalar_lea.vmem [#allocation2], 96
    %v1463 = vld [vmem:[%s1462] sm:$0xff]
    %v1464 = vld [vmem:[%s1462 + $0x8] sm:$0xff]
    %v1465 = vld [vmem:[%s1462 + $0x10] sm:$0xff]
    %v1466 = vld [vmem:[%s1462 + $0x18] sm:$0xff]
    %s1467 = scalar_lea.vmem %s4, 3
    %v1468 = vld [vmem:[%s1467] sm:$0x1]
    %v1470 = vlaneseq
    %v1471 = vshrl.u32 %v1470, 7
    %v1472 = vsub.s32 0, %v1471
    %v1473 = vrot.slane %v1468, %v1472
    %v1476 = vsel %vm284, %v1375, 0
    %1478 = vmatprep.subr.mxu0 0.0
    %1479 = vmatpush1.msra.mxu0 %v1463
    %1480 = vmatprep.subr.mxu0 0.0
    %1481 = vmatpush1.msra.mxu0 %v1464
    %1482 = vmatprep.subr.mxu0 0.0
    %1483 = vmatpush1.msra.mxu0 %v1465
    %1484 = vmatprep.subr.mxu0 0.0
    %1485 = vmatpush1.msra.mxu0 %v1466
    %1486 = vmatprep.subr.mxu0 0.0
    %1487 = vmatpush1.msra.mxu0 0.0
    %1488 = vmatprep.subr.mxu0 0.0
    %1489 = vmatpush1.msra.mxu0 0.0
    %1490 = vmatprep.subr.mxu0 0.0
    %1491 = vmatpush1.msra.mxu0 0.0
    %1492 = vmatprep.subr.mxu0 0.0
    %1493 = vmatpush1.msra.mxu0 0.0
    %1494 = vmatprep.subr.mxu0 0.0
    %1495 = vmatpush1.msra.mxu0 0.0
    %1496 = vmatprep.subr.mxu0 0.0
    %1497 = vmatpush1.msra.mxu0 0.0
    %1498 = vmatprep.subr.mxu0 0.0
    %1499 = vmatpush1.msra.mxu0 0.0
    %1500 = vmatprep.subr.mxu0 0.0
    %1501 = vmatpush1.msra.mxu0 0.0
    %1502 = vmatprep.subr.mxu0 0.0
    %1503 = vmatpush1.msra.mxu0 0.0
    %1504 = vmatprep.subr.mxu0 0.0
    %1505 = vmatpush1.msra.mxu0 0.0
    %1506 = vmatprep.subr.mxu0 0.0
    %1507 = vmatpush1.msra.mxu0 0.0
    %1508 = vmatprep.subr.mxu0 0.0
    %1509 = vmatpush1.msra.mxu0 0.0
    %1510 = vmatprep.subr.mxu0 0.0
    %1511 = vmatpush1.msra.mxu0 0.0
    %1512 = vmatprep.subr.mxu0 0.0
    %1513 = vmatpush1.msra.mxu0 0.0
    %1514 = vmatprep.subr.mxu0 0.0
    %1515 = vmatpush1.msra.mxu0 0.0
    %1516 = vmatprep.subr.mxu0 0.0
    %1517 = vmatpush1.msra.mxu0 0.0
    %1518 = vmatprep.subr.mxu0 0.0
    %1519 = vmatpush1.msra.mxu0 0.0
    %1520 = vmatprep.subr.mxu0 0.0
    %1521 = vmatpush1.msra.mxu0 0.0
    %1522 = vmatprep.subr.mxu0 0.0
    %1523 = vmatpush1.msra.mxu0 0.0
    %1524 = vmatprep.subr.mxu0 0.0
    %1525 = vmatpush1.msra.mxu0 0.0
    %1526 = vmatprep.subr.mxu0 0.0
    %1527 = vmatpush1.msra.mxu0 0.0
    %1528 = vmatprep.subr.mxu0 0.0
    %1529 = vmatpush1.msra.mxu0 0.0
    %1530 = vmatprep.subr.mxu0 0.0
    %1531 = vmatpush1.msra.mxu0 0.0
    %1532 = vmatprep.subr.mxu0 0.0
    %1533 = vmatpush1.msra.mxu0 0.0
    %1534 = vmatprep.subr.mxu0 0.0
    %1535 = vmatpush1.msra.mxu0 0.0
    %1536 = vmatprep.subr.mxu0 0.0
    %1537 = vmatpush1.msra.mxu0 0.0
    %1538 = vmatprep.subr.mxu0 0.0
    %1539 = vmatpush1.msra.mxu0 0.0
    %1540 = vmatprep.subr.mxu0 0.0
    %1541 = vmatpush1.msra.mxu0 0.0
    %1542 = vmatprep.mubr.f32.mxu0 0.0
    %1543 = vmatmul.mubr.f32.gmra.mrb[0].mxu0 %v1476
    %v1544 = vpop.f32.mrb[0].mxu0
    %v1545 = vadd.f32 %v1473, %v1544
    %v1546 = vpop.f32.mrb[0].mxu0
    %1547 = vdwg.mxu0
    %1549 = vrot.lane.b32.xlu0 %v1459, 96
    %v1550 = vpop.permute.xlu0 %1549
    %v1552 = vsel %vm111, %v1545, 0
    %v1554 = vsel %vm111, %v1550, 0
    %1556 = vmatprep.subr.mxu0 0.0
    %1557 = vmatpush1.xpose.msra.mxu0 %v1554
    %1558 = vmatprep.subr.mxu0 0.0
    %1559 = vmatpush1.xpose.msra.mxu0 0.0
    %1560 = vmatprep.subr.mxu0 0.0
    %1561 = vmatpush1.xpose.msra.mxu0 0.0
    %1562 = vmatprep.subr.mxu0 0.0
    %1563 = vmatpush1.xpose.msra.mxu0 0.0
    %1564 = vmatprep.subr.mxu0 0.0
    %1565 = vmatpush1.xpose.msra.mxu0 0.0
    %1566 = vmatprep.subr.mxu0 0.0
    %1567 = vmatpush1.xpose.msra.mxu0 0.0
    %1568 = vmatprep.subr.mxu0 0.0
    %1569 = vmatpush1.xpose.msra.mxu0 0.0
    %1570 = vmatprep.subr.mxu0 0.0
    %1571 = vmatpush1.xpose.msra.mxu0 0.0
    %1572 = vmatprep.subr.mxu0 0.0
    %1573 = vmatpush1.xpose.msra.mxu0 0.0
    %1574 = vmatprep.subr.mxu0 0.0
    %1575 = vmatpush1.xpose.msra.mxu0 0.0
    %1576 = vmatprep.subr.mxu0 0.0
    %1577 = vmatpush1.xpose.msra.mxu0 0.0
    %1578 = vmatprep.subr.mxu0 0.0
    %1579 = vmatpush1.xpose.msra.mxu0 0.0
    %1580 = vmatprep.subr.mxu0 0.0
    %1581 = vmatpush1.xpose.msra.mxu0 0.0
    %1582 = vmatprep.subr.mxu0 0.0
    %1583 = vmatpush1.xpose.msra.mxu0 0.0
    %1584 = vmatprep.subr.mxu0 0.0
    %1585 = vmatpush1.xpose.msra.mxu0 0.0
    %1586 = vmatprep.subr.mxu0 0.0
    %1587 = vmatpush1.xpose.msra.mxu0 0.0
    %1588 = vmatprep.subr.mxu0 0.0
    %1589 = vmatpush1.xpose.msra.mxu0 0.0
    %1590 = vmatprep.subr.mxu0 0.0
    %1591 = vmatpush1.xpose.msra.mxu0 0.0
    %1592 = vmatprep.subr.mxu0 0.0
    %1593 = vmatpush1.xpose.msra.mxu0 0.0
    %1594 = vmatprep.subr.mxu0 0.0
    %1595 = vmatpush1.xpose.msra.mxu0 0.0
    %1596 = vmatprep.subr.mxu0 0.0
    %1597 = vmatpush1.xpose.msra.mxu0 0.0
    %1598 = vmatprep.subr.mxu0 0.0
    %1599 = vmatpush1.xpose.msra.mxu0 0.0
    %1600 = vmatprep.subr.mxu0 0.0
    %1601 = vmatpush1.xpose.msra.mxu0 0.0
    %1602 = vmatprep.subr.mxu0 0.0
    %1603 = vmatpush1.xpose.msra.mxu0 0.0
    %1604 = vmatprep.subr.mxu0 0.0
    %1605 = vmatpush1.xpose.msra.mxu0 0.0
    %1606 = vmatprep.subr.mxu0 0.0
    %1607 = vmatpush1.xpose.msra.mxu0 0.0
    %1608 = vmatprep.subr.mxu0 0.0
    %1609 = vmatpush1.xpose.msra.mxu0 0.0
    %1610 = vmatprep.subr.mxu0 0.0
    %1611 = vmatpush1.xpose.msra.mxu0 0.0
    %1612 = vmatprep.subr.mxu0 0.0
    %1613 = vmatpush1.xpose.msra.mxu0 0.0
    %1614 = vmatprep.subr.mxu0 0.0
    %1615 = vmatpush1.xpose.msra.mxu0 0.0
    %1616 = vmatprep.subr.mxu0 0.0
    %1617 = vmatpush1.xpose.msra.mxu0 0.0
    %1618 = vmatprep.subr.mxu0 0.0
    %1619 = vmatpush1.xpose.msra.mxu0 0.0
    %1620 = vmatprep.mubr.f32.mxu0 0.0
    %1621 = vmatmul.mubr.f32.gmra.mrb[0].mxu0 %v1552
    %v1622 = vpop.f32.mrb[0].mxu0
    %v1623 = vadd.f32 %v444, %v1622
    %v1624 = vpop.f32.mrb[0].mxu0
    %1625 = vdwg.mxu0
    %v1626 = vsel %vm524, %v1623, -inf
    %1627 = vmax.xlane.f32.xlu0 %v1626
    %v1628 = vpop.xlane.xlu0 %1627
    %v1629 = vsub.f32 %v1623, %v1628
    %v1630 = vmul.f32 %v1629, 1.442695
    %v1631 = vpow.pop %v1630
    %v1632 = vsel %vm524, %v1631, 0.0
    %1633 = vadd.xlane.f32.xlu0 %v1632
    %v1634 = vpop.xlane.xlu0 %1633
    %v1635 = vrcp.pop %v1634
    %v1636 = vmul.f32 %v1631, %v1635
    %1637 = vrot.lane.b32.xlu0 %v1459, 64
    %v1638 = vpop.permute.xlu0 %1637
    %v1641 = vsel %vm524, %v1636, 0
    %1643 = vmatprep.subr.mxu0 0.0
    %1644 = vmatpush1.msra.mxu0 %v1638
    %1645 = vmatprep.subr.mxu0 0.0
    %1646 = vmatpush1.msra.mxu0 0.0
    %1647 = vmatprep.subr.mxu0 0.0
    %1648 = vmatpush1.msra.mxu0 0.0
    %1649 = vmatprep.subr.mxu0 0.0
    %1650 = vmatpush1.msra.mxu0 0.0
    %1651 = vmatprep.subr.mxu0 0.0
    %1652 = vmatpush1.msra.mxu0 0.0
    %1653 = vmatprep.subr.mxu0 0.0
    %1654 = vmatpush1.msra.mxu0 0.0
    %1655 = vmatprep.subr.mxu0 0.0
    %1656 = vmatpush1.msra.mxu0 0.0
    %1657 = vmatprep.subr.mxu0 0.0
    %1658 = vmatpush1.msra.mxu0 0.0
    %1659 = vmatprep.subr.mxu0 0.0
    %1660 = vmatpush1.msra.mxu0 0.0
    %1661 = vmatprep.subr.mxu0 0.0
    %1662 = vmatpush1.msra.mxu0 0.0
    %1663 = vmatprep.subr.mxu0 0.0
    %1664 = vmatpush1.msra.mxu0 0.0
    %1665 = vmatprep.subr.mxu0 0.0
    %1666 = vmatpush1.msra.mxu0 0.0
    %1667 = vmatprep.subr.mxu0 0.0
    %1668 = vmatpush1.msra.mxu0 0.0
    %1669 = vmatprep.subr.mxu0 0.0
    %1670 = vmatpush1.msra.mxu0 0.0
    %1671 = vmatprep.subr.mxu0 0.0
    %1672 = vmatpush1.msra.mxu0 0.0
    %1673 = vmatprep.subr.mxu0 0.0
    %1674 = vmatpush1.msra.mxu0 0.0
    %1675 = vmatprep.subr.mxu0 0.0
    %1676 = vmatpush1.msra.mxu0 0.0
    %1677 = vmatprep.subr.mxu0 0.0
    %1678 = vmatpush1.msra.mxu0 0.0
    %1679 = vmatprep.subr.mxu0 0.0
    %1680 = vmatpush1.msra.mxu0 0.0
    %1681 = vmatprep.subr.mxu0 0.0
    %1682 = vmatpush1.msra.mxu0 0.0
    %1683 = vmatprep.subr.mxu0 0.0
    %1684 = vmatpush1.msra.mxu0 0.0
    %1685 = vmatprep.subr.mxu0 0.0
    %1686 = vmatpush1.msra.mxu0 0.0
    %1687 = vmatprep.subr.mxu0 0.0
    %1688 = vmatpush1.msra.mxu0 0.0
    %1689 = vmatprep.subr.mxu0 0.0
    %1690 = vmatpush1.msra.mxu0 0.0
    %1691 = vmatprep.subr.mxu0 0.0
    %1692 = vmatpush1.msra.mxu0 0.0
    %1693 = vmatprep.subr.mxu0 0.0
    %1694 = vmatpush1.msra.mxu0 0.0
    %1695 = vmatprep.subr.mxu0 0.0
    %1696 = vmatpush1.msra.mxu0 0.0
    %1697 = vmatprep.subr.mxu0 0.0
    %1698 = vmatpush1.msra.mxu0 0.0
    %1699 = vmatprep.subr.mxu0 0.0
    %1700 = vmatpush1.msra.mxu0 0.0
    %1701 = vmatprep.subr.mxu0 0.0
    %1702 = vmatpush1.msra.mxu0 0.0
    %1703 = vmatprep.subr.mxu0 0.0
    %1704 = vmatpush1.msra.mxu0 0.0
    %1705 = vmatprep.subr.mxu0 0.0
    %1706 = vmatpush1.msra.mxu0 0.0
    %1707 = vmatprep.mubr.f32.mxu0 0.0
    %1708 = vmatmul.mubr.f32.gmra.mrb[0].mxu0 %v1641
    %v1709 = vpop.f32.mrb[0].mxu0
    %v1710 = vadd.f32 0.0, %v1709
    %v1711 = vpop.f32.mrb[0].mxu0
    %1712 = vdwg.mxu0
    %1713 = vrot.lane.b32.xlu0 %v1545, 112
    %v1714 = vpop.permute.xlu0 %1713
    %1715 = vrot.lane.b32.xlu0 %v1459, 80
    %v1716 = vpop.permute.xlu0 %1715
    %v1717 = vsel %vm111, %v1714, 0
    %v1719 = vsel %vm111, %v1716, 0
    %1721 = vmatprep.subr.mxu0 0.0
    %1722 = vmatpush1.xpose.msra.mxu0 %v1719
    %1723 = vmatprep.subr.mxu0 0.0
    %1724 = vmatpush1.xpose.msra.mxu0 0.0
    %1725 = vmatprep.subr.mxu0 0.0
    %1726 = vmatpush1.xpose.msra.mxu0 0.0
    %1727 = vmatprep.subr.mxu0 0.0
    %1728 = vmatpush1.xpose.msra.mxu0 0.0
    %1729 = vmatprep.subr.mxu0 0.0
    %1730 = vmatpush1.xpose.msra.mxu0 0.0
    %1731 = vmatprep.subr.mxu0 0.0
    %1732 = vmatpush1.xpose.msra.mxu0 0.0
    %1733 = vmatprep.subr.mxu0 0.0
    %1734 = vmatpush1.xpose.msra.mxu0 0.0
    %1735 = vmatprep.subr.mxu0 0.0
    %1736 = vmatpush1.xpose.msra.mxu0 0.0
    %1737 = vmatprep.subr.mxu0 0.0
    %1738 = vmatpush1.xpose.msra.mxu0 0.0
    %1739 = vmatprep.subr.mxu0 0.0
    %1740 = vmatpush1.xpose.msra.mxu0 0.0
    %1741 = vmatprep.subr.mxu0 0.0
    %1742 = vmatpush1.xpose.msra.mxu0 0.0
    %1743 = vmatprep.subr.mxu0 0.0
    %1744 = vmatpush1.xpose.msra.mxu0 0.0
    %1745 = vmatprep.subr.mxu0 0.0
    %1746 = vmatpush1.xpose.msra.mxu0 0.0
    %1747 = vmatprep.subr.mxu0 0.0
    %1748 = vmatpush1.xpose.msra.mxu0 0.0
    %1749 = vmatprep.subr.mxu0 0.0
    %1750 = vmatpush1.xpose.msra.mxu0 0.0
    %1751 = vmatprep.subr.mxu0 0.0
    %1752 = vmatpush1.xpose.msra.mxu0 0.0
    %1753 = vmatprep.subr.mxu0 0.0
    %1754 = vmatpush1.xpose.msra.mxu0 0.0
    %1755 = vmatprep.subr.mxu0 0.0
    %1756 = vmatpush1.xpose.msra.mxu0 0.0
    %1757 = vmatprep.subr.mxu0 0.0
    %1758 = vmatpush1.xpose.msra.mxu0 0.0
    %1759 = vmatprep.subr.mxu0 0.0
    %1760 = vmatpush1.xpose.msra.mxu0 0.0
    %1761 = vmatprep.subr.mxu0 0.0
    %1762 = vmatpush1.xpose.msra.mxu0 0.0
    %1763 = vmatprep.subr.mxu0 0.0
    %1764 = vmatpush1.xpose.msra.mxu0 0.0
    %1765 = vmatprep.subr.mxu0 0.0
    %1766 = vmatpush1.xpose.msra.mxu0 0.0
    %1767 = vmatprep.subr.mxu0 0.0
    %1768 = vmatpush1.xpose.msra.mxu0 0.0
    %1769 = vmatprep.subr.mxu0 0.0
    %1770 = vmatpush1.xpose.msra.mxu0 0.0
    %1771 = vmatprep.subr.mxu0 0.0
    %1772 = vmatpush1.xpose.msra.mxu0 0.0
    %1773 = vmatprep.subr.mxu0 0.0
    %1774 = vmatpush1.xpose.msra.mxu0 0.0
    %1775 = vmatprep.subr.mxu0 0.0
    %1776 = vmatpush1.xpose.msra.mxu0 0.0
    %1777 = vmatprep.subr.mxu0 0.0
    %1778 = vmatpush1.xpose.msra.mxu0 0.0
    %1779 = vmatprep.subr.mxu0 0.0
    %1780 = vmatpush1.xpose.msra.mxu0 0.0
    %1781 = vmatprep.subr.mxu0 0.0
    %1782 = vmatpush1.xpose.msra.mxu0 0.0
    %1783 = vmatprep.subr.mxu0 0.0
    %1784 = vmatpush1.xpose.msra.mxu0 0.0
    %1785 = vmatprep.mubr.f32.mxu0 0.0
    %1786 = vmatmul.mubr.f32.gmra.mrb[0].mxu0 %v1717
    %v1787 = vpop.f32.mrb[0].mxu0
    %v1788 = vadd.f32 %v444, %v1787
    %v1789 = vpop.f32.mrb[0].mxu0
    %1790 = vdwg.mxu0
    %v1791 = vsel %vm524, %v1788, -inf
    %1792 = vmax.xlane.f32.xlu0 %v1791
    %v1793 = vpop.xlane.xlu0 %1792
    %v1794 = vsub.f32 %v1788, %v1793
    %v1795 = vmul.f32 %v1794, 1.442695
    %v1796 = vpow.pop %v1795
    %v1797 = vsel %vm524, %v1796, 0.0
    %1798 = vadd.xlane.f32.xlu0 %v1797
    %v1799 = vpop.xlane.xlu0 %1798
    %v1800 = vrcp.pop %v1799
    %v1801 = vmul.f32 %v1796, %v1800
    %1802 = vrot.lane.b32.xlu0 %v1459, 48
    %v1803 = vpop.permute.xlu0 %1802
    %v1806 = vsel %vm524, %v1801, 0
    %1808 = vmatprep.subr.mxu0 0.0
    %1809 = vmatpush1.msra.mxu0 %v1803
    %1810 = vmatprep.subr.mxu0 0.0
    %1811 = vmatpush1.msra.mxu0 0.0
    %1812 = vmatprep.subr.mxu0 0.0
    %1813 = vmatpush1.msra.mxu0 0.0
    %1814 = vmatprep.subr.mxu0 0.0
    %1815 = vmatpush1.msra.mxu0 0.0
    %1816 = vmatprep.subr.mxu0 0.0
    %1817 = vmatpush1.msra.mxu0 0.0
    %1818 = vmatprep.subr.mxu0 0.0
    %1819 = vmatpush1.msra.mxu0 0.0
    %1820 = vmatprep.subr.mxu0 0.0
    %1821 = vmatpush1.msra.mxu0 0.0
    %1822 = vmatprep.subr.mxu0 0.0
    %1823 = vmatpush1.msra.mxu0 0.0
    %1824 = vmatprep.subr.mxu0 0.0
    %1825 = vmatpush1.msra.mxu0 0.0
    %1826 = vmatprep.subr.mxu0 0.0
    %1827 = vmatpush1.msra.mxu0 0.0
    %1828 = vmatprep.subr.mxu0 0.0
    %1829 = vmatpush1.msra.mxu0 0.0
    %1830 = vmatprep.subr.mxu0 0.0
    %1831 = vmatpush1.msra.mxu0 0.0
    %1832 = vmatprep.subr.mxu0 0.0
    %1833 = vmatpush1.msra.mxu0 0.0
    %1834 = vmatprep.subr.mxu0 0.0
    %1835 = vmatpush1.msra.mxu0 0.0
    %1836 = vmatprep.subr.mxu0 0.0
    %1837 = vmatpush1.msra.mxu0 0.0
    %1838 = vmatprep.subr.mxu0 0.0
    %1839 = vmatpush1.msra.mxu0 0.0
    %1840 = vmatprep.subr.mxu0 0.0
    %1841 = vmatpush1.msra.mxu0 0.0
    %1842 = vmatprep.subr.mxu0 0.0
    %1843 = vmatpush1.msra.mxu0 0.0
    %1844 = vmatprep.subr.mxu0 0.0
    %1845 = vmatpush1.msra.mxu0 0.0
    %1846 = vmatprep.subr.mxu0 0.0
    %1847 = vmatpush1.msra.mxu0 0.0
    %1848 = vmatprep.subr.mxu0 0.0
    %1849 = vmatpush1.msra.mxu0 0.0
    %1850 = vmatprep.subr.mxu0 0.0
    %1851 = vmatpush1.msra.mxu0 0.0
    %1852 = vmatprep.subr.mxu0 0.0
    %1853 = vmatpush1.msra.mxu0 0.0
    %1854 = vmatprep.subr.mxu0 0.0
    %1855 = vmatpush1.msra.mxu0 0.0
    %1856 = vmatprep.subr.mxu0 0.0
    %1857 = vmatpush1.msra.mxu0 0.0
    %1858 = vmatprep.subr.mxu0 0.0
    %1859 = vmatpush1.msra.mxu0 0.0
    %1860 = vmatprep.subr.mxu0 0.0
    %1861 = vmatpush1.msra.mxu0 0.0
    %1862 = vmatprep.subr.mxu0 0.0
    %1863 = vmatpush1.msra.mxu0 0.0
    %1864 = vmatprep.subr.mxu0 0.0
    %1865 = vmatpush1.msra.mxu0 0.0
    %1866 = vmatprep.subr.mxu0 0.0
    %1867 = vmatpush1.msra.mxu0 0.0
    %1868 = vmatprep.subr.mxu0 0.0
    %1869 = vmatpush1.msra.mxu0 0.0
    %1870 = vmatprep.subr.mxu0 0.0
    %1871 = vmatpush1.msra.mxu0 0.0
    %1872 = vmatprep.mubr.f32.mxu0 0.0
    %1873 = vmatmul.mubr.f32.gmra.mrb[0].mxu0 %v1806
    %v1874 = vpop.f32.mrb[0].mxu0
    %v1875 = vadd.f32 0.0, %v1874
    %v1876 = vpop.f32.mrb[0].mxu0
    %1877 = vdwg.mxu0
    %1879 = vrot.lane.b32.xlu0 %v1875, 16
    %v1880 = vpop.permute.xlu0 %1879
    %v1882 = vsel %vm111, %v1710, %v1880
    %v1883 = vmul.f32 %v1882, %v785
    %1884 = vrot.lane.b32.xlu0 %v1545, 96
    %v1885 = vpop.permute.xlu0 %1884
    %v1886 = vsel %vm111, %v1459, 0
    %v1888 = vsel %vm111, %v1885, 0
    %1890 = vmatprep.subr.mxu0 0.0
    %1891 = vmatpush1.xpose.msra.mxu0 %v1888
    %1892 = vmatprep.subr.mxu0 0.0
    %1893 = vmatpush1.xpose.msra.mxu0 0.0
    %1894 = vmatprep.subr.mxu0 0.0
    %1895 = vmatpush1.xpose.msra.mxu0 0.0
    %1896 = vmatprep.subr.mxu0 0.0
    %1897 = vmatpush1.xpose.msra.mxu0 0.0
    %1898 = vmatprep.subr.mxu0 0.0
    %1899 = vmatpush1.xpose.msra.mxu0 0.0
    %1900 = vmatprep.subr.mxu0 0.0
    %1901 = vmatpush1.xpose.msra.mxu0 0.0
    %1902 = vmatprep.subr.mxu0 0.0
    %1903 = vmatpush1.xpose.msra.mxu0 0.0
    %1904 = vmatprep.subr.mxu0 0.0
    %1905 = vmatpush1.xpose.msra.mxu0 0.0
    %1906 = vmatprep.subr.mxu0 0.0
    %1907 = vmatpush1.xpose.msra.mxu0 0.0
    %1908 = vmatprep.subr.mxu0 0.0
    %1909 = vmatpush1.xpose.msra.mxu0 0.0
    %1910 = vmatprep.subr.mxu0 0.0
    %1911 = vmatpush1.xpose.msra.mxu0 0.0
    %1912 = vmatprep.subr.mxu0 0.0
    %1913 = vmatpush1.xpose.msra.mxu0 0.0
    %1914 = vmatprep.subr.mxu0 0.0
    %1915 = vmatpush1.xpose.msra.mxu0 0.0
    %1916 = vmatprep.subr.mxu0 0.0
    %1917 = vmatpush1.xpose.msra.mxu0 0.0
    %1918 = vmatprep.subr.mxu0 0.0
    %1919 = vmatpush1.xpose.msra.mxu0 0.0
    %1920 = vmatprep.subr.mxu0 0.0
    %1921 = vmatpush1.xpose.msra.mxu0 0.0
    %1922 = vmatprep.subr.mxu0 0.0
    %1923 = vmatpush1.xpose.msra.mxu0 0.0
    %1924 = vmatprep.subr.mxu0 0.0
    %1925 = vmatpush1.xpose.msra.mxu0 0.0
    %1926 = vmatprep.subr.mxu0 0.0
    %1927 = vmatpush1.xpose.msra.mxu0 0.0
    %1928 = vmatprep.subr.mxu0 0.0
    %1929 = vmatpush1.xpose.msra.mxu0 0.0
    %1930 = vmatprep.subr.mxu0 0.0
    %1931 = vmatpush1.xpose.msra.mxu0 0.0
    %1932 = vmatprep.subr.mxu0 0.0
    %1933 = vmatpush1.xpose.msra.mxu0 0.0
    %1934 = vmatprep.subr.mxu0 0.0
    %1935 = vmatpush1.xpose.msra.mxu0 0.0
    %1936 = vmatprep.subr.mxu0 0.0
    %1937 = vmatpush1.xpose.msra.mxu0 0.0
    %1938 = vmatprep.subr.mxu0 0.0
    %1939 = vmatpush1.xpose.msra.mxu0 0.0
    %1940 = vmatprep.subr.mxu0 0.0
    %1941 = vmatpush1.xpose.msra.mxu0 0.0
    %1942 = vmatprep.subr.mxu0 0.0
    %1943 = vmatpush1.xpose.msra.mxu0 0.0
    %1944 = vmatprep.subr.mxu0 0.0
    %1945 = vmatpush1.xpose.msra.mxu0 0.0
    %1946 = vmatprep.subr.mxu0 0.0
    %1947 = vmatpush1.xpose.msra.mxu0 0.0
    %1948 = vmatprep.subr.mxu0 0.0
    %1949 = vmatpush1.xpose.msra.mxu0 0.0
    %1950 = vmatprep.subr.mxu0 0.0
    %1951 = vmatpush1.xpose.msra.mxu0 0.0
    %1952 = vmatprep.subr.mxu0 0.0
    %1953 = vmatpush1.xpose.msra.mxu0 0.0
    %1954 = vmatprep.mubr.f32.mxu0 0.0
    %1955 = vmatmul.mubr.f32.gmra.mrb[0].mxu0 %v1886
    %v1956 = vpop.f32.mrb[0].mxu0
    %v1957 = vadd.f32 %v789, %v1956
    %v1958 = vpop.f32.mrb[0].mxu0
    %1959 = vdwg.mxu0
    %v1960 = vsel %vm524, %v1957, -inf
    %1961 = vmax.xlane.f32.xlu0 %v1960
    %v1962 = vpop.xlane.xlu0 %1961
    %v1963 = vsub.f32 %v1957, %v1962
    %v1964 = vmul.f32 %v1963, 1.442695
    %v1965 = vpow.pop %v1964
    %v1966 = vsel %vm524, %v1965, 0.0
    %1967 = vadd.xlane.f32.xlu0 %v1966
    %v1968 = vpop.xlane.xlu0 %1967
    %v1969 = vrcp.pop %v1968
    %v1970 = vmul.f32 %v1965, %v1969
    %1971 = vrot.lane.b32.xlu0 %v1545, 64
    %v1972 = vpop.permute.xlu0 %1971
    %v1975 = vsel %vm524, %v1970, 0
    %1977 = vmatprep.subr.mxu0 0.0
    %1978 = vmatpush1.msra.mxu0 %v1972
    %1979 = vmatprep.subr.mxu0 0.0
    %1980 = vmatpush1.msra.mxu0 0.0
    %1981 = vmatprep.subr.mxu0 0.0
    %1982 = vmatpush1.msra.mxu0 0.0
    %1983 = vmatprep.subr.mxu0 0.0
    %1984 = vmatpush1.msra.mxu0 0.0
    %1985 = vmatprep.subr.mxu0 0.0
    %1986 = vmatpush1.msra.mxu0 0.0
    %1987 = vmatprep.subr.mxu0 0.0
    %1988 = vmatpush1.msra.mxu0 0.0
    %1989 = vmatprep.subr.mxu0 0.0
    %1990 = vmatpush1.msra.mxu0 0.0
    %1991 = vmatprep.subr.mxu0 0.0
    %1992 = vmatpush1.msra.mxu0 0.0
    %1993 = vmatprep.subr.mxu0 0.0
    %1994 = vmatpush1.msra.mxu0 0.0
    %1995 = vmatprep.subr.mxu0 0.0
    %1996 = vmatpush1.msra.mxu0 0.0
    %1997 = vmatprep.subr.mxu0 0.0
    %1998 = vmatpush1.msra.mxu0 0.0
    %1999 = vmatprep.subr.mxu0 0.0
    %2000 = vmatpush1.msra.mxu0 0.0
    %2001 = vmatprep.subr.mxu0 0.0
    %2002 = vmatpush1.msra.mxu0 0.0
    %2003 = vmatprep.subr.mxu0 0.0
    %2004 = vmatpush1.msra.mxu0 0.0
    %2005 = vmatprep.subr.mxu0 0.0
    %2006 = vmatpush1.msra.mxu0 0.0
    %2007 = vmatprep.subr.mxu0 0.0
    %2008 = vmatpush1.msra.mxu0 0.0
    %2009 = vmatprep.subr.mxu0 0.0
    %2010 = vmatpush1.msra.mxu0 0.0
    %2011 = vmatprep.subr.mxu0 0.0
    %2012 = vmatpush1.msra.mxu0 0.0
    %2013 = vmatprep.subr.mxu0 0.0
    %2014 = vmatpush1.msra.mxu0 0.0
    %2015 = vmatprep.subr.mxu0 0.0
    %2016 = vmatpush1.msra.mxu0 0.0
    %2017 = vmatprep.subr.mxu0 0.0
    %2018 = vmatpush1.msra.mxu0 0.0
    %2019 = vmatprep.subr.mxu0 0.0
    %2020 = vmatpush1.msra.mxu0 0.0
    %2021 = vmatprep.subr.mxu0 0.0
    %2022 = vmatpush1.msra.mxu0 0.0
    %2023 = vmatprep.subr.mxu0 0.0
    %2024 = vmatpush1.msra.mxu0 0.0
    %2025 = vmatprep.subr.mxu0 0.0
    %2026 = vmatpush1.msra.mxu0 0.0
    %2027 = vmatprep.subr.mxu0 0.0
    %2028 = vmatpush1.msra.mxu0 0.0
    %2029 = vmatprep.subr.mxu0 0.0
    %2030 = vmatpush1.msra.mxu0 0.0
    %2031 = vmatprep.subr.mxu0 0.0
    %2032 = vmatpush1.msra.mxu0 0.0
    %2033 = vmatprep.subr.mxu0 0.0
    %2034 = vmatpush1.msra.mxu0 0.0
    %2035 = vmatprep.subr.mxu0 0.0
    %2036 = vmatpush1.msra.mxu0 0.0
    %2037 = vmatprep.subr.mxu0 0.0
    %2038 = vmatpush1.msra.mxu0 0.0
    %2039 = vmatprep.subr.mxu0 0.0
    %2040 = vmatpush1.msra.mxu0 0.0
    %2041 = vmatprep.mubr.f32.mxu0 0.0
    %2042 = vmatmul.mubr.f32.gmra.mrb[0].mxu0 %v1975
    %v2043 = vpop.f32.mrb[0].mxu0
    %v2044 = vadd.f32 0.0, %v2043
    %v2045 = vpop.f32.mrb[0].mxu0
    %2046 = vdwg.mxu0
    %2047 = vrot.lane.b32.xlu0 %v1459, 112
    %v2048 = vpop.permute.xlu0 %2047
    %2049 = vrot.lane.b32.xlu0 %v1545, 80
    %v2050 = vpop.permute.xlu0 %2049
    %v2051 = vsel %vm111, %v2048, 0
    %v2053 = vsel %vm111, %v2050, 0
    %2055 = vmatprep.subr.mxu0 0.0
    %2056 = vmatpush1.xpose.msra.mxu0 %v2053
    %2057 = vmatprep.subr.mxu0 0.0
    %2058 = vmatpush1.xpose.msra.mxu0 0.0
    %2059 = vmatprep.subr.mxu0 0.0
    %2060 = vmatpush1.xpose.msra.mxu0 0.0
    %2061 = vmatprep.subr.mxu0 0.0
    %2062 = vmatpush1.xpose.msra.mxu0 0.0
    %2063 = vmatprep.subr.mxu0 0.0
    %2064 = vmatpush1.xpose.msra.mxu0 0.0
    %2065 = vmatprep.subr.mxu0 0.0
    %2066 = vmatpush1.xpose.msra.mxu0 0.0
    %2067 = vmatprep.subr.mxu0 0.0
    %2068 = vmatpush1.xpose.msra.mxu0 0.0
    %2069 = vmatprep.subr.mxu0 0.0
    %2070 = vmatpush1.xpose.msra.mxu0 0.0
    %2071 = vmatprep.subr.mxu0 0.0
    %2072 = vmatpush1.xpose.msra.mxu0 0.0
    %2073 = vmatprep.subr.mxu0 0.0
    %2074 = vmatpush1.xpose.msra.mxu0 0.0
    %2075 = vmatprep.subr.mxu0 0.0
    %2076 = vmatpush1.xpose.msra.mxu0 0.0
    %2077 = vmatprep.subr.mxu0 0.0
    %2078 = vmatpush1.xpose.msra.mxu0 0.0
    %2079 = vmatprep.subr.mxu0 0.0
    %2080 = vmatpush1.xpose.msra.mxu0 0.0
    %2081 = vmatprep.subr.mxu0 0.0
    %2082 = vmatpush1.xpose.msra.mxu0 0.0
    %2083 = vmatprep.subr.mxu0 0.0
    %2084 = vmatpush1.xpose.msra.mxu0 0.0
    %2085 = vmatprep.subr.mxu0 0.0
    %2086 = vmatpush1.xpose.msra.mxu0 0.0
    %2087 = vmatprep.subr.mxu0 0.0
    %2088 = vmatpush1.xpose.msra.mxu0 0.0
    %2089 = vmatprep.subr.mxu0 0.0
    %2090 = vmatpush1.xpose.msra.mxu0 0.0
    %2091 = vmatprep.subr.mxu0 0.0
    %2092 = vmatpush1.xpose.msra.mxu0 0.0
    %2093 = vmatprep.subr.mxu0 0.0
    %2094 = vmatpush1.xpose.msra.mxu0 0.0
    %2095 = vmatprep.subr.mxu0 0.0
    %2096 = vmatpush1.xpose.msra.mxu0 0.0
    %2097 = vmatprep.subr.mxu0 0.0
    %2098 = vmatpush1.xpose.msra.mxu0 0.0
    %2099 = vmatprep.subr.mxu0 0.0
    %2100 = vmatpush1.xpose.msra.mxu0 0.0
    %2101 = vmatprep.subr.mxu0 0.0
    %2102 = vmatpush1.xpose.msra.mxu0 0.0
    %2103 = vmatprep.subr.mxu0 0.0
    %2104 = vmatpush1.xpose.msra.mxu0 0.0
    %2105 = vmatprep.subr.mxu0 0.0
    %2106 = vmatpush1.xpose.msra.mxu0 0.0
    %2107 = vmatprep.subr.mxu0 0.0
    %2108 = vmatpush1.xpose.msra.mxu0 0.0
    %2109 = vmatprep.subr.mxu0 0.0
    %2110 = vmatpush1.xpose.msra.mxu0 0.0
    %2111 = vmatprep.subr.mxu0 0.0
    %2112 = vmatpush1.xpose.msra.mxu0 0.0
    %2113 = vmatprep.subr.mxu0 0.0
    %2114 = vmatpush1.xpose.msra.mxu0 0.0
    %2115 = vmatprep.subr.mxu0 0.0
    %2116 = vmatpush1.xpose.msra.mxu0 0.0
    %2117 = vmatprep.subr.mxu0 0.0
    %2118 = vmatpush1.xpose.msra.mxu0 0.0
    %2119 = vmatprep.mubr.f32.mxu0 0.0
    %2120 = vmatmul.mubr.f32.gmra.mrb[0].mxu0 %v2051
    %v2121 = vpop.f32.mrb[0].mxu0
    %v2122 = vadd.f32 %v789, %v2121
    %v2123 = vpop.f32.mrb[0].mxu0
    %2124 = vdwg.mxu0
    %v2125 = vsel %vm524, %v2122, -inf
    %2126 = vmax.xlane.f32.xlu0 %v2125
    %v2127 = vpop.xlane.xlu0 %2126
    %v2128 = vsub.f32 %v2122, %v2127
    %v2129 = vmul.f32 %v2128, 1.442695
    %v2130 = vpow.pop %v2129
    %v2131 = vsel %vm524, %v2130, 0.0
    %2132 = vadd.xlane.f32.xlu0 %v2131
    %v2133 = vpop.xlane.xlu0 %2132
    %v2134 = vrcp.pop %v2133
    %v2135 = vmul.f32 %v2130, %v2134
    %2136 = vrot.lane.b32.xlu0 %v1545, 48
    %v2137 = vpop.permute.xlu0 %2136
    %v2140 = vsel %vm524, %v2135, 0
    %2142 = vmatprep.subr.mxu0 0.0
    %2143 = vmatpush1.msra.mxu0 %v2137
    %2144 = vmatprep.subr.mxu0 0.0
    %2145 = vmatpush1.msra.mxu0 0.0
    %2146 = vmatprep.subr.mxu0 0.0
    %2147 = vmatpush1.msra.mxu0 0.0
    %2148 = vmatprep.subr.mxu0 0.0
    %2149 = vmatpush1.msra.mxu0 0.0
    %2150 = vmatprep.subr.mxu0 0.0
    %2151 = vmatpush1.msra.mxu0 0.0
    %2152 = vmatprep.subr.mxu0 0.0
    %2153 = vmatpush1.msra.mxu0 0.0
    %2154 = vmatprep.subr.mxu0 0.0
    %2155 = vmatpush1.msra.mxu0 0.0
    %2156 = vmatprep.subr.mxu0 0.0
    %2157 = vmatpush1.msra.mxu0 0.0
    %2158 = vmatprep.subr.mxu0 0.0
    %2159 = vmatpush1.msra.mxu0 0.0
    %2160 = vmatprep.subr.mxu0 0.0
    %2161 = vmatpush1.msra.mxu0 0.0
    %2162 = vmatprep.subr.mxu0 0.0
    %2163 = vmatpush1.msra.mxu0 0.0
    %2164 = vmatprep.subr.mxu0 0.0
    %2165 = vmatpush1.msra.mxu0 0.0
    %2166 = vmatprep.subr.mxu0 0.0
    %2167 = vmatpush1.msra.mxu0 0.0
    %2168 = vmatprep.subr.mxu0 0.0
    %2169 = vmatpush1.msra.mxu0 0.0
    %2170 = vmatprep.subr.mxu0 0.0
    %2171 = vmatpush1.msra.mxu0 0.0
    %2172 = vmatprep.subr.mxu0 0.0
    %2173 = vmatpush1.msra.mxu0 0.0
    %2174 = vmatprep.subr.mxu0 0.0
    %2175 = vmatpush1.msra.mxu0 0.0
    %2176 = vmatprep.subr.mxu0 0.0
    %2177 = vmatpush1.msra.mxu0 0.0
    %2178 = vmatprep.subr.mxu0 0.0
    %2179 = vmatpush1.msra.mxu0 0.0
    %2180 = vmatprep.subr.mxu0 0.0
    %2181 = vmatpush1.msra.mxu0 0.0
    %2182 = vmatprep.subr.mxu0 0.0
    %2183 = vmatpush1.msra.mxu0 0.0
    %2184 = vmatprep.subr.mxu0 0.0
    %2185 = vmatpush1.msra.mxu0 0.0
    %2186 = vmatprep.subr.mxu0 0.0
    %2187 = vmatpush1.msra.mxu0 0.0
    %2188 = vmatprep.subr.mxu0 0.0
    %2189 = vmatpush1.msra.mxu0 0.0
    %2190 = vmatprep.subr.mxu0 0.0
    %2191 = vmatpush1.msra.mxu0 0.0
    %2192 = vmatprep.subr.mxu0 0.0
    %2193 = vmatpush1.msra.mxu0 0.0
    %2194 = vmatprep.subr.mxu0 0.0
    %2195 = vmatpush1.msra.mxu0 0.0
    %2196 = vmatprep.subr.mxu0 0.0
    %2197 = vmatpush1.msra.mxu0 0.0
    %2198 = vmatprep.subr.mxu0 0.0
    %2199 = vmatpush1.msra.mxu0 0.0
    %2200 = vmatprep.subr.mxu0 0.0
    %2201 = vmatpush1.msra.mxu0 0.0
    %2202 = vmatprep.subr.mxu0 0.0
    %2203 = vmatpush1.msra.mxu0 0.0
    %2204 = vmatprep.subr.mxu0 0.0
    %2205 = vmatpush1.msra.mxu0 0.0
    %2206 = vmatprep.mubr.f32.mxu0 0.0
    %2207 = vmatmul.mubr.f32.gmra.mrb[0].mxu0 %v2140
    %v2208 = vpop.f32.mrb[0].mxu0
    %v2209 = vadd.f32 0.0, %v2208
    %v2210 = vpop.f32.mrb[0].mxu0
    %2211 = vdwg.mxu0
    %2213 = vrot.lane.b32.xlu0 %v2209, 16
    %v2214 = vpop.permute.xlu0 %2213
    %v2216 = vsel %vm111, %v2044, %v2214
    %v2217 = vmul.f32 %v2216, %v1128
    %s2218 = scalar_lea.vmem [#allocation5], 64
    %v2219 = vld [vmem:[%s2218] sm:$0xff]
    %v2220 = vld [vmem:[%s2218 + $0x8] sm:$0xff]
    %v2221 = vld [vmem:[%s2218 + $0x10] sm:$0xff]
    %v2222 = vld [vmem:[%s2218 + $0x18] sm:$0xff]
    %s2223 = scalar_lea.vmem %s6, 2
    %v2224 = vld [vmem:[%s2223] sm:$0x1]
    %v2226 = vlaneseq
    %v2227 = vshrl.u32 %v2226, 7
    %v2228 = vsub.s32 0, %v2227
    %v2229 = vrot.slane %v2224, %v2228
    %v2232 = vsel %vm284, %v2217, 0
    %2234 = vmatprep.subr.mxu0 0.0
    %2235 = vmatpush1.msra.mxu0 %v2219
    %2236 = vmatprep.subr.mxu0 0.0
    %2237 = vmatpush1.msra.mxu0 %v2220
    %2238 = vmatprep.subr.mxu0 0.0
    %2239 = vmatpush1.msra.mxu0 %v2221
    %2240 = vmatprep.subr.mxu0 0.0
    %2241 = vmatpush1.msra.mxu0 %v2222
    %2242 = vmatprep.subr.mxu0 0.0
    %2243 = vmatpush1.msra.mxu0 0.0
    %2244 = vmatprep.subr.mxu0 0.0
    %2245 = vmatpush1.msra.mxu0 0.0
    %2246 = vmatprep.subr.mxu0 0.0
    %2247 = vmatpush1.msra.mxu0 0.0
    %2248 = vmatprep.subr.mxu0 0.0
    %2249 = vmatpush1.msra.mxu0 0.0
    %2250 = vmatprep.subr.mxu0 0.0
    %2251 = vmatpush1.msra.mxu0 0.0
    %2252 = vmatprep.subr.mxu0 0.0
    %2253 = vmatpush1.msra.mxu0 0.0
    %2254 = vmatprep.subr.mxu0 0.0
    %2255 = vmatpush1.msra.mxu0 0.0
    %2256 = vmatprep.subr.mxu0 0.0
    %2257 = vmatpush1.msra.mxu0 0.0
    %2258 = vmatprep.subr.mxu0 0.0
    %2259 = vmatpush1.msra.mxu0 0.0
    %2260 = vmatprep.subr.mxu0 0.0
    %2261 = vmatpush1.msra.mxu0 0.0
    %2262 = vmatprep.subr.mxu0 0.0
    %2263 = vmatpush1.msra.mxu0 0.0
    %2264 = vmatprep.subr.mxu0 0.0
    %2265 = vmatpush1.msra.mxu0 0.0
    %2266 = vmatprep.subr.mxu0 0.0
    %2267 = vmatpush1.msra.mxu0 0.0
    %2268 = vmatprep.subr.mxu0 0.0
    %2269 = vmatpush1.msra.mxu0 0.0
    %2270 = vmatprep.subr.mxu0 0.0
    %2271 = vmatpush1.msra.mxu0 0.0
    %2272 = vmatprep.subr.mxu0 0.0
    %2273 = vmatpush1.msra.mxu0 0.0
    %2274 = vmatprep.subr.mxu0 0.0
    %2275 = vmatpush1.msra.mxu0 0.0
    %2276 = vmatprep.subr.mxu0 0.0
    %2277 = vmatpush1.msra.mxu0 0.0
    %2278 = vmatprep.subr.mxu0 0.0
    %2279 = vmatpush1.msra.mxu0 0.0
    %2280 = vmatprep.subr.mxu0 0.0
    %2281 = vmatpush1.msra.mxu0 0.0
    %2282 = vmatprep.subr.mxu0 0.0
    %2283 = vmatpush1.msra.mxu0 0.0
    %2284 = vmatprep.subr.mxu0 0.0
    %2285 = vmatpush1.msra.mxu0 0.0
    %2286 = vmatprep.subr.mxu0 0.0
    %2287 = vmatpush1.msra.mxu0 0.0
    %2288 = vmatprep.subr.mxu0 0.0
    %2289 = vmatpush1.msra.mxu0 0.0
    %2290 = vmatprep.subr.mxu0 0.0
    %2291 = vmatpush1.msra.mxu0 0.0
    %2292 = vmatprep.subr.mxu0 0.0
    %2293 = vmatpush1.msra.mxu0 0.0
    %2294 = vmatprep.subr.mxu0 0.0
    %2295 = vmatpush1.msra.mxu0 0.0
    %2296 = vmatprep.subr.mxu0 0.0
    %2297 = vmatpush1.msra.mxu0 0.0
    %2298 = vmatprep.mubr.f32.mxu0 0.0
    %2299 = vmatmul.mubr.f32.gmra.mrb[0].mxu0 %v2232
    %v2300 = vpop.f32.mrb[0].mxu0
    %v2301 = vadd.f32 %v2229, %v2300
    %v2302 = vpop.f32.mrb[0].mxu0
    %2303 = vdwg.mxu0
    %s2304 = sld [smem:[#allocation8 + $0x100]]
    %v2305 = vstv %s2304
    %v2306 = vmul.f32 %v2301, %v2305
    %s2307 = ssub.f32 1.0, %s2304
    %v2308 = vstv %s2307
    %v2309 = vmul.f32 %v1251, %v2308
    %v2310 = vadd.f32 %v2306, %v2309
    %v2311 = vsel %vm284, %v2310, 0.0
    %2312 = vadd.xlane.f32.xlu0 %v2311
    %v2313 = vpop.xlane.xlu0 %2312
    %v2314 = vmul.f32 %v2313, %v1225
    %v2315 = vsub.f32 %v2310, %v2314
    %v2316 = vmul.f32 %v2315, %v2315
    %v2317 = vsel %vm284, %v2316, 0.0
    %2318 = vadd.xlane.f32.xlu0 %v2317
    %v2319 = vpop.xlane.xlu0 %2318
    %v2320 = vmul.f32 %v2319, %v1225
    %v2321 = vadd.f32 %v2320, 1e-05
    %v2322 = vrsqrt.pop %v2321
    %v2323 = vmul.f32 %v2315, %v2322
    %s2324 = scalar_lea.vmem [#allocation7], 2
    %v2325 = vld [vmem:[%s2324] sm:$0x1]
    %v2327 = vlaneseq
    %v2328 = vshrl.u32 %v2327, 7
    %v2329 = vsub.s32 0, %v2328
    %v2330 = vrot.slane %v2325, %v2329
    %v2332 = vmul.f32 %v2323, %v2330
    %s2333 = scalar_lea.vmem %s8, 2
    %v2334 = vld [vmem:[%s2333] sm:$0x1]
    %v2336 = vlaneseq
    %v2337 = vshrl.u32 %v2336, 7
    %v2338 = vsub.s32 0, %v2337
    %v2339 = vrot.slane %v2334, %v2338
    %v2341 = vadd.f32 %v2332, %v2339
    %s2342 = scalar_lea.vmem [#allocation5], 96
    %v2343 = vld [vmem:[%s2342] sm:$0xff]
    %v2344 = vld [vmem:[%s2342 + $0x8] sm:$0xff]
    %v2345 = vld [vmem:[%s2342 + $0x10] sm:$0xff]
    %v2346 = vld [vmem:[%s2342 + $0x18] sm:$0xff]
    %s2347 = scalar_lea.vmem %s6, 3
    %v2348 = vld [vmem:[%s2347] sm:$0x1]
    %v2350 = vlaneseq
    %v2351 = vshrl.u32 %v2350, 7
    %v2352 = vsub.s32 0, %v2351
    %v2353 = vrot.slane %v2348, %v2352
    %v2356 = vsel %vm284, %v1883, 0
    %2358 = vmatprep.subr.mxu0 0.0
    %2359 = vmatpush1.msra.mxu0 %v2343
    %2360 = vmatprep.subr.mxu0 0.0
    %2361 = vmatpush1.msra.mxu0 %v2344
    %2362 = vmatprep.subr.mxu0 0.0
    %2363 = vmatpush1.msra.mxu0 %v2345
    %2364 = vmatprep.subr.mxu0 0.0
    %2365 = vmatpush1.msra.mxu0 %v2346
    %2366 = vmatprep.subr.mxu0 0.0
    %2367 = vmatpush1.msra.mxu0 0.0
    %2368 = vmatprep.subr.mxu0 0.0
    %2369 = vmatpush1.msra.mxu0 0.0
    %2370 = vmatprep.subr.mxu0 0.0
    %2371 = vmatpush1.msra.mxu0 0.0
    %2372 = vmatprep.subr.mxu0 0.0
    %2373 = vmatpush1.msra.mxu0 0.0
    %2374 = vmatprep.subr.mxu0 0.0
    %2375 = vmatpush1.msra.mxu0 0.0
    %2376 = vmatprep.subr.mxu0 0.0
    %2377 = vmatpush1.msra.mxu0 0.0
    %2378 = vmatprep.subr.mxu0 0.0
    %2379 = vmatpush1.msra.mxu0 0.0
    %2380 = vmatprep.subr.mxu0 0.0
    %2381 = vmatpush1.msra.mxu0 0.0
    %2382 = vmatprep.subr.mxu0 0.0
    %2383 = vmatpush1.msra.mxu0 0.0
    %2384 = vmatprep.subr.mxu0 0.0
    %2385 = vmatpush1.msra.mxu0 0.0
    %2386 = vmatprep.subr.mxu0 0.0
    %2387 = vmatpush1.msra.mxu0 0.0
    %2388 = vmatprep.subr.mxu0 0.0
    %2389 = vmatpush1.msra.mxu0 0.0
    %2390 = vmatprep.subr.mxu0 0.0
    %2391 = vmatpush1.msra.mxu0 0.0
    %2392 = vmatprep.subr.mxu0 0.0
    %2393 = vmatpush1.msra.mxu0 0.0
    %2394 = vmatprep.subr.mxu0 0.0
    %2395 = vmatpush1.msra.mxu0 0.0
    %2396 = vmatprep.subr.mxu0 0.0
    %2397 = vmatpush1.msra.mxu0 0.0
    %2398 = vmatprep.subr.mxu0 0.0
    %2399 = vmatpush1.msra.mxu0 0.0
    %2400 = vmatprep.subr.mxu0 0.0
    %2401 = vmatpush1.msra.mxu0 0.0
    %2402 = vmatprep.subr.mxu0 0.0
    %2403 = vmatpush1.msra.mxu0 0.0
    %2404 = vmatprep.subr.mxu0 0.0
    %2405 = vmatpush1.msra.mxu0 0.0
    %2406 = vmatprep.subr.mxu0 0.0
    %2407 = vmatpush1.msra.mxu0 0.0
    %2408 = vmatprep.subr.mxu0 0.0
    %2409 = vmatpush1.msra.mxu0 0.0
    %2410 = vmatprep.subr.mxu0 0.0
    %2411 = vmatpush1.msra.mxu0 0.0
    %2412 = vmatprep.subr.mxu0 0.0
    %2413 = vmatpush1.msra.mxu0 0.0
    %2414 = vmatprep.subr.mxu0 0.0
    %2415 = vmatpush1.msra.mxu0 0.0
    %2416 = vmatprep.subr.mxu0 0.0
    %2417 = vmatpush1.msra.mxu0 0.0
    %2418 = vmatprep.subr.mxu0 0.0
    %2419 = vmatpush1.msra.mxu0 0.0
    %2420 = vmatprep.subr.mxu0 0.0
    %2421 = vmatpush1.msra.mxu0 0.0
    %2422 = vmatprep.mubr.f32.mxu0 0.0
    %2423 = vmatmul.mubr.f32.gmra.mrb[0].mxu0 %v2356
    %v2424 = vpop.f32.mrb[0].mxu0
    %v2425 = vadd.f32 %v2353, %v2424
    %v2426 = vpop.f32.mrb[0].mxu0
    %2427 = vdwg.mxu0
    %s2428 = sld [smem:[#allocation8 + $0x180]]
    %v2429 = vstv %s2428
    %v2430 = vmul.f32 %v2425, %v2429
    %s2431 = ssub.f32 1.0, %s2428
    %v2432 = vstv %s2431
    %v2433 = vmul.f32 %v1375, %v2432
    %v2434 = vadd.f32 %v2430, %v2433
    %v2435 = vsel %vm284, %v2434, 0.0
    %2436 = vadd.xlane.f32.xlu0 %v2435
    %v2437 = vpop.xlane.xlu0 %2436
    %v2438 = vmul.f32 %v2437, %v1225
    %v2439 = vsub.f32 %v2434, %v2438
    %v2440 = vmul.f32 %v2439, %v2439
    %v2441 = vsel %vm284, %v2440, 0.0
    %2442 = vadd.xlane.f32.xlu0 %v2441
    %v2443 = vpop.xlane.xlu0 %2442
    %v2444 = vmul.f32 %v2443, %v1225
    %v2445 = vadd.f32 %v2444, 1e-05
    %v2446 = vrsqrt.pop %v2445
    %v2447 = vmul.f32 %v2439, %v2446
    %s2448 = scalar_lea.vmem [#allocation7], 3
    %v2449 = vld [vmem:[%s2448] sm:$0x1]
    %v2451 = vlaneseq
    %v2452 = vshrl.u32 %v2451, 7
    %v2453 = vsub.s32 0, %v2452
    %v2454 = vrot.slane %v2449, %v2453
    %v2456 = vmul.f32 %v2447, %v2454
    %s2457 = scalar_lea.vmem %s8, 3
    %v2458 = vld [vmem:[%s2457] sm:$0x1]
    %v2460 = vlaneseq
    %v2461 = vshrl.u32 %v2460, 7
    %v2462 = vsub.s32 0, %v2461
    %v2463 = vrot.slane %v2458, %v2462
    %v2465 = vadd.f32 %v2456, %v2463
    %v2466 = vld [vmem:[%s11] sm:$0xff]
    %v2467 = vld [vmem:[%s11 + $0x8] sm:$0xff]
    %v2468 = vld [vmem:[%s11 + $0x10] sm:$0xff]
    %v2469 = vld [vmem:[%s11 + $0x18] sm:$0xff]
    %v2470 = vld [vmem:[%s12] sm:$0x1]
    %v2472 = vlaneseq
    %v2473 = vshrl.u32 %v2472, 7
    %v2474 = vsub.s32 0, %v2473
    %v2475 = vrot.slane %v2470, %v2474
    %v2478 = vsel %vm284, %v2341, 0
    %2480 = vmatprep.subr.mxu0 0.0
    %2481 = vmatpush1.msra.mxu0 %v2466
    %2482 = vmatprep.subr.mxu0 0.0
    %2483 = vmatpush1.msra.mxu0 %v2467
    %2484 = vmatprep.subr.mxu0 0.0
    %2485 = vmatpush1.msra.mxu0 %v2468
    %2486 = vmatprep.subr.mxu0 0.0
    %2487 = vmatpush1.msra.mxu0 %v2469
    %2488 = vmatprep.subr.mxu0 0.0
    %2489 = vmatpush1.msra.mxu0 0.0
    %2490 = vmatprep.subr.mxu0 0.0
    %2491 = vmatpush1.msra.mxu0 0.0
    %2492 = vmatprep.subr.mxu0 0.0
    %2493 = vmatpush1.msra.mxu0 0.0
    %2494 = vmatprep.subr.mxu0 0.0
    %2495 = vmatpush1.msra.mxu0 0.0
    %2496 = vmatprep.subr.mxu0 0.0
    %2497 = vmatpush1.msra.mxu0 0.0
    %2498 = vmatprep.subr.mxu0 0.0
    %2499 = vmatpush1.msra.mxu0 0.0
    %2500 = vmatprep.subr.mxu0 0.0
    %2501 = vmatpush1.msra.mxu0 0.0
    %2502 = vmatprep.subr.mxu0 0.0
    %2503 = vmatpush1.msra.mxu0 0.0
    %2504 = vmatprep.subr.mxu0 0.0
    %2505 = vmatpush1.msra.mxu0 0.0
    %2506 = vmatprep.subr.mxu0 0.0
    %2507 = vmatpush1.msra.mxu0 0.0
    %2508 = vmatprep.subr.mxu0 0.0
    %2509 = vmatpush1.msra.mxu0 0.0
    %2510 = vmatprep.subr.mxu0 0.0
    %2511 = vmatpush1.msra.mxu0 0.0
    %2512 = vmatprep.subr.mxu0 0.0
    %2513 = vmatpush1.msra.mxu0 0.0
    %2514 = vmatprep.subr.mxu0 0.0
    %2515 = vmatpush1.msra.mxu0 0.0
    %2516 = vmatprep.subr.mxu0 0.0
    %2517 = vmatpush1.msra.mxu0 0.0
    %2518 = vmatprep.subr.mxu0 0.0
    %2519 = vmatpush1.msra.mxu0 0.0
    %2520 = vmatprep.subr.mxu0 0.0
    %2521 = vmatpush1.msra.mxu0 0.0
    %2522 = vmatprep.subr.mxu0 0.0
    %2523 = vmatpush1.msra.mxu0 0.0
    %2524 = vmatprep.subr.mxu0 0.0
    %2525 = vmatpush1.msra.mxu0 0.0
    %2526 = vmatprep.subr.mxu0 0.0
    %2527 = vmatpush1.msra.mxu0 0.0
    %2528 = vmatprep.subr.mxu0 0.0
    %2529 = vmatpush1.msra.mxu0 0.0
    %2530 = vmatprep.subr.mxu0 0.0
    %2531 = vmatpush1.msra.mxu0 0.0
    %2532 = vmatprep.subr.mxu0 0.0
    %2533 = vmatpush1.msra.mxu0 0.0
    %2534 = vmatprep.subr.mxu0 0.0
    %2535 = vmatpush1.msra.mxu0 0.0
    %2536 = vmatprep.subr.mxu0 0.0
    %2537 = vmatpush1.msra.mxu0 0.0
    %2538 = vmatprep.subr.mxu0 0.0
    %2539 = vmatpush1.msra.mxu0 0.0
    %2540 = vmatprep.subr.mxu0 0.0
    %2541 = vmatpush1.msra.mxu0 0.0
    %2542 = vmatprep.subr.mxu0 0.0
    %2543 = vmatpush1.msra.mxu0 0.0
    %2544 = vmatprep.mubr.f32.mxu0 0.0
    %2545 = vmatmul.mubr.f32.gmra.mrb[0].mxu0 %v2478
    %v2546 = vpop.f32.mrb[0].mxu0
    %v2547 = vadd.f32 %v2475, %v2546
    %v2548 = vpop.f32.mrb[0].mxu0
    %2549 = vdwg.mxu0
    %2550 = vst.msk [vmem:[%s14] sm:$0xff] %vm524, %v2547
    %v2551 = vld [vmem:[%s11] sm:$0xff]
    %v2552 = vld [vmem:[%s11 + $0x8] sm:$0xff]
    %v2553 = vld [vmem:[%s11 + $0x10] sm:$0xff]
    %v2554 = vld [vmem:[%s11 + $0x18] sm:$0xff]
    %v2555 = vld [vmem:[%s12] sm:$0x1]
    %v2557 = vlaneseq
    %v2558 = vshrl.u32 %v2557, 7
    %v2559 = vsub.s32 0, %v2558
    %v2560 = vrot.slane %v2555, %v2559
    %v2563 = vsel %vm284, %v2465, 0
    %2565 = vmatprep.subr.mxu0 0.0
    %2566 = vmatpush1.msra.mxu0 %v2551
    %2567 = vmatprep.subr.mxu0 0.0
    %2568 = vmatpush1.msra.mxu0 %v2552
    %2569 = vmatprep.subr.mxu0 0.0
    %2570 = vmatpush1.msra.mxu0 %v2553
    %2571 = vmatprep.subr.mxu0 0.0
    %2572 = vmatpush1.msra.mxu0 %v2554
    %2573 = vmatprep.subr.mxu0 0.0
    %2574 = vmatpush1.msra.mxu0 0.0
    %2575 = vmatprep.subr.mxu0 0.0
    %2576 = vmatpush1.msra.mxu0 0.0
    %2577 = vmatprep.subr.mxu0 0.0
    %2578 = vmatpush1.msra.mxu0 0.0
    %2579 = vmatprep.subr.mxu0 0.0
    %2580 = vmatpush1.msra.mxu0 0.0
    %2581 = vmatprep.subr.mxu0 0.0
    %2582 = vmatpush1.msra.mxu0 0.0
    %2583 = vmatprep.subr.mxu0 0.0
    %2584 = vmatpush1.msra.mxu0 0.0
    %2585 = vmatprep.subr.mxu0 0.0
    %2586 = vmatpush1.msra.mxu0 0.0
    %2587 = vmatprep.subr.mxu0 0.0
    %2588 = vmatpush1.msra.mxu0 0.0
    %2589 = vmatprep.subr.mxu0 0.0
    %2590 = vmatpush1.msra.mxu0 0.0
    %2591 = vmatprep.subr.mxu0 0.0
    %2592 = vmatpush1.msra.mxu0 0.0
    %2593 = vmatprep.subr.mxu0 0.0
    %2594 = vmatpush1.msra.mxu0 0.0
    %2595 = vmatprep.subr.mxu0 0.0
    %2596 = vmatpush1.msra.mxu0 0.0
    %2597 = vmatprep.subr.mxu0 0.0
    %2598 = vmatpush1.msra.mxu0 0.0
    %2599 = vmatprep.subr.mxu0 0.0
    %2600 = vmatpush1.msra.mxu0 0.0
    %2601 = vmatprep.subr.mxu0 0.0
    %2602 = vmatpush1.msra.mxu0 0.0
    %2603 = vmatprep.subr.mxu0 0.0
    %2604 = vmatpush1.msra.mxu0 0.0
    %2605 = vmatprep.subr.mxu0 0.0
    %2606 = vmatpush1.msra.mxu0 0.0
    %2607 = vmatprep.subr.mxu0 0.0
    %2608 = vmatpush1.msra.mxu0 0.0
    %2609 = vmatprep.subr.mxu0 0.0
    %2610 = vmatpush1.msra.mxu0 0.0
    %2611 = vmatprep.subr.mxu0 0.0
    %2612 = vmatpush1.msra.mxu0 0.0
    %2613 = vmatprep.subr.mxu0 0.0
    %2614 = vmatpush1.msra.mxu0 0.0
    %2615 = vmatprep.subr.mxu0 0.0
    %2616 = vmatpush1.msra.mxu0 0.0
    %2617 = vmatprep.subr.mxu0 0.0
    %2618 = vmatpush1.msra.mxu0 0.0
    %2619 = vmatprep.subr.mxu0 0.0
    %2620 = vmatpush1.msra.mxu0 0.0
    %2621 = vmatprep.subr.mxu0 0.0
    %2622 = vmatpush1.msra.mxu0 0.0
    %2623 = vmatprep.subr.mxu0 0.0
    %2624 = vmatpush1.msra.mxu0 0.0
    %2625 = vmatprep.subr.mxu0 0.0
    %2626 = vmatpush1.msra.mxu0 0.0
    %2627 = vmatprep.subr.mxu0 0.0
    %2628 = vmatpush1.msra.mxu0 0.0
    %2629 = vmatprep.mubr.f32.mxu0 0.0
    %2630 = vmatmul.mubr.f32.gmra.mrb[0].mxu0 %v2563
    %v2631 = vpop.f32.mrb[0].mxu0
    %v2632 = vadd.f32 %v2560, %v2631
    %v2633 = vpop.f32.mrb[0].mxu0
    %2634 = vdwg.mxu0
    %s2635 = scalar_lea.vmem %s14, 8
    %2636 = vst.msk [vmem:[%s2635] sm:$0xff] %vm524, %v2632
    // Predicated region
    $region74: #{hgt_lp_forward.1} parent=1 // pred_check
      _
    $region75: #{hgt_lp_forward.1} parent=1 // pred_check_branch
      %2638 = sbr.rel (0) target = $region77
    $region76: #{hgt_lp_forward.1} parent=1 // pred_region
      _
    $region77: #{hgt_lp_forward.1} parent=1 // pred_fallthru
      _
    // Predicated region
    $region78: #{hgt_lp_forward.1} parent=1 // pred_check
      _
    $region79: #{hgt_lp_forward.1} parent=1 // pred_check_branch
      %2640 = sbr.rel (0) target = $region81
    $region80: #{hgt_lp_forward.1} parent=1 // pred_region
      _
    $region81: #{hgt_lp_forward.1} parent=1 // pred_fallthru
      _
    %2641 = vsyncpa [#allocation3], 1
    %2642 = vsyncpa [#allocation6], 1
    %2643 = vsyncpa [#allocation4], 1

</llo_original>
